<compile_context>
chip_gen: v5e
topology: v5e:2x2
jax: 0.10.0
libtpu: 0.0.40
codegen_flags: <defaults>
</compile_context>

<pallas_src>
import functools

import jax
import jax.numpy as jnp
from jax.experimental import pallas as pl
from jax.experimental.pallas import tpu as pltpu


# ----------------------------------------------------------------------------
# Fused Pallas kernel
# ----------------------------------------------------------------------------
def _sentence_model_kernel(
    q_ids_ref,    # (Q*B, 1)   int32 query word ids, row t*B + b
    s_ids_ref,    # (F*S*B, 1) int32 story word ids, row t*S*B + s*B + b
    len_ref,      # (B, 1)     int32 story lengths
    q_tab_ref, s_tab_ref,                           # (V, E) embedding tables
    q_wih_ref, q_whh_ref, q_bih_ref, q_bhh_ref,     # query GRU (E,3H)(H,3H)(1,3H)(1,3H)
    f_wih_ref, f_whh_ref, f_bih_ref, f_bhh_ref,     # fact GRU
    s_wih_ref, s_whh_ref, s_bih_ref, s_bhh_ref,     # story GRU
    fc_w_ref, fc_b_ref,                             # (H,O), (1,O)
    out_ref,                                        # (B, O) log-probs
    *, B, S, F, Q, H, V, use_bf16):
  H2 = 2 * H
  H3 = 3 * H
  QB = Q * B
  SB = S * B
  FSB = F * S * B
  mm_dtype = jnp.bfloat16 if use_bf16 else jnp.float32

  def mm(a, b):  # bf16 MXU matmul (f32 accumulate) for hoisted projections only
    return jnp.dot(a.astype(mm_dtype), b.astype(mm_dtype),
                   preferred_element_type=jnp.float32)

  def onehot(ids_ref, n_rows):  # exact one-hot of token ids for in-kernel gather
    lanes = jax.lax.broadcasted_iota(jnp.int32, (n_rows, V), 1)
    return (lanes == ids_ref[...]).astype(mm_dtype)

  gate_lane = jax.lax.broadcasted_iota(jnp.int32, (1, H3), 1)

  def rz_only(b_hh):  # keep [b_hr | b_hz | 0] so it can be folded into x_proj
    return jnp.where(gate_lane < H2, b_hh, 0.0)

  def run_gru(x_proj, n_steps, n_rows, w_hh, b_hn, len_col=None):
    """GRU recurrence; x_proj = x@W_ih + b_ih + [b_hr|b_hz|0] (+ q-code proj).

    Only the f32 h @ W_hh matmul stays on the serial critical path.
    """
    b_hn_b = jnp.broadcast_to(b_hn, (n_rows, H))        # hoisted broadcast
    h = jnp.zeros((n_rows, H), jnp.float32)
    for t in range(n_steps):                            # static, fully unrolled
      x_t = x_proj[t * n_rows:(t + 1) * n_rows, :]
      hp = jnp.dot(h, w_hh, preferred_element_type=jnp.float32)   # f32, no casts
      rz = jax.nn.sigmoid(x_t[:, :H2] + hp[:, :H2])     # r and z in one EUP pass
      r = rz[:, :H]
      z = rz[:, H:]
      n = jnp.tanh(x_t[:, H2:] + r * (hp[:, H2:] + b_hn_b))  # b_hn inside r*(...)
      h_new = n + z * (h - n)                           # == (1-z)*n + z*h
      if len_col is None:
        h = h_new
      else:  # pack_padded_sequence semantics: freeze hidden past the length.
        h = jnp.where(len_col > t, h_new, h)
      del h_new
    return h

  # ---- query GRU: B sequences of length Q (not packed) ---------------------
  q_bhh = q_bhh_ref[...]
  q_e = mm(onehot(q_ids_ref, QB), q_tab_ref[...])                     # (Q*B, E)
  q_in = mm(q_e, q_wih_ref[...]) + (q_bih_ref[...] + rz_only(q_bhh))  # (Q*B, 3H)
  question_code = run_gru(q_in, Q, B, q_whh_ref[...], q_bhh[:, H2:])  # (B, H)

  # ---- fact GRU: S*B sequences of length F (not packed) --------------------
  # (s_e + q_code) @ W = s_e @ W + q_code @ W  -> project q_code once, then
  # replicate it over the batch-periodic rows with a cheap broadcast.
  f_wih = f_wih_ref[...]
  f_bhh = f_bhh_ref[...]
  s_e = mm(onehot(s_ids_ref, FSB), s_tab_ref[...])                    # (F*S*B, E)
  qc_f = mm(question_code, f_wih) + (f_bih_ref[...] + rz_only(f_bhh))  # (B, 3H)
  qc_f_rep = jnp.broadcast_to(qc_f, (F * S, B, H3)).reshape(FSB, H3)
  fact_in = mm(s_e, f_wih) + qc_f_rep                                 # (F*S*B, 3H)
  fact_hidden = run_gru(fact_in, F, SB, f_whh_ref[...], f_bhh[:, H2:])  # (S*B, H)

  # ---- story GRU: B sequences of length S, packed by story_lengths ---------
  s_wih = s_wih_ref[...]
  s_bhh = s_bhh_ref[...]
  qc_s = mm(question_code, s_wih) + (s_bih_ref[...] + rz_only(s_bhh))  # (B, 3H)
  qc_s_rep = jnp.broadcast_to(qc_s, (S, B, H3)).reshape(SB, H3)
  story_in = mm(fact_hidden, s_wih) + qc_s_rep                        # (S*B, 3H)
  story_hidden = run_gru(story_in, S, B, s_whh_ref[...], s_bhh[:, H2:],
                         len_col=len_ref[...])                        # (B, H)

  # ---- FC + LogSoftmax (f32, max-shifted) -----------------------------------
  logits = jnp.dot(story_hidden, fc_w_ref[...],
                   preferred_element_type=jnp.float32) + fc_b_ref[...]  # (B, O)
  mx = jnp.max(logits, axis=-1, keepdims=True)
  shifted = logits - mx
  lse = jnp.log(jnp.sum(jnp.exp(shifted), axis=-1, keepdims=True))
  out_ref[...] = shifted - lse


# ----------------------------------------------------------------------------
# Parameter construction (deterministic, mirrors the nn.Module __init__)
# ----------------------------------------------------------------------------
def init_params(key, voc_size, embedding_size, story_hidden_size,
                query_hidden_size, output_size):
  # The PyTorch forward adds the query-hidden code to word embeddings and to
  # fact encodings, which implicitly requires these sizes to match.
  assert embedding_size == query_hidden_size == story_hidden_size

  keys = jax.random.split(key, 8)
  k = iter(keys)

  def uniform(rng, shape, bound):
    return jax.random.uniform(rng, shape, jnp.float32, -bound, bound)

  def gru_params(rng, in_size, hidden):
    r1, r2, r3, r4 = jax.random.split(rng, 4)
    bound = 1.0 / jnp.sqrt(hidden)
    return dict(                                   # gate order [r | z | n]
        w_ih=uniform(r1, (in_size, 3 * hidden), bound),
        w_hh=uniform(r2, (hidden, 3 * hidden), bound),
        b_ih=uniform(r3, (1, 3 * hidden), bound),
        b_hh=uniform(r4, (1, 3 * hidden), bound),
    )

  fc_bound = 1.0 / jnp.sqrt(story_hidden_size)
  return dict(
      story_embedding=jax.random.normal(next(k), (voc_size, embedding_size),
                                        jnp.float32),
      query_embedding=jax.random.normal(next(k), (voc_size, embedding_size),
                                        jnp.float32),
      fact_rnn=gru_params(next(k), embedding_size, story_hidden_size),
      story_rnn=gru_params(next(k), embedding_size, story_hidden_size),
      query_rnn=gru_params(next(k), embedding_size, query_hidden_size),
      fc_w=uniform(next(k), (story_hidden_size, output_size), fc_bound),
      fc_b=uniform(next(k), (1, output_size), fc_bound),
  )


# ----------------------------------------------------------------------------
# Forward pass (mirrors SentenceModel.forward) — ONE fused pallas_call
# ----------------------------------------------------------------------------
@functools.partial(jax.jit, static_argnames=("fact_maxlen", "use_bf16"))
def sentence_model_forward(params, story, query, story_lengths, query_lengths,
                           fact_lengths, fact_maxlen, use_bf16=True):
  del query_lengths, fact_lengths        # unused in the reference forward too
  B, S, F = story.shape
  assert F == fact_maxlen
  Q = query.shape[1]
  V, E = params["query_embedding"].shape
  H, O = params["fc_w"].shape
  assert E == H

  # Only tiny int32 id re-layouts remain in the wrapper (time-major so the
  # kernel takes static, contiguous, 8-row-aligned slices). Embedding gather,
  # q-code broadcast and the length mask are all done inside the kernel.
  q_ids = jnp.transpose(query, (1, 0)).reshape(Q * B, 1).astype(jnp.int32)
  s_ids = jnp.transpose(story, (2, 1, 0)).reshape(F * S * B, 1).astype(jnp.int32)
  len_col = story_lengths.astype(jnp.int32).reshape(B, 1)

  # bf16 only for embedding tables + hoisted input-projection weights; the
  # recurrent W_hh, biases and FC stay f32 (no casts on the serial GRU chain).
  wt = jnp.bfloat16 if use_bf16 else jnp.float32
  wc = lambda x: x.astype(wt)
  qr, fr, sr = params["query_rnn"], params["fact_rnn"], params["story_rnn"]

  args = (
      q_ids, s_ids, len_col,
      wc(params["query_embedding"]), wc(params["story_embedding"]),
      wc(qr["w_ih"]), qr["w_hh"], qr["b_ih"], qr["b_hh"],
      wc(fr["w_ih"]), fr["w_hh"], fr["b_ih"], fr["b_hh"],
      wc(sr["w_ih"]), sr["w_hh"], sr["b_ih"], sr["b_hh"],
      params["fc_w"], params["fc_b"],
  )

  kernel = functools.partial(_sentence_model_kernel,
                             B=B, S=S, F=F, Q=Q, H=H, V=V, use_bf16=use_bf16)

  def full2d(shape):
    return pl.BlockSpec(shape, lambda i: (0, 0))

  return pl.pallas_call(
      kernel,
      out_shape=jax.ShapeDtypeStruct((B, O), jnp.float32),
      grid=(1,),
      in_specs=[full2d(a.shape) for a in args],
      out_specs=full2d((B, O)),
      compiler_params=pltpu.CompilerParams(
          dimension_semantics=("arbitrary",)),
  )(*args)


# ----------------------------------------------------------------------------
if __name__ == "__main__":
  voc_size = 32
  embedding_size = 32
  story_hidden_size = 32
  query_hidden_size = 32
  output_size = 16

  # batch=8 keeps GRU state (B,H) sublane-dense and all row slices 8-aligned.
  B, S, F, Q = 8, 4, 6, 5  # batch, #facts per story, fact_maxlen, query len

  key = jax.random.PRNGKey(0)
  pkey, skey, qkey = jax.random.split(key, 3)
  params = init_params(pkey, voc_size, embedding_size, story_hidden_size,
                       query_hidden_size, output_size)

  story = jax.random.randint(skey, (B, S, F), 0, voc_size, jnp.int32)
  query = jax.random.randint(qkey, (B, Q), 0, voc_size, jnp.int32)
  story_lengths = jnp.array([4, 4, 3, 3, 2, 2, 1, 1], jnp.int32)  # descending
  query_lengths = jnp.full((B,), Q, jnp.int32)
  fact_lengths = jnp.full((B, S), F, jnp.int32)

  out = sentence_model_forward(params, story, query, story_lengths,
                               query_lengths, fact_lengths,
                               fact_maxlen=F, use_bf16=True)
  out = jax.block_until_ready(out)
  assert out.shape == (B, output_size)
  assert bool(jnp.all(jnp.isfinite(out)))
  # log_softmax sanity: probabilities sum to 1 per row.
  assert bool(jnp.allclose(jnp.sum(jnp.exp(out), axis=-1), 1.0, atol=1e-3))
  print("KERNEL_OK")
</pallas_src>

<mosaic_0001>
module attributes {stable_mosaic.version = 11 : i64} {
  func.func @_sentence_model_kernel(%arg0: i32, %arg1: memref<40x1xi32, #tpu.memory_space<vmem>>, %arg2: memref<192x1xi32, #tpu.memory_space<vmem>>, %arg3: memref<8x1xi32, #tpu.memory_space<vmem>>, %arg4: memref<32x32xbf16, #tpu.memory_space<vmem>>, %arg5: memref<32x32xbf16, #tpu.memory_space<vmem>>, %arg6: memref<32x96xbf16, #tpu.memory_space<vmem>>, %arg7: memref<32x96xf32, #tpu.memory_space<vmem>>, %arg8: memref<1x96xf32, #tpu.memory_space<vmem>>, %arg9: memref<1x96xf32, #tpu.memory_space<vmem>>, %arg10: memref<32x96xbf16, #tpu.memory_space<vmem>>, %arg11: memref<32x96xf32, #tpu.memory_space<vmem>>, %arg12: memref<1x96xf32, #tpu.memory_space<vmem>>, %arg13: memref<1x96xf32, #tpu.memory_space<vmem>>, %arg14: memref<32x96xbf16, #tpu.memory_space<vmem>>, %arg15: memref<32x96xf32, #tpu.memory_space<vmem>>, %arg16: memref<1x96xf32, #tpu.memory_space<vmem>>, %arg17: memref<1x96xf32, #tpu.memory_space<vmem>>, %arg18: memref<32x16xf32, #tpu.memory_space<vmem>>, %arg19: memref<1x16xf32, #tpu.memory_space<vmem>>, %arg20: memref<8x16xf32, #tpu.memory_space<vmem>>) attributes {dimension_semantics = [#tpu.dimension_semantics<arbitrary>], iteration_bounds = array<i64: 1>, scalar_prefetch = 0 : i64, scratch_operands = 0 : i64, tpu.core_type = #tpu.core_type<tc>, window_params = [{pipeline_mode = #tpu.pipeline_mode<synchronous>, transform_indices = @transform_0, window_bounds = array<i64: 40, 1>}, {pipeline_mode = #tpu.pipeline_mode<synchronous>, transform_indices = @transform_1, window_bounds = array<i64: 192, 1>}, {pipeline_mode = #tpu.pipeline_mode<synchronous>, transform_indices = @transform_2, window_bounds = array<i64: 8, 1>}, {pipeline_mode = #tpu.pipeline_mode<synchronous>, transform_indices = @transform_3, window_bounds = array<i64: 32, 32>}, {pipeline_mode = #tpu.pipeline_mode<synchronous>, transform_indices = @transform_4, window_bounds = array<i64: 32, 32>}, {pipeline_mode = #tpu.pipeline_mode<synchronous>, transform_indices = @transform_5, window_bounds = array<i64: 32, 96>}, {pipeline_mode = #tpu.pipeline_mode<synchronous>, transform_indices = @transform_6, window_bounds = array<i64: 32, 96>}, {pipeline_mode = #tpu.pipeline_mode<synchronous>, transform_indices = @transform_7, window_bounds = array<i64: 1, 96>}, {pipeline_mode = #tpu.pipeline_mode<synchronous>, transform_indices = @transform_8, window_bounds = array<i64: 1, 96>}, {pipeline_mode = #tpu.pipeline_mode<synchronous>, transform_indices = @transform_9, window_bounds = array<i64: 32, 96>}, {pipeline_mode = #tpu.pipeline_mode<synchronous>, transform_indices = @transform_10, window_bounds = array<i64: 32, 96>}, {pipeline_mode = #tpu.pipeline_mode<synchronous>, transform_indices = @transform_11, window_bounds = array<i64: 1, 96>}, {pipeline_mode = #tpu.pipeline_mode<synchronous>, transform_indices = @transform_12, window_bounds = array<i64: 1, 96>}, {pipeline_mode = #tpu.pipeline_mode<synchronous>, transform_indices = @transform_13, window_bounds = array<i64: 32, 96>}, {pipeline_mode = #tpu.pipeline_mode<synchronous>, transform_indices = @transform_14, window_bounds = array<i64: 32, 96>}, {pipeline_mode = #tpu.pipeline_mode<synchronous>, transform_indices = @transform_15, window_bounds = array<i64: 1, 96>}, {pipeline_mode = #tpu.pipeline_mode<synchronous>, transform_indices = @transform_16, window_bounds = array<i64: 1, 96>}, {pipeline_mode = #tpu.pipeline_mode<synchronous>, transform_indices = @transform_17, window_bounds = array<i64: 32, 16>}, {pipeline_mode = #tpu.pipeline_mode<synchronous>, transform_indices = @transform_18, window_bounds = array<i64: 1, 16>}, {pipeline_mode = #tpu.pipeline_mode<synchronous>, transform_indices = @transform_19, window_bounds = array<i64: 8, 16>}]} {
    %0 = tpu.iota {dimensions = array<i32: 1>} : vector<1x96xi32>
    %c0 = arith.constant 0 : index
    %c0_0 = arith.constant 0 : index
    %1 = vector.load %arg9[%c0, %c0_0] : memref<1x96xf32, #tpu.memory_space<vmem>>, vector<1x96xf32>
    %2 = tpu.iota {dimensions = array<i32: 1>} : vector<40x32xi32>
    %c0_1 = arith.constant 0 : index
    %c0_2 = arith.constant 0 : index
    %3 = vector.load %arg1[%c0_1, %c0_2] : memref<40x1xi32, #tpu.memory_space<vmem>>, vector<40x1xi32>
    %4 = vector.broadcast %3 : vector<40x1xi32> to vector<40x32xi32>
    %5 = arith.cmpi eq, %2, %4 : vector<40x32xi32>
    %6 = arith.extui %5 : vector<40x32xi1> to vector<40x32xi32>
    %7 = arith.sitofp %6 : vector<40x32xi32> to vector<40x32xf32>
    %8 = arith.truncf %7 : vector<40x32xf32> to vector<40x32xbf16>
    %c0_3 = arith.constant 0 : index
    %c0_4 = arith.constant 0 : index
    %9 = vector.load %arg4[%c0_3, %c0_4] : memref<32x32xbf16, #tpu.memory_space<vmem>>, vector<32x32xbf16>
    %cst = arith.constant dense<0.000000e+00> : vector<40x32xf32>
    %10 = tpu.matmul %8, %9, %cst {dimension_numbers = #tpu.dot_dimension_numbers<[1], [0], [0], [1], [0, 0, 1, 1], [], []>} : vector<40x32xbf16>, vector<32x32xbf16>, vector<40x32xf32> -> vector<40x32xf32>
    %c0_5 = arith.constant 0 : index
    %c0_6 = arith.constant 0 : index
    %11 = vector.load %arg6[%c0_5, %c0_6] : memref<32x96xbf16, #tpu.memory_space<vmem>>, vector<32x96xbf16>
    %12 = arith.truncf %10 : vector<40x32xf32> to vector<40x32xbf16>
    %cst_7 = arith.constant dense<0.000000e+00> : vector<40x96xf32>
    %13 = tpu.matmul %12, %11, %cst_7 {dimension_numbers = #tpu.dot_dimension_numbers<[1], [0], [0], [1], [0, 0, 1, 1], [], []>} : vector<40x32xbf16>, vector<32x96xbf16>, vector<40x96xf32> -> vector<40x96xf32>
    %c0_8 = arith.constant 0 : index
    %c0_9 = arith.constant 0 : index
    %14 = vector.load %arg8[%c0_8, %c0_9] : memref<1x96xf32, #tpu.memory_space<vmem>>, vector<1x96xf32>
    %c64_i32 = arith.constant 64 : i32
    %15 = vector.broadcast %c64_i32 : i32 to vector<1x96xi32>
    %16 = arith.cmpi slt, %0, %15 : vector<1x96xi32>
    %cst_10 = arith.constant 0.000000e+00 : f32
    %17 = vector.broadcast %cst_10 : f32 to vector<1x96xf32>
    %18 = arith.select %16, %1, %17 : vector<1x96xi1>, vector<1x96xf32>
    %19 = arith.addf %14, %18 : vector<1x96xf32>
    %20 = vector.broadcast %19 : vector<1x96xf32> to vector<40x96xf32>
    %21 = arith.addf %13, %20 : vector<40x96xf32>
    %c0_11 = arith.constant 0 : index
    %c0_12 = arith.constant 0 : index
    %22 = vector.load %arg7[%c0_11, %c0_12] : memref<32x96xf32, #tpu.memory_space<vmem>>, vector<32x96xf32>
    %23 = vector.extract_strided_slice %1 {offsets = [0, 64], sizes = [1, 32], strides = [1, 1]} : vector<1x96xf32> to vector<1x32xf32>
    %24 = vector.shape_cast %23 : vector<1x32xf32> to vector<1x32xf32>
    %25 = vector.broadcast %24 : vector<1x32xf32> to vector<8x32xf32>
    %cst_13 = arith.constant 0.000000e+00 : f32
    %26 = vector.broadcast %cst_13 : f32 to vector<8x32xf32>
    %27 = vector.extract_strided_slice %21 {offsets = [0, 0], sizes = [8, 96], strides = [1, 1]} : vector<40x96xf32> to vector<8x96xf32>
    %cst_14 = arith.constant dense<0.000000e+00> : vector<8x96xf32>
    %28 = tpu.matmul %26, %22, %cst_14 {dimension_numbers = #tpu.dot_dimension_numbers<[1], [0], [0], [1], [0, 0, 1, 1], [], []>} : vector<8x32xf32>, vector<32x96xf32>, vector<8x96xf32> -> vector<8x96xf32>
    %29 = vector.extract_strided_slice %27 {offsets = [0, 0], sizes = [8, 64], strides = [1, 1]} : vector<8x96xf32> to vector<8x64xf32>
    %30 = vector.extract_strided_slice %28 {offsets = [0, 0], sizes = [8, 64], strides = [1, 1]} : vector<8x96xf32> to vector<8x64xf32>
    %31 = arith.addf %29, %30 : vector<8x64xf32>
    %32 = arith.negf %31 : vector<8x64xf32>
    %33 = math.exp %32 : vector<8x64xf32>
    %cst_15 = arith.constant 1.000000e+00 : f32
    %34 = vector.broadcast %cst_15 : f32 to vector<8x64xf32>
    %35 = arith.addf %34, %33 : vector<8x64xf32>
    %36 = arith.divf %34, %35 : vector<8x64xf32>
    %37 = vector.extract_strided_slice %36 {offsets = [0, 0], sizes = [8, 32], strides = [1, 1]} : vector<8x64xf32> to vector<8x32xf32>
    %38 = vector.extract_strided_slice %36 {offsets = [0, 32], sizes = [8, 32], strides = [1, 1]} : vector<8x64xf32> to vector<8x32xf32>
    %39 = vector.extract_strided_slice %27 {offsets = [0, 64], sizes = [8, 32], strides = [1, 1]} : vector<8x96xf32> to vector<8x32xf32>
    %40 = vector.extract_strided_slice %28 {offsets = [0, 64], sizes = [8, 32], strides = [1, 1]} : vector<8x96xf32> to vector<8x32xf32>
    %41 = arith.addf %40, %25 : vector<8x32xf32>
    %42 = arith.mulf %37, %41 : vector<8x32xf32>
    %43 = arith.addf %39, %42 : vector<8x32xf32>
    %44 = math.tanh %43 : vector<8x32xf32>
    %45 = arith.subf %26, %44 : vector<8x32xf32>
    %46 = arith.mulf %38, %45 : vector<8x32xf32>
    %47 = arith.addf %44, %46 : vector<8x32xf32>
    %48 = vector.extract_strided_slice %21 {offsets = [8, 0], sizes = [8, 96], strides = [1, 1]} : vector<40x96xf32> to vector<8x96xf32>
    %cst_16 = arith.constant dense<0.000000e+00> : vector<8x96xf32>
    %49 = tpu.matmul %47, %22, %cst_16 {dimension_numbers = #tpu.dot_dimension_numbers<[1], [0], [0], [1], [0, 0, 1, 1], [], []>} : vector<8x32xf32>, vector<32x96xf32>, vector<8x96xf32> -> vector<8x96xf32>
    %50 = vector.extract_strided_slice %48 {offsets = [0, 0], sizes = [8, 64], strides = [1, 1]} : vector<8x96xf32> to vector<8x64xf32>
    %51 = vector.extract_strided_slice %49 {offsets = [0, 0], sizes = [8, 64], strides = [1, 1]} : vector<8x96xf32> to vector<8x64xf32>
    %52 = arith.addf %50, %51 : vector<8x64xf32>
    %53 = arith.negf %52 : vector<8x64xf32>
    %54 = math.exp %53 : vector<8x64xf32>
    %cst_17 = arith.constant 1.000000e+00 : f32
    %55 = vector.broadcast %cst_17 : f32 to vector<8x64xf32>
    %56 = arith.addf %55, %54 : vector<8x64xf32>
    %57 = arith.divf %55, %56 : vector<8x64xf32>
    %58 = vector.extract_strided_slice %57 {offsets = [0, 0], sizes = [8, 32], strides = [1, 1]} : vector<8x64xf32> to vector<8x32xf32>
    %59 = vector.extract_strided_slice %57 {offsets = [0, 32], sizes = [8, 32], strides = [1, 1]} : vector<8x64xf32> to vector<8x32xf32>
    %60 = vector.extract_strided_slice %48 {offsets = [0, 64], sizes = [8, 32], strides = [1, 1]} : vector<8x96xf32> to vector<8x32xf32>
    %61 = vector.extract_strided_slice %49 {offsets = [0, 64], sizes = [8, 32], strides = [1, 1]} : vector<8x96xf32> to vector<8x32xf32>
    %62 = arith.addf %61, %25 : vector<8x32xf32>
    %63 = arith.mulf %58, %62 : vector<8x32xf32>
    %64 = arith.addf %60, %63 : vector<8x32xf32>
    %65 = math.tanh %64 : vector<8x32xf32>
    %66 = arith.subf %47, %65 : vector<8x32xf32>
    %67 = arith.mulf %59, %66 : vector<8x32xf32>
    %68 = arith.addf %65, %67 : vector<8x32xf32>
    %69 = vector.extract_strided_slice %21 {offsets = [16, 0], sizes = [8, 96], strides = [1, 1]} : vector<40x96xf32> to vector<8x96xf32>
    %cst_18 = arith.constant dense<0.000000e+00> : vector<8x96xf32>
    %70 = tpu.matmul %68, %22, %cst_18 {dimension_numbers = #tpu.dot_dimension_numbers<[1], [0], [0], [1], [0, 0, 1, 1], [], []>} : vector<8x32xf32>, vector<32x96xf32>, vector<8x96xf32> -> vector<8x96xf32>
    %71 = vector.extract_strided_slice %69 {offsets = [0, 0], sizes = [8, 64], strides = [1, 1]} : vector<8x96xf32> to vector<8x64xf32>
    %72 = vector.extract_strided_slice %70 {offsets = [0, 0], sizes = [8, 64], strides = [1, 1]} : vector<8x96xf32> to vector<8x64xf32>
    %73 = arith.addf %71, %72 : vector<8x64xf32>
    %74 = arith.negf %73 : vector<8x64xf32>
    %75 = math.exp %74 : vector<8x64xf32>
    %cst_19 = arith.constant 1.000000e+00 : f32
    %76 = vector.broadcast %cst_19 : f32 to vector<8x64xf32>
    %77 = arith.addf %76, %75 : vector<8x64xf32>
    %78 = arith.divf %76, %77 : vector<8x64xf32>
    %79 = vector.extract_strided_slice %78 {offsets = [0, 0], sizes = [8, 32], strides = [1, 1]} : vector<8x64xf32> to vector<8x32xf32>
    %80 = vector.extract_strided_slice %78 {offsets = [0, 32], sizes = [8, 32], strides = [1, 1]} : vector<8x64xf32> to vector<8x32xf32>
    %81 = vector.extract_strided_slice %69 {offsets = [0, 64], sizes = [8, 32], strides = [1, 1]} : vector<8x96xf32> to vector<8x32xf32>
    %82 = vector.extract_strided_slice %70 {offsets = [0, 64], sizes = [8, 32], strides = [1, 1]} : vector<8x96xf32> to vector<8x32xf32>
    %83 = arith.addf %82, %25 : vector<8x32xf32>
    %84 = arith.mulf %79, %83 : vector<8x32xf32>
    %85 = arith.addf %81, %84 : vector<8x32xf32>
    %86 = math.tanh %85 : vector<8x32xf32>
    %87 = arith.subf %68, %86 : vector<8x32xf32>
    %88 = arith.mulf %80, %87 : vector<8x32xf32>
    %89 = arith.addf %86, %88 : vector<8x32xf32>
    %90 = vector.extract_strided_slice %21 {offsets = [24, 0], sizes = [8, 96], strides = [1, 1]} : vector<40x96xf32> to vector<8x96xf32>
    %cst_20 = arith.constant dense<0.000000e+00> : vector<8x96xf32>
    %91 = tpu.matmul %89, %22, %cst_20 {dimension_numbers = #tpu.dot_dimension_numbers<[1], [0], [0], [1], [0, 0, 1, 1], [], []>} : vector<8x32xf32>, vector<32x96xf32>, vector<8x96xf32> -> vector<8x96xf32>
    %92 = vector.extract_strided_slice %90 {offsets = [0, 0], sizes = [8, 64], strides = [1, 1]} : vector<8x96xf32> to vector<8x64xf32>
    %93 = vector.extract_strided_slice %91 {offsets = [0, 0], sizes = [8, 64], strides = [1, 1]} : vector<8x96xf32> to vector<8x64xf32>
    %94 = arith.addf %92, %93 : vector<8x64xf32>
    %95 = arith.negf %94 : vector<8x64xf32>
    %96 = math.exp %95 : vector<8x64xf32>
    %cst_21 = arith.constant 1.000000e+00 : f32
    %97 = vector.broadcast %cst_21 : f32 to vector<8x64xf32>
    %98 = arith.addf %97, %96 : vector<8x64xf32>
    %99 = arith.divf %97, %98 : vector<8x64xf32>
    %100 = vector.extract_strided_slice %99 {offsets = [0, 0], sizes = [8, 32], strides = [1, 1]} : vector<8x64xf32> to vector<8x32xf32>
    %101 = vector.extract_strided_slice %99 {offsets = [0, 32], sizes = [8, 32], strides = [1, 1]} : vector<8x64xf32> to vector<8x32xf32>
    %102 = vector.extract_strided_slice %90 {offsets = [0, 64], sizes = [8, 32], strides = [1, 1]} : vector<8x96xf32> to vector<8x32xf32>
    %103 = vector.extract_strided_slice %91 {offsets = [0, 64], sizes = [8, 32], strides = [1, 1]} : vector<8x96xf32> to vector<8x32xf32>
    %104 = arith.addf %103, %25 : vector<8x32xf32>
    %105 = arith.mulf %100, %104 : vector<8x32xf32>
    %106 = arith.addf %102, %105 : vector<8x32xf32>
    %107 = math.tanh %106 : vector<8x32xf32>
    %108 = arith.subf %89, %107 : vector<8x32xf32>
    %109 = arith.mulf %101, %108 : vector<8x32xf32>
    %110 = arith.addf %107, %109 : vector<8x32xf32>
    %111 = vector.extract_strided_slice %21 {offsets = [32, 0], sizes = [8, 96], strides = [1, 1]} : vector<40x96xf32> to vector<8x96xf32>
    %cst_22 = arith.constant dense<0.000000e+00> : vector<8x96xf32>
    %112 = tpu.matmul %110, %22, %cst_22 {dimension_numbers = #tpu.dot_dimension_numbers<[1], [0], [0], [1], [0, 0, 1, 1], [], []>} : vector<8x32xf32>, vector<32x96xf32>, vector<8x96xf32> -> vector<8x96xf32>
    %113 = vector.extract_strided_slice %111 {offsets = [0, 0], sizes = [8, 64], strides = [1, 1]} : vector<8x96xf32> to vector<8x64xf32>
    %114 = vector.extract_strided_slice %112 {offsets = [0, 0], sizes = [8, 64], strides = [1, 1]} : vector<8x96xf32> to vector<8x64xf32>
    %115 = arith.addf %113, %114 : vector<8x64xf32>
    %116 = arith.negf %115 : vector<8x64xf32>
    %117 = math.exp %116 : vector<8x64xf32>
    %cst_23 = arith.constant 1.000000e+00 : f32
    %118 = vector.broadcast %cst_23 : f32 to vector<8x64xf32>
    %119 = arith.addf %118, %117 : vector<8x64xf32>
    %120 = arith.divf %118, %119 : vector<8x64xf32>
    %121 = vector.extract_strided_slice %120 {offsets = [0, 0], sizes = [8, 32], strides = [1, 1]} : vector<8x64xf32> to vector<8x32xf32>
    %122 = vector.extract_strided_slice %120 {offsets = [0, 32], sizes = [8, 32], strides = [1, 1]} : vector<8x64xf32> to vector<8x32xf32>
    %123 = vector.extract_strided_slice %111 {offsets = [0, 64], sizes = [8, 32], strides = [1, 1]} : vector<8x96xf32> to vector<8x32xf32>
    %124 = vector.extract_strided_slice %112 {offsets = [0, 64], sizes = [8, 32], strides = [1, 1]} : vector<8x96xf32> to vector<8x32xf32>
    %125 = arith.addf %124, %25 : vector<8x32xf32>
    %126 = arith.mulf %121, %125 : vector<8x32xf32>
    %127 = arith.addf %123, %126 : vector<8x32xf32>
    %128 = math.tanh %127 : vector<8x32xf32>
    %129 = arith.subf %110, %128 : vector<8x32xf32>
    %130 = arith.mulf %122, %129 : vector<8x32xf32>
    %131 = arith.addf %128, %130 : vector<8x32xf32>
    %c0_24 = arith.constant 0 : index
    %c0_25 = arith.constant 0 : index
    %132 = vector.load %arg10[%c0_24, %c0_25] : memref<32x96xbf16, #tpu.memory_space<vmem>>, vector<32x96xbf16>
    %c0_26 = arith.constant 0 : index
    %c0_27 = arith.constant 0 : index
    %133 = vector.load %arg13[%c0_26, %c0_27] : memref<1x96xf32, #tpu.memory_space<vmem>>, vector<1x96xf32>
    %134 = tpu.iota {dimensions = array<i32: 1>} : vector<192x32xi32>
    %c0_28 = arith.constant 0 : index
    %c0_29 = arith.constant 0 : index
    %135 = vector.load %arg2[%c0_28, %c0_29] : memref<192x1xi32, #tpu.memory_space<vmem>>, vector<192x1xi32>
    %136 = vector.broadcast %135 : vector<192x1xi32> to vector<192x32xi32>
    %137 = arith.cmpi eq, %134, %136 : vector<192x32xi32>
    %138 = arith.extui %137 : vector<192x32xi1> to vector<192x32xi32>
    %139 = arith.sitofp %138 : vector<192x32xi32> to vector<192x32xf32>
    %140 = arith.truncf %139 : vector<192x32xf32> to vector<192x32xbf16>
    %c0_30 = arith.constant 0 : index
    %c0_31 = arith.constant 0 : index
    %141 = vector.load %arg5[%c0_30, %c0_31] : memref<32x32xbf16, #tpu.memory_space<vmem>>, vector<32x32xbf16>
    %cst_32 = arith.constant dense<0.000000e+00> : vector<192x32xf32>
    %142 = tpu.matmul %140, %141, %cst_32 {dimension_numbers = #tpu.dot_dimension_numbers<[1], [0], [0], [1], [0, 0, 1, 1], [], []>} : vector<192x32xbf16>, vector<32x32xbf16>, vector<192x32xf32> -> vector<192x32xf32>
    %143 = arith.truncf %131 : vector<8x32xf32> to vector<8x32xbf16>
    %cst_33 = arith.constant dense<0.000000e+00> : vector<8x96xf32>
    %144 = tpu.matmul %143, %132, %cst_33 {dimension_numbers = #tpu.dot_dimension_numbers<[1], [0], [0], [1], [0, 0, 1, 1], [], []>} : vector<8x32xbf16>, vector<32x96xbf16>, vector<8x96xf32> -> vector<8x96xf32>
    %c0_34 = arith.constant 0 : index
    %c0_35 = arith.constant 0 : index
    %145 = vector.load %arg12[%c0_34, %c0_35] : memref<1x96xf32, #tpu.memory_space<vmem>>, vector<1x96xf32>
    %c64_i32_36 = arith.constant 64 : i32
    %146 = vector.broadcast %c64_i32_36 : i32 to vector<1x96xi32>
    %147 = arith.cmpi slt, %0, %146 : vector<1x96xi32>
    %cst_37 = arith.constant 0.000000e+00 : f32
    %148 = vector.broadcast %cst_37 : f32 to vector<1x96xf32>
    %149 = arith.select %147, %133, %148 : vector<1x96xi1>, vector<1x96xf32>
    %150 = arith.addf %145, %149 : vector<1x96xf32>
    %151 = vector.broadcast %150 : vector<1x96xf32> to vector<8x96xf32>
    %152 = arith.addf %144, %151 : vector<8x96xf32>
    %153 = vector.shape_cast %152 : vector<8x96xf32> to vector<1x8x96xf32>
    %154 = vector.broadcast %153 : vector<1x8x96xf32> to vector<24x8x96xf32>
    %155 = vector.shape_cast %154 : vector<24x8x96xf32> to vector<192x96xf32>
    %156 = arith.truncf %142 : vector<192x32xf32> to vector<192x32xbf16>
    %cst_38 = arith.constant dense<0.000000e+00> : vector<192x96xf32>
    %157 = tpu.matmul %156, %132, %cst_38 {dimension_numbers = #tpu.dot_dimension_numbers<[1], [0], [0], [1], [0, 0, 1, 1], [], []>} : vector<192x32xbf16>, vector<32x96xbf16>, vector<192x96xf32> -> vector<192x96xf32>
    %158 = arith.addf %157, %155 : vector<192x96xf32>
    %c0_39 = arith.constant 0 : index
    %c0_40 = arith.constant 0 : index
    %159 = vector.load %arg11[%c0_39, %c0_40] : memref<32x96xf32, #tpu.memory_space<vmem>>, vector<32x96xf32>
    %160 = vector.extract_strided_slice %133 {offsets = [0, 64], sizes = [1, 32], strides = [1, 1]} : vector<1x96xf32> to vector<1x32xf32>
    %161 = vector.shape_cast %160 : vector<1x32xf32> to vector<1x32xf32>
    %162 = vector.broadcast %161 : vector<1x32xf32> to vector<32x32xf32>
    %cst_41 = arith.constant 0.000000e+00 : f32
    %163 = vector.broadcast %cst_41 : f32 to vector<32x32xf32>
    %164 = vector.extract_strided_slice %158 {offsets = [0, 0], sizes = [32, 96], strides = [1, 1]} : vector<192x96xf32> to vector<32x96xf32>
    %cst_42 = arith.constant dense<0.000000e+00> : vector<32x96xf32>
    %165 = tpu.matmul %163, %159, %cst_42 {dimension_numbers = #tpu.dot_dimension_numbers<[1], [0], [0], [1], [0, 0, 1, 1], [], []>} : vector<32x32xf32>, vector<32x96xf32>, vector<32x96xf32> -> vector<32x96xf32>
    %166 = vector.extract_strided_slice %164 {offsets = [0, 0], sizes = [32, 64], strides = [1, 1]} : vector<32x96xf32> to vector<32x64xf32>
    %167 = vector.extract_strided_slice %165 {offsets = [0, 0], sizes = [32, 64], strides = [1, 1]} : vector<32x96xf32> to vector<32x64xf32>
    %168 = arith.addf %166, %167 : vector<32x64xf32>
    %169 = arith.negf %168 : vector<32x64xf32>
    %170 = math.exp %169 : vector<32x64xf32>
    %cst_43 = arith.constant 1.000000e+00 : f32
    %171 = vector.broadcast %cst_43 : f32 to vector<32x64xf32>
    %172 = arith.addf %171, %170 : vector<32x64xf32>
    %173 = arith.divf %171, %172 : vector<32x64xf32>
    %174 = vector.extract_strided_slice %173 {offsets = [0, 0], sizes = [32, 32], strides = [1, 1]} : vector<32x64xf32> to vector<32x32xf32>
    %175 = vector.extract_strided_slice %173 {offsets = [0, 32], sizes = [32, 32], strides = [1, 1]} : vector<32x64xf32> to vector<32x32xf32>
    %176 = vector.extract_strided_slice %164 {offsets = [0, 64], sizes = [32, 32], strides = [1, 1]} : vector<32x96xf32> to vector<32x32xf32>
    %177 = vector.extract_strided_slice %165 {offsets = [0, 64], sizes = [32, 32], strides = [1, 1]} : vector<32x96xf32> to vector<32x32xf32>
    %178 = arith.addf %177, %162 : vector<32x32xf32>
    %179 = arith.mulf %174, %178 : vector<32x32xf32>
    %180 = arith.addf %176, %179 : vector<32x32xf32>
    %181 = math.tanh %180 : vector<32x32xf32>
    %182 = arith.subf %163, %181 : vector<32x32xf32>
    %183 = arith.mulf %175, %182 : vector<32x32xf32>
    %184 = arith.addf %181, %183 : vector<32x32xf32>
    %185 = vector.extract_strided_slice %158 {offsets = [32, 0], sizes = [32, 96], strides = [1, 1]} : vector<192x96xf32> to vector<32x96xf32>
    %cst_44 = arith.constant dense<0.000000e+00> : vector<32x96xf32>
    %186 = tpu.matmul %184, %159, %cst_44 {dimension_numbers = #tpu.dot_dimension_numbers<[1], [0], [0], [1], [0, 0, 1, 1], [], []>} : vector<32x32xf32>, vector<32x96xf32>, vector<32x96xf32> -> vector<32x96xf32>
    %187 = vector.extract_strided_slice %185 {offsets = [0, 0], sizes = [32, 64], strides = [1, 1]} : vector<32x96xf32> to vector<32x64xf32>
    %188 = vector.extract_strided_slice %186 {offsets = [0, 0], sizes = [32, 64], strides = [1, 1]} : vector<32x96xf32> to vector<32x64xf32>
    %189 = arith.addf %187, %188 : vector<32x64xf32>
    %190 = arith.negf %189 : vector<32x64xf32>
    %191 = math.exp %190 : vector<32x64xf32>
    %cst_45 = arith.constant 1.000000e+00 : f32
    %192 = vector.broadcast %cst_45 : f32 to vector<32x64xf32>
    %193 = arith.addf %192, %191 : vector<32x64xf32>
    %194 = arith.divf %192, %193 : vector<32x64xf32>
    %195 = vector.extract_strided_slice %194 {offsets = [0, 0], sizes = [32, 32], strides = [1, 1]} : vector<32x64xf32> to vector<32x32xf32>
    %196 = vector.extract_strided_slice %194 {offsets = [0, 32], sizes = [32, 32], strides = [1, 1]} : vector<32x64xf32> to vector<32x32xf32>
    %197 = vector.extract_strided_slice %185 {offsets = [0, 64], sizes = [32, 32], strides = [1, 1]} : vector<32x96xf32> to vector<32x32xf32>
    %198 = vector.extract_strided_slice %186 {offsets = [0, 64], sizes = [32, 32], strides = [1, 1]} : vector<32x96xf32> to vector<32x32xf32>
    %199 = arith.addf %198, %162 : vector<32x32xf32>
    %200 = arith.mulf %195, %199 : vector<32x32xf32>
    %201 = arith.addf %197, %200 : vector<32x32xf32>
    %202 = math.tanh %201 : vector<32x32xf32>
    %203 = arith.subf %184, %202 : vector<32x32xf32>
    %204 = arith.mulf %196, %203 : vector<32x32xf32>
    %205 = arith.addf %202, %204 : vector<32x32xf32>
    %206 = vector.extract_strided_slice %158 {offsets = [64, 0], sizes = [32, 96], strides = [1, 1]} : vector<192x96xf32> to vector<32x96xf32>
    %cst_46 = arith.constant dense<0.000000e+00> : vector<32x96xf32>
    %207 = tpu.matmul %205, %159, %cst_46 {dimension_numbers = #tpu.dot_dimension_numbers<[1], [0], [0], [1], [0, 0, 1, 1], [], []>} : vector<32x32xf32>, vector<32x96xf32>, vector<32x96xf32> -> vector<32x96xf32>
    %208 = vector.extract_strided_slice %206 {offsets = [0, 0], sizes = [32, 64], strides = [1, 1]} : vector<32x96xf32> to vector<32x64xf32>
    %209 = vector.extract_strided_slice %207 {offsets = [0, 0], sizes = [32, 64], strides = [1, 1]} : vector<32x96xf32> to vector<32x64xf32>
    %210 = arith.addf %208, %209 : vector<32x64xf32>
    %211 = arith.negf %210 : vector<32x64xf32>
    %212 = math.exp %211 : vector<32x64xf32>
    %cst_47 = arith.constant 1.000000e+00 : f32
    %213 = vector.broadcast %cst_47 : f32 to vector<32x64xf32>
    %214 = arith.addf %213, %212 : vector<32x64xf32>
    %215 = arith.divf %213, %214 : vector<32x64xf32>
    %216 = vector.extract_strided_slice %215 {offsets = [0, 0], sizes = [32, 32], strides = [1, 1]} : vector<32x64xf32> to vector<32x32xf32>
    %217 = vector.extract_strided_slice %215 {offsets = [0, 32], sizes = [32, 32], strides = [1, 1]} : vector<32x64xf32> to vector<32x32xf32>
    %218 = vector.extract_strided_slice %206 {offsets = [0, 64], sizes = [32, 32], strides = [1, 1]} : vector<32x96xf32> to vector<32x32xf32>
    %219 = vector.extract_strided_slice %207 {offsets = [0, 64], sizes = [32, 32], strides = [1, 1]} : vector<32x96xf32> to vector<32x32xf32>
    %220 = arith.addf %219, %162 : vector<32x32xf32>
    %221 = arith.mulf %216, %220 : vector<32x32xf32>
    %222 = arith.addf %218, %221 : vector<32x32xf32>
    %223 = math.tanh %222 : vector<32x32xf32>
    %224 = arith.subf %205, %223 : vector<32x32xf32>
    %225 = arith.mulf %217, %224 : vector<32x32xf32>
    %226 = arith.addf %223, %225 : vector<32x32xf32>
    %227 = vector.extract_strided_slice %158 {offsets = [96, 0], sizes = [32, 96], strides = [1, 1]} : vector<192x96xf32> to vector<32x96xf32>
    %cst_48 = arith.constant dense<0.000000e+00> : vector<32x96xf32>
    %228 = tpu.matmul %226, %159, %cst_48 {dimension_numbers = #tpu.dot_dimension_numbers<[1], [0], [0], [1], [0, 0, 1, 1], [], []>} : vector<32x32xf32>, vector<32x96xf32>, vector<32x96xf32> -> vector<32x96xf32>
    %229 = vector.extract_strided_slice %227 {offsets = [0, 0], sizes = [32, 64], strides = [1, 1]} : vector<32x96xf32> to vector<32x64xf32>
    %230 = vector.extract_strided_slice %228 {offsets = [0, 0], sizes = [32, 64], strides = [1, 1]} : vector<32x96xf32> to vector<32x64xf32>
    %231 = arith.addf %229, %230 : vector<32x64xf32>
    %232 = arith.negf %231 : vector<32x64xf32>
    %233 = math.exp %232 : vector<32x64xf32>
    %cst_49 = arith.constant 1.000000e+00 : f32
    %234 = vector.broadcast %cst_49 : f32 to vector<32x64xf32>
    %235 = arith.addf %234, %233 : vector<32x64xf32>
    %236 = arith.divf %234, %235 : vector<32x64xf32>
    %237 = vector.extract_strided_slice %236 {offsets = [0, 0], sizes = [32, 32], strides = [1, 1]} : vector<32x64xf32> to vector<32x32xf32>
    %238 = vector.extract_strided_slice %236 {offsets = [0, 32], sizes = [32, 32], strides = [1, 1]} : vector<32x64xf32> to vector<32x32xf32>
    %239 = vector.extract_strided_slice %227 {offsets = [0, 64], sizes = [32, 32], strides = [1, 1]} : vector<32x96xf32> to vector<32x32xf32>
    %240 = vector.extract_strided_slice %228 {offsets = [0, 64], sizes = [32, 32], strides = [1, 1]} : vector<32x96xf32> to vector<32x32xf32>
    %241 = arith.addf %240, %162 : vector<32x32xf32>
    %242 = arith.mulf %237, %241 : vector<32x32xf32>
    %243 = arith.addf %239, %242 : vector<32x32xf32>
    %244 = math.tanh %243 : vector<32x32xf32>
    %245 = arith.subf %226, %244 : vector<32x32xf32>
    %246 = arith.mulf %238, %245 : vector<32x32xf32>
    %247 = arith.addf %244, %246 : vector<32x32xf32>
    %248 = vector.extract_strided_slice %158 {offsets = [128, 0], sizes = [32, 96], strides = [1, 1]} : vector<192x96xf32> to vector<32x96xf32>
    %cst_50 = arith.constant dense<0.000000e+00> : vector<32x96xf32>
    %249 = tpu.matmul %247, %159, %cst_50 {dimension_numbers = #tpu.dot_dimension_numbers<[1], [0], [0], [1], [0, 0, 1, 1], [], []>} : vector<32x32xf32>, vector<32x96xf32>, vector<32x96xf32> -> vector<32x96xf32>
    %250 = vector.extract_strided_slice %248 {offsets = [0, 0], sizes = [32, 64], strides = [1, 1]} : vector<32x96xf32> to vector<32x64xf32>
    %251 = vector.extract_strided_slice %249 {offsets = [0, 0], sizes = [32, 64], strides = [1, 1]} : vector<32x96xf32> to vector<32x64xf32>
    %252 = arith.addf %250, %251 : vector<32x64xf32>
    %253 = arith.negf %252 : vector<32x64xf32>
    %254 = math.exp %253 : vector<32x64xf32>
    %cst_51 = arith.constant 1.000000e+00 : f32
    %255 = vector.broadcast %cst_51 : f32 to vector<32x64xf32>
    %256 = arith.addf %255, %254 : vector<32x64xf32>
    %257 = arith.divf %255, %256 : vector<32x64xf32>
    %258 = vector.extract_strided_slice %257 {offsets = [0, 0], sizes = [32, 32], strides = [1, 1]} : vector<32x64xf32> to vector<32x32xf32>
    %259 = vector.extract_strided_slice %257 {offsets = [0, 32], sizes = [32, 32], strides = [1, 1]} : vector<32x64xf32> to vector<32x32xf32>
    %260 = vector.extract_strided_slice %248 {offsets = [0, 64], sizes = [32, 32], strides = [1, 1]} : vector<32x96xf32> to vector<32x32xf32>
    %261 = vector.extract_strided_slice %249 {offsets = [0, 64], sizes = [32, 32], strides = [1, 1]} : vector<32x96xf32> to vector<32x32xf32>
    %262 = arith.addf %261, %162 : vector<32x32xf32>
    %263 = arith.mulf %258, %262 : vector<32x32xf32>
    %264 = arith.addf %260, %263 : vector<32x32xf32>
    %265 = math.tanh %264 : vector<32x32xf32>
    %266 = arith.subf %247, %265 : vector<32x32xf32>
    %267 = arith.mulf %259, %266 : vector<32x32xf32>
    %268 = arith.addf %265, %267 : vector<32x32xf32>
    %269 = vector.extract_strided_slice %158 {offsets = [160, 0], sizes = [32, 96], strides = [1, 1]} : vector<192x96xf32> to vector<32x96xf32>
    %cst_52 = arith.constant dense<0.000000e+00> : vector<32x96xf32>
    %270 = tpu.matmul %268, %159, %cst_52 {dimension_numbers = #tpu.dot_dimension_numbers<[1], [0], [0], [1], [0, 0, 1, 1], [], []>} : vector<32x32xf32>, vector<32x96xf32>, vector<32x96xf32> -> vector<32x96xf32>
    %271 = vector.extract_strided_slice %269 {offsets = [0, 0], sizes = [32, 64], strides = [1, 1]} : vector<32x96xf32> to vector<32x64xf32>
    %272 = vector.extract_strided_slice %270 {offsets = [0, 0], sizes = [32, 64], strides = [1, 1]} : vector<32x96xf32> to vector<32x64xf32>
    %273 = arith.addf %271, %272 : vector<32x64xf32>
    %274 = arith.negf %273 : vector<32x64xf32>
    %275 = math.exp %274 : vector<32x64xf32>
    %cst_53 = arith.constant 1.000000e+00 : f32
    %276 = vector.broadcast %cst_53 : f32 to vector<32x64xf32>
    %277 = arith.addf %276, %275 : vector<32x64xf32>
    %278 = arith.divf %276, %277 : vector<32x64xf32>
    %279 = vector.extract_strided_slice %278 {offsets = [0, 0], sizes = [32, 32], strides = [1, 1]} : vector<32x64xf32> to vector<32x32xf32>
    %280 = vector.extract_strided_slice %278 {offsets = [0, 32], sizes = [32, 32], strides = [1, 1]} : vector<32x64xf32> to vector<32x32xf32>
    %281 = vector.extract_strided_slice %269 {offsets = [0, 64], sizes = [32, 32], strides = [1, 1]} : vector<32x96xf32> to vector<32x32xf32>
    %282 = vector.extract_strided_slice %270 {offsets = [0, 64], sizes = [32, 32], strides = [1, 1]} : vector<32x96xf32> to vector<32x32xf32>
    %283 = arith.addf %282, %162 : vector<32x32xf32>
    %284 = arith.mulf %279, %283 : vector<32x32xf32>
    %285 = arith.addf %281, %284 : vector<32x32xf32>
    %286 = math.tanh %285 : vector<32x32xf32>
    %287 = arith.subf %268, %286 : vector<32x32xf32>
    %288 = arith.mulf %280, %287 : vector<32x32xf32>
    %289 = arith.addf %286, %288 : vector<32x32xf32>
    %c0_54 = arith.constant 0 : index
    %c0_55 = arith.constant 0 : index
    %290 = vector.load %arg14[%c0_54, %c0_55] : memref<32x96xbf16, #tpu.memory_space<vmem>>, vector<32x96xbf16>
    %c0_56 = arith.constant 0 : index
    %c0_57 = arith.constant 0 : index
    %291 = vector.load %arg17[%c0_56, %c0_57] : memref<1x96xf32, #tpu.memory_space<vmem>>, vector<1x96xf32>
    %292 = arith.truncf %131 : vector<8x32xf32> to vector<8x32xbf16>
    %cst_58 = arith.constant dense<0.000000e+00> : vector<8x96xf32>
    %293 = tpu.matmul %292, %290, %cst_58 {dimension_numbers = #tpu.dot_dimension_numbers<[1], [0], [0], [1], [0, 0, 1, 1], [], []>} : vector<8x32xbf16>, vector<32x96xbf16>, vector<8x96xf32> -> vector<8x96xf32>
    %c0_59 = arith.constant 0 : index
    %c0_60 = arith.constant 0 : index
    %294 = vector.load %arg16[%c0_59, %c0_60] : memref<1x96xf32, #tpu.memory_space<vmem>>, vector<1x96xf32>
    %c64_i32_61 = arith.constant 64 : i32
    %295 = vector.broadcast %c64_i32_61 : i32 to vector<1x96xi32>
    %296 = arith.cmpi slt, %0, %295 : vector<1x96xi32>
    %cst_62 = arith.constant 0.000000e+00 : f32
    %297 = vector.broadcast %cst_62 : f32 to vector<1x96xf32>
    %298 = arith.select %296, %291, %297 : vector<1x96xi1>, vector<1x96xf32>
    %299 = arith.addf %294, %298 : vector<1x96xf32>
    %300 = vector.broadcast %299 : vector<1x96xf32> to vector<8x96xf32>
    %301 = arith.addf %293, %300 : vector<8x96xf32>
    %302 = vector.shape_cast %301 : vector<8x96xf32> to vector<1x8x96xf32>
    %303 = vector.broadcast %302 : vector<1x8x96xf32> to vector<4x8x96xf32>
    %304 = vector.shape_cast %303 : vector<4x8x96xf32> to vector<32x96xf32>
    %305 = arith.truncf %289 : vector<32x32xf32> to vector<32x32xbf16>
    %cst_63 = arith.constant dense<0.000000e+00> : vector<32x96xf32>
    %306 = tpu.matmul %305, %290, %cst_63 {dimension_numbers = #tpu.dot_dimension_numbers<[1], [0], [0], [1], [0, 0, 1, 1], [], []>} : vector<32x32xbf16>, vector<32x96xbf16>, vector<32x96xf32> -> vector<32x96xf32>
    %307 = arith.addf %306, %304 : vector<32x96xf32>
    %c0_64 = arith.constant 0 : index
    %c0_65 = arith.constant 0 : index
    %308 = vector.load %arg15[%c0_64, %c0_65] : memref<32x96xf32, #tpu.memory_space<vmem>>, vector<32x96xf32>
    %309 = vector.extract_strided_slice %291 {offsets = [0, 64], sizes = [1, 32], strides = [1, 1]} : vector<1x96xf32> to vector<1x32xf32>
    %c0_66 = arith.constant 0 : index
    %c0_67 = arith.constant 0 : index
    %310 = vector.load %arg3[%c0_66, %c0_67] : memref<8x1xi32, #tpu.memory_space<vmem>>, vector<8x1xi32>
    %311 = vector.shape_cast %309 : vector<1x32xf32> to vector<1x32xf32>
    %312 = vector.broadcast %311 : vector<1x32xf32> to vector<8x32xf32>
    %cst_68 = arith.constant 0.000000e+00 : f32
    %313 = vector.broadcast %cst_68 : f32 to vector<8x32xf32>
    %314 = vector.extract_strided_slice %307 {offsets = [0, 0], sizes = [8, 96], strides = [1, 1]} : vector<32x96xf32> to vector<8x96xf32>
    %cst_69 = arith.constant dense<0.000000e+00> : vector<8x96xf32>
    %315 = tpu.matmul %313, %308, %cst_69 {dimension_numbers = #tpu.dot_dimension_numbers<[1], [0], [0], [1], [0, 0, 1, 1], [], []>} : vector<8x32xf32>, vector<32x96xf32>, vector<8x96xf32> -> vector<8x96xf32>
    %316 = vector.extract_strided_slice %314 {offsets = [0, 0], sizes = [8, 64], strides = [1, 1]} : vector<8x96xf32> to vector<8x64xf32>
    %317 = vector.extract_strided_slice %315 {offsets = [0, 0], sizes = [8, 64], strides = [1, 1]} : vector<8x96xf32> to vector<8x64xf32>
    %318 = arith.addf %316, %317 : vector<8x64xf32>
    %319 = arith.negf %318 : vector<8x64xf32>
    %320 = math.exp %319 : vector<8x64xf32>
    %cst_70 = arith.constant 1.000000e+00 : f32
    %321 = vector.broadcast %cst_70 : f32 to vector<8x64xf32>
    %322 = arith.addf %321, %320 : vector<8x64xf32>
    %323 = arith.divf %321, %322 : vector<8x64xf32>
    %324 = vector.extract_strided_slice %323 {offsets = [0, 0], sizes = [8, 32], strides = [1, 1]} : vector<8x64xf32> to vector<8x32xf32>
    %325 = vector.extract_strided_slice %323 {offsets = [0, 32], sizes = [8, 32], strides = [1, 1]} : vector<8x64xf32> to vector<8x32xf32>
    %326 = vector.extract_strided_slice %314 {offsets = [0, 64], sizes = [8, 32], strides = [1, 1]} : vector<8x96xf32> to vector<8x32xf32>
    %327 = vector.extract_strided_slice %315 {offsets = [0, 64], sizes = [8, 32], strides = [1, 1]} : vector<8x96xf32> to vector<8x32xf32>
    %328 = arith.addf %327, %312 : vector<8x32xf32>
    %329 = arith.mulf %324, %328 : vector<8x32xf32>
    %330 = arith.addf %326, %329 : vector<8x32xf32>
    %331 = math.tanh %330 : vector<8x32xf32>
    %332 = arith.subf %313, %331 : vector<8x32xf32>
    %333 = arith.mulf %325, %332 : vector<8x32xf32>
    %334 = arith.addf %331, %333 : vector<8x32xf32>
    %c0_i32 = arith.constant 0 : i32
    %335 = vector.broadcast %c0_i32 : i32 to vector<8x1xi32>
    %336 = arith.cmpi sgt, %310, %335 : vector<8x1xi32>
    %337 = vector.shape_cast %336 : vector<8x1xi1> to vector<8x1xi1>
    %338 = vector.broadcast %337 : vector<8x1xi1> to vector<8x32xi1>
    %339 = arith.select %338, %334, %313 : vector<8x32xi1>, vector<8x32xf32>
    %340 = vector.extract_strided_slice %307 {offsets = [8, 0], sizes = [8, 96], strides = [1, 1]} : vector<32x96xf32> to vector<8x96xf32>
    %cst_71 = arith.constant dense<0.000000e+00> : vector<8x96xf32>
    %341 = tpu.matmul %339, %308, %cst_71 {dimension_numbers = #tpu.dot_dimension_numbers<[1], [0], [0], [1], [0, 0, 1, 1], [], []>} : vector<8x32xf32>, vector<32x96xf32>, vector<8x96xf32> -> vector<8x96xf32>
    %342 = vector.extract_strided_slice %340 {offsets = [0, 0], sizes = [8, 64], strides = [1, 1]} : vector<8x96xf32> to vector<8x64xf32>
    %343 = vector.extract_strided_slice %341 {offsets = [0, 0], sizes = [8, 64], strides = [1, 1]} : vector<8x96xf32> to vector<8x64xf32>
    %344 = arith.addf %342, %343 : vector<8x64xf32>
    %345 = arith.negf %344 : vector<8x64xf32>
    %346 = math.exp %345 : vector<8x64xf32>
    %cst_72 = arith.constant 1.000000e+00 : f32
    %347 = vector.broadcast %cst_72 : f32 to vector<8x64xf32>
    %348 = arith.addf %347, %346 : vector<8x64xf32>
    %349 = arith.divf %347, %348 : vector<8x64xf32>
    %350 = vector.extract_strided_slice %349 {offsets = [0, 0], sizes = [8, 32], strides = [1, 1]} : vector<8x64xf32> to vector<8x32xf32>
    %351 = vector.extract_strided_slice %349 {offsets = [0, 32], sizes = [8, 32], strides = [1, 1]} : vector<8x64xf32> to vector<8x32xf32>
    %352 = vector.extract_strided_slice %340 {offsets = [0, 64], sizes = [8, 32], strides = [1, 1]} : vector<8x96xf32> to vector<8x32xf32>
    %353 = vector.extract_strided_slice %341 {offsets = [0, 64], sizes = [8, 32], strides = [1, 1]} : vector<8x96xf32> to vector<8x32xf32>
    %354 = arith.addf %353, %312 : vector<8x32xf32>
    %355 = arith.mulf %350, %354 : vector<8x32xf32>
    %356 = arith.addf %352, %355 : vector<8x32xf32>
    %357 = math.tanh %356 : vector<8x32xf32>
    %358 = arith.subf %339, %357 : vector<8x32xf32>
    %359 = arith.mulf %351, %358 : vector<8x32xf32>
    %360 = arith.addf %357, %359 : vector<8x32xf32>
    %c1_i32 = arith.constant 1 : i32
    %361 = vector.broadcast %c1_i32 : i32 to vector<8x1xi32>
    %362 = arith.cmpi sgt, %310, %361 : vector<8x1xi32>
    %363 = vector.shape_cast %362 : vector<8x1xi1> to vector<8x1xi1>
    %364 = vector.broadcast %363 : vector<8x1xi1> to vector<8x32xi1>
    %365 = arith.select %364, %360, %339 : vector<8x32xi1>, vector<8x32xf32>
    %366 = vector.extract_strided_slice %307 {offsets = [16, 0], sizes = [8, 96], strides = [1, 1]} : vector<32x96xf32> to vector<8x96xf32>
    %cst_73 = arith.constant dense<0.000000e+00> : vector<8x96xf32>
    %367 = tpu.matmul %365, %308, %cst_73 {dimension_numbers = #tpu.dot_dimension_numbers<[1], [0], [0], [1], [0, 0, 1, 1], [], []>} : vector<8x32xf32>, vector<32x96xf32>, vector<8x96xf32> -> vector<8x96xf32>
    %368 = vector.extract_strided_slice %366 {offsets = [0, 0], sizes = [8, 64], strides = [1, 1]} : vector<8x96xf32> to vector<8x64xf32>
    %369 = vector.extract_strided_slice %367 {offsets = [0, 0], sizes = [8, 64], strides = [1, 1]} : vector<8x96xf32> to vector<8x64xf32>
    %370 = arith.addf %368, %369 : vector<8x64xf32>
    %371 = arith.negf %370 : vector<8x64xf32>
    %372 = math.exp %371 : vector<8x64xf32>
    %cst_74 = arith.constant 1.000000e+00 : f32
    %373 = vector.broadcast %cst_74 : f32 to vector<8x64xf32>
    %374 = arith.addf %373, %372 : vector<8x64xf32>
    %375 = arith.divf %373, %374 : vector<8x64xf32>
    %376 = vector.extract_strided_slice %375 {offsets = [0, 0], sizes = [8, 32], strides = [1, 1]} : vector<8x64xf32> to vector<8x32xf32>
    %377 = vector.extract_strided_slice %375 {offsets = [0, 32], sizes = [8, 32], strides = [1, 1]} : vector<8x64xf32> to vector<8x32xf32>
    %378 = vector.extract_strided_slice %366 {offsets = [0, 64], sizes = [8, 32], strides = [1, 1]} : vector<8x96xf32> to vector<8x32xf32>
    %379 = vector.extract_strided_slice %367 {offsets = [0, 64], sizes = [8, 32], strides = [1, 1]} : vector<8x96xf32> to vector<8x32xf32>
    %380 = arith.addf %379, %312 : vector<8x32xf32>
    %381 = arith.mulf %376, %380 : vector<8x32xf32>
    %382 = arith.addf %378, %381 : vector<8x32xf32>
    %383 = math.tanh %382 : vector<8x32xf32>
    %384 = arith.subf %365, %383 : vector<8x32xf32>
    %385 = arith.mulf %377, %384 : vector<8x32xf32>
    %386 = arith.addf %383, %385 : vector<8x32xf32>
    %c2_i32 = arith.constant 2 : i32
    %387 = vector.broadcast %c2_i32 : i32 to vector<8x1xi32>
    %388 = arith.cmpi sgt, %310, %387 : vector<8x1xi32>
    %389 = vector.shape_cast %388 : vector<8x1xi1> to vector<8x1xi1>
    %390 = vector.broadcast %389 : vector<8x1xi1> to vector<8x32xi1>
    %391 = arith.select %390, %386, %365 : vector<8x32xi1>, vector<8x32xf32>
    %392 = vector.extract_strided_slice %307 {offsets = [24, 0], sizes = [8, 96], strides = [1, 1]} : vector<32x96xf32> to vector<8x96xf32>
    %cst_75 = arith.constant dense<0.000000e+00> : vector<8x96xf32>
    %393 = tpu.matmul %391, %308, %cst_75 {dimension_numbers = #tpu.dot_dimension_numbers<[1], [0], [0], [1], [0, 0, 1, 1], [], []>} : vector<8x32xf32>, vector<32x96xf32>, vector<8x96xf32> -> vector<8x96xf32>
    %394 = vector.extract_strided_slice %392 {offsets = [0, 0], sizes = [8, 64], strides = [1, 1]} : vector<8x96xf32> to vector<8x64xf32>
    %395 = vector.extract_strided_slice %393 {offsets = [0, 0], sizes = [8, 64], strides = [1, 1]} : vector<8x96xf32> to vector<8x64xf32>
    %396 = arith.addf %394, %395 : vector<8x64xf32>
    %397 = arith.negf %396 : vector<8x64xf32>
    %398 = math.exp %397 : vector<8x64xf32>
    %cst_76 = arith.constant 1.000000e+00 : f32
    %399 = vector.broadcast %cst_76 : f32 to vector<8x64xf32>
    %400 = arith.addf %399, %398 : vector<8x64xf32>
    %401 = arith.divf %399, %400 : vector<8x64xf32>
    %402 = vector.extract_strided_slice %401 {offsets = [0, 0], sizes = [8, 32], strides = [1, 1]} : vector<8x64xf32> to vector<8x32xf32>
    %403 = vector.extract_strided_slice %401 {offsets = [0, 32], sizes = [8, 32], strides = [1, 1]} : vector<8x64xf32> to vector<8x32xf32>
    %404 = vector.extract_strided_slice %392 {offsets = [0, 64], sizes = [8, 32], strides = [1, 1]} : vector<8x96xf32> to vector<8x32xf32>
    %405 = vector.extract_strided_slice %393 {offsets = [0, 64], sizes = [8, 32], strides = [1, 1]} : vector<8x96xf32> to vector<8x32xf32>
    %406 = arith.addf %405, %312 : vector<8x32xf32>
    %407 = arith.mulf %402, %406 : vector<8x32xf32>
    %408 = arith.addf %404, %407 : vector<8x32xf32>
    %409 = math.tanh %408 : vector<8x32xf32>
    %410 = arith.subf %391, %409 : vector<8x32xf32>
    %411 = arith.mulf %403, %410 : vector<8x32xf32>
    %412 = arith.addf %409, %411 : vector<8x32xf32>
    %c3_i32 = arith.constant 3 : i32
    %413 = vector.broadcast %c3_i32 : i32 to vector<8x1xi32>
    %414 = arith.cmpi sgt, %310, %413 : vector<8x1xi32>
    %415 = vector.shape_cast %414 : vector<8x1xi1> to vector<8x1xi1>
    %416 = vector.broadcast %415 : vector<8x1xi1> to vector<8x32xi1>
    %417 = arith.select %416, %412, %391 : vector<8x32xi1>, vector<8x32xf32>
    %c0_77 = arith.constant 0 : index
    %c0_78 = arith.constant 0 : index
    %418 = vector.load %arg18[%c0_77, %c0_78] : memref<32x16xf32, #tpu.memory_space<vmem>>, vector<32x16xf32>
    %cst_79 = arith.constant dense<0.000000e+00> : vector<8x16xf32>
    %419 = tpu.matmul %417, %418, %cst_79 {dimension_numbers = #tpu.dot_dimension_numbers<[1], [0], [0], [1], [0, 0, 1, 1], [], []>} : vector<8x32xf32>, vector<32x16xf32>, vector<8x16xf32> -> vector<8x16xf32>
    %c0_80 = arith.constant 0 : index
    %c0_81 = arith.constant 0 : index
    %420 = vector.load %arg19[%c0_80, %c0_81] : memref<1x16xf32, #tpu.memory_space<vmem>>, vector<1x16xf32>
    %421 = vector.broadcast %420 : vector<1x16xf32> to vector<8x16xf32>
    %422 = arith.addf %419, %421 : vector<8x16xf32>
    %cst_82 = arith.constant dense<0xFF800000> : vector<8xf32>
    %423 = vector.multi_reduction <maximumf>, %422, %cst_82 [1] : vector<8x16xf32> to vector<8xf32>
    %424 = vector.shape_cast %423 : vector<8xf32> to vector<8x1xf32>
    %425 = vector.broadcast %424 : vector<8x1xf32> to vector<8x16xf32>
    %426 = arith.subf %422, %425 : vector<8x16xf32>
    %427 = math.exp %426 : vector<8x16xf32>
    %cst_83 = arith.constant dense<0.000000e+00> : vector<8xf32>
    %428 = vector.multi_reduction <add>, %427, %cst_83 [1] : vector<8x16xf32> to vector<8xf32>
    %429 = vector.shape_cast %428 : vector<8xf32> to vector<8x1xf32>
    %430 = math.log %429 : vector<8x1xf32>
    %431 = vector.broadcast %430 : vector<8x1xf32> to vector<8x16xf32>
    %432 = arith.subf %426, %431 : vector<8x16xf32>
    %c0_84 = arith.constant 0 : index
    %c0_85 = arith.constant 0 : index
    %433 = vector.load %arg20[%c0_84, %c0_85] : memref<8x16xf32, #tpu.memory_space<vmem>>, vector<8x16xf32>
    tpu.vector_store %arg20[%c0_84, %c0_85], %432 {strides = array<i32>} : memref<8x16xf32, #tpu.memory_space<vmem>>, vector<8x16xf32>,
    return
  }
  func.func @transform_0(%arg0: i32) -> (i32, i32) {
    %c0_i32 = arith.constant 0 : i32
    %c0_i32_0 = arith.constant 0 : i32
    %c0_i32_1 = arith.constant 0 : i32
    return %c0_i32, %c0_i32_0 : i32, i32
  }
  func.func @transform_1(%arg0: i32) -> (i32, i32) {
    %c0_i32 = arith.constant 0 : i32
    %c0_i32_0 = arith.constant 0 : i32
    %c0_i32_1 = arith.constant 0 : i32
    return %c0_i32, %c0_i32_0 : i32, i32
  }
  func.func @transform_2(%arg0: i32) -> (i32, i32) {
    %c0_i32 = arith.constant 0 : i32
    %c0_i32_0 = arith.constant 0 : i32
    %c0_i32_1 = arith.constant 0 : i32
    return %c0_i32, %c0_i32_0 : i32, i32
  }
  func.func @transform_3(%arg0: i32) -> (i32, i32) {
    %c0_i32 = arith.constant 0 : i32
    %c0_i32_0 = arith.constant 0 : i32
    %c0_i32_1 = arith.constant 0 : i32
    return %c0_i32, %c0_i32_0 : i32, i32
  }
  func.func @transform_4(%arg0: i32) -> (i32, i32) {
    %c0_i32 = arith.constant 0 : i32
    %c0_i32_0 = arith.constant 0 : i32
    %c0_i32_1 = arith.constant 0 : i32
    return %c0_i32, %c0_i32_0 : i32, i32
  }
  func.func @transform_5(%arg0: i32) -> (i32, i32) {
    %c0_i32 = arith.constant 0 : i32
    %c0_i32_0 = arith.constant 0 : i32
    %c0_i32_1 = arith.constant 0 : i32
    return %c0_i32, %c0_i32_0 : i32, i32
  }
  func.func @transform_6(%arg0: i32) -> (i32, i32) {
    %c0_i32 = arith.constant 0 : i32
    %c0_i32_0 = arith.constant 0 : i32
    %c0_i32_1 = arith.constant 0 : i32
    return %c0_i32, %c0_i32_0 : i32, i32
  }
  func.func @transform_7(%arg0: i32) -> (i32, i32) {
    %c0_i32 = arith.constant 0 : i32
    %c0_i32_0 = arith.constant 0 : i32
    %c0_i32_1 = arith.constant 0 : i32
    return %c0_i32, %c0_i32_0 : i32, i32
  }
  func.func @transform_8(%arg0: i32) -> (i32, i32) {
    %c0_i32 = arith.constant 0 : i32
    %c0_i32_0 = arith.constant 0 : i32
    %c0_i32_1 = arith.constant 0 : i32
    return %c0_i32, %c0_i32_0 : i32, i32
  }
  func.func @transform_9(%arg0: i32) -> (i32, i32) {
    %c0_i32 = arith.constant 0 : i32
    %c0_i32_0 = arith.constant 0 : i32
    %c0_i32_1 = arith.constant 0 : i32
    return %c0_i32, %c0_i32_0 : i32, i32
  }
  func.func @transform_10(%arg0: i32) -> (i32, i32) {
    %c0_i32 = arith.constant 0 : i32
    %c0_i32_0 = arith.constant 0 : i32
    %c0_i32_1 = arith.constant 0 : i32
    return %c0_i32, %c0_i32_0 : i32, i32
  }
  func.func @transform_11(%arg0: i32) -> (i32, i32) {
    %c0_i32 = arith.constant 0 : i32
    %c0_i32_0 = arith.constant 0 : i32
    %c0_i32_1 = arith.constant 0 : i32
    return %c0_i32, %c0_i32_0 : i32, i32
  }
  func.func @transform_12(%arg0: i32) -> (i32, i32) {
    %c0_i32 = arith.constant 0 : i32
    %c0_i32_0 = arith.constant 0 : i32
    %c0_i32_1 = arith.constant 0 : i32
    return %c0_i32, %c0_i32_0 : i32, i32
  }
  func.func @transform_13(%arg0: i32) -> (i32, i32) {
    %c0_i32 = arith.constant 0 : i32
    %c0_i32_0 = arith.constant 0 : i32
    %c0_i32_1 = arith.constant 0 : i32
    return %c0_i32, %c0_i32_0 : i32, i32
  }
  func.func @transform_14(%arg0: i32) -> (i32, i32) {
    %c0_i32 = arith.constant 0 : i32
    %c0_i32_0 = arith.constant 0 : i32
    %c0_i32_1 = arith.constant 0 : i32
    return %c0_i32, %c0_i32_0 : i32, i32
  }
  func.func @transform_15(%arg0: i32) -> (i32, i32) {
    %c0_i32 = arith.constant 0 : i32
    %c0_i32_0 = arith.constant 0 : i32
    %c0_i32_1 = arith.constant 0 : i32
    return %c0_i32, %c0_i32_0 : i32, i32
  }
  func.func @transform_16(%arg0: i32) -> (i32, i32) {
    %c0_i32 = arith.constant 0 : i32
    %c0_i32_0 = arith.constant 0 : i32
    %c0_i32_1 = arith.constant 0 : i32
    return %c0_i32, %c0_i32_0 : i32, i32
  }
  func.func @transform_17(%arg0: i32) -> (i32, i32) {
    %c0_i32 = arith.constant 0 : i32
    %c0_i32_0 = arith.constant 0 : i32
    %c0_i32_1 = arith.constant 0 : i32
    return %c0_i32, %c0_i32_0 : i32, i32
  }
  func.func @transform_18(%arg0: i32) -> (i32, i32) {
    %c0_i32 = arith.constant 0 : i32
    %c0_i32_0 = arith.constant 0 : i32
    %c0_i32_1 = arith.constant 0 : i32
    return %c0_i32, %c0_i32_0 : i32, i32
  }
  func.func @transform_19(%arg0: i32) -> (i32, i32) {
    %c0_i32 = arith.constant 0 : i32
    %c0_i32_0 = arith.constant 0 : i32
    %c0_i32_1 = arith.constant 0 : i32
    return %c0_i32, %c0_i32_0 : i32, i32
  }
}

</mosaic_0001>

<llo_original>
// kernel: sentence_model_forward.1
$region0: #{sentence_model_forward.1}
  #allocation0 [shape = 'u32[]', space=smem, size = 0x4, offset = 0x4, fixed_abs, tag = 'smem constant byte address 0x4 - core index']
  #allocation1 [shape = 'u32[72,128]{1,0:T(1,128)}', space=vmem, size = 0x9000, scoped, tag = 'internal scratch']
  %s0 = inlined_call_operand.vmem [shape: s32[40,1], index: 0, kind: input, shape index: {}]
  %s1 = inlined_call_operand.vmem [shape: s32[192,1], index: 1, kind: input, shape index: {}]
  %s2 = inlined_call_operand.vmem [shape: s32[8,1], index: 2, kind: input, shape index: {}]
  %s3 = inlined_call_operand.vmem [shape: bf16[32,32], index: 3, kind: input, shape index: {}]
  %s4 = inlined_call_operand.vmem [shape: bf16[32,32], index: 4, kind: input, shape index: {}]
  %s5 = inlined_call_operand.vmem [shape: bf16[32,96], index: 5, kind: input, shape index: {}]
  %s6 = inlined_call_operand.vmem [shape: f32[32,96], index: 6, kind: input, shape index: {}]
  %s7 = inlined_call_operand.vmem [shape: f32[1,96], index: 7, kind: input, shape index: {}]
  %s8 = inlined_call_operand.vmem [shape: f32[1,96], index: 8, kind: input, shape index: {}]
  %s9 = inlined_call_operand.vmem [shape: bf16[32,96], index: 9, kind: input, shape index: {}]
  %s10 = inlined_call_operand.vmem [shape: f32[32,96], index: 10, kind: input, shape index: {}]
  %s11 = inlined_call_operand.vmem [shape: f32[1,96], index: 11, kind: input, shape index: {}]
  %s12 = inlined_call_operand.vmem [shape: f32[1,96], index: 12, kind: input, shape index: {}]
  %s13 = inlined_call_operand.vmem [shape: bf16[32,96], index: 13, kind: input, shape index: {}]
  %s14 = inlined_call_operand.vmem [shape: f32[32,96], index: 14, kind: input, shape index: {}]
  %s15 = inlined_call_operand.vmem [shape: f32[1,96], index: 15, kind: input, shape index: {}]
  %s16 = inlined_call_operand.vmem [shape: f32[1,96], index: 16, kind: input, shape index: {}]
  %s17 = inlined_call_operand.vmem [shape: f32[32,16], index: 17, kind: input, shape index: {}]
  %s18 = inlined_call_operand.vmem [shape: f32[1,16], index: 18, kind: input, shape index: {}]
  %s19 = inlined_call_operand.hbm [shape: f32[8,16], index: 19, kind: output, shape index: {}]
  %s20 = sld [smem:[#allocation0]]
  $region86: #{sentence_model_forward.1} parent=0
    _
  %s22 = ssub.s32 1, %s20
  %s23 = scalar_select 0, %s22, %s20
  $region1: #{sentence_model_forward.1} parent=0
    #allocation2 [shape = 'u8[4096]{0}', space=vmem, size = 0x1000, scoped, tag = 'output window, operand 0, single buffered']
    #allocation3 [shape = 's32[1]{0}', space=sflag, size = 0x4, scoped, tag = 'scoped memory for sentence_model_forward.1']
    %24 = vsyncpa [#allocation3], 0
    // Predicated region
    $region2: #{sentence_model_forward.1} parent=1 // pred_check
      _
    $region3: #{sentence_model_forward.1} parent=1 // pred_check_branch
      %26 = sbr.rel (0) target = $region5
    $region4: #{sentence_model_forward.1} parent=1 // pred_region
      _
    $region5: #{sentence_model_forward.1} parent=1 // pred_fallthru
      _
    // Predicated region
    $region6: #{sentence_model_forward.1} parent=1 // pred_check
      _
    $region7: #{sentence_model_forward.1} parent=1 // pred_check_branch
      %28 = sbr.rel (0) target = $region9
    $region8: #{sentence_model_forward.1} parent=1 // pred_region
      _
    $region9: #{sentence_model_forward.1} parent=1 // pred_fallthru
      _
    // Predicated region
    $region10: #{sentence_model_forward.1} parent=1 // pred_check
      _
    $region11: #{sentence_model_forward.1} parent=1 // pred_check_branch
      %30 = sbr.rel (0) target = $region13
    $region12: #{sentence_model_forward.1} parent=1 // pred_region
      _
    $region13: #{sentence_model_forward.1} parent=1 // pred_fallthru
      _
    // Predicated region
    $region14: #{sentence_model_forward.1} parent=1 // pred_check
      _
    $region15: #{sentence_model_forward.1} parent=1 // pred_check_branch
      %32 = sbr.rel (0) target = $region17
    $region16: #{sentence_model_forward.1} parent=1 // pred_region
      _
    $region17: #{sentence_model_forward.1} parent=1 // pred_fallthru
      _
    // Predicated region
    $region18: #{sentence_model_forward.1} parent=1 // pred_check
      _
    $region19: #{sentence_model_forward.1} parent=1 // pred_check_branch
      %34 = sbr.rel (0) target = $region21
    $region20: #{sentence_model_forward.1} parent=1 // pred_region
      _
    $region21: #{sentence_model_forward.1} parent=1 // pred_fallthru
      _
    // Predicated region
    $region22: #{sentence_model_forward.1} parent=1 // pred_check
      _
    $region23: #{sentence_model_forward.1} parent=1 // pred_check_branch
      %36 = sbr.rel (0) target = $region25
    $region24: #{sentence_model_forward.1} parent=1 // pred_region
      _
    $region25: #{sentence_model_forward.1} parent=1 // pred_fallthru
      _
    // Predicated region
    $region26: #{sentence_model_forward.1} parent=1 // pred_check
      _
    $region27: #{sentence_model_forward.1} parent=1 // pred_check_branch
      %38 = sbr.rel (0) target = $region29
    $region28: #{sentence_model_forward.1} parent=1 // pred_region
      _
    $region29: #{sentence_model_forward.1} parent=1 // pred_fallthru
      _
    // Predicated region
    $region30: #{sentence_model_forward.1} parent=1 // pred_check
      _
    $region31: #{sentence_model_forward.1} parent=1 // pred_check_branch
      %40 = sbr.rel (0) target = $region33
    $region32: #{sentence_model_forward.1} parent=1 // pred_region
      _
    $region33: #{sentence_model_forward.1} parent=1 // pred_fallthru
      _
    // Predicated region
    $region34: #{sentence_model_forward.1} parent=1 // pred_check
      _
    $region35: #{sentence_model_forward.1} parent=1 // pred_check_branch
      %42 = sbr.rel (0) target = $region37
    $region36: #{sentence_model_forward.1} parent=1 // pred_region
      _
    $region37: #{sentence_model_forward.1} parent=1 // pred_fallthru
      _
    // Predicated region
    $region38: #{sentence_model_forward.1} parent=1 // pred_check
      _
    $region39: #{sentence_model_forward.1} parent=1 // pred_check_branch
      %44 = sbr.rel (0) target = $region41
    $region40: #{sentence_model_forward.1} parent=1 // pred_region
      _
    $region41: #{sentence_model_forward.1} parent=1 // pred_fallthru
      _
    // Predicated region
    $region42: #{sentence_model_forward.1} parent=1 // pred_check
      _
    $region43: #{sentence_model_forward.1} parent=1 // pred_check_branch
      %46 = sbr.rel (0) target = $region45
    $region44: #{sentence_model_forward.1} parent=1 // pred_region
      _
    $region45: #{sentence_model_forward.1} parent=1 // pred_fallthru
      _
    // Predicated region
    $region46: #{sentence_model_forward.1} parent=1 // pred_check
      _
    $region47: #{sentence_model_forward.1} parent=1 // pred_check_branch
      %48 = sbr.rel (0) target = $region49
    $region48: #{sentence_model_forward.1} parent=1 // pred_region
      _
    $region49: #{sentence_model_forward.1} parent=1 // pred_fallthru
      _
    // Predicated region
    $region50: #{sentence_model_forward.1} parent=1 // pred_check
      _
    $region51: #{sentence_model_forward.1} parent=1 // pred_check_branch
      %50 = sbr.rel (0) target = $region53
    $region52: #{sentence_model_forward.1} parent=1 // pred_region
      _
    $region53: #{sentence_model_forward.1} parent=1 // pred_fallthru
      _
    // Predicated region
    $region54: #{sentence_model_forward.1} parent=1 // pred_check
      _
    $region55: #{sentence_model_forward.1} parent=1 // pred_check_branch
      %52 = sbr.rel (0) target = $region57
    $region56: #{sentence_model_forward.1} parent=1 // pred_region
      _
    $region57: #{sentence_model_forward.1} parent=1 // pred_fallthru
      _
    // Predicated region
    $region58: #{sentence_model_forward.1} parent=1 // pred_check
      _
    $region59: #{sentence_model_forward.1} parent=1 // pred_check_branch
      %54 = sbr.rel (0) target = $region61
    $region60: #{sentence_model_forward.1} parent=1 // pred_region
      _
    $region61: #{sentence_model_forward.1} parent=1 // pred_fallthru
      _
    // Predicated region
    $region62: #{sentence_model_forward.1} parent=1 // pred_check
      _
    $region63: #{sentence_model_forward.1} parent=1 // pred_check_branch
      %56 = sbr.rel (0) target = $region65
    $region64: #{sentence_model_forward.1} parent=1 // pred_region
      _
    $region65: #{sentence_model_forward.1} parent=1 // pred_fallthru
      _
    // Predicated region
    $region66: #{sentence_model_forward.1} parent=1 // pred_check
      _
    $region67: #{sentence_model_forward.1} parent=1 // pred_check_branch
      %58 = sbr.rel (0) target = $region69
    $region68: #{sentence_model_forward.1} parent=1 // pred_region
      _
    $region69: #{sentence_model_forward.1} parent=1 // pred_fallthru
      _
    // Predicated region
    $region70: #{sentence_model_forward.1} parent=1 // pred_check
      _
    $region71: #{sentence_model_forward.1} parent=1 // pred_check_branch
      %60 = sbr.rel (0) target = $region73
    $region72: #{sentence_model_forward.1} parent=1 // pred_region
      _
    $region73: #{sentence_model_forward.1} parent=1 // pred_fallthru
      _
    // Predicated region
    $region74: #{sentence_model_forward.1} parent=1 // pred_check
      _
    $region75: #{sentence_model_forward.1} parent=1 // pred_check_branch
      %62 = sbr.rel (0) target = $region77
    $region76: #{sentence_model_forward.1} parent=1 // pred_region
      _
    $region77: #{sentence_model_forward.1} parent=1 // pred_fallthru
      _
    %v64 = vlaneseq
    %v65 = vand.u32 %v64, 127
    %v66 = vld [vmem:[%s8] sm:$0x1]
    %v67 = vld [vmem:[%s0] sm:$0xff]
    %v68 = vld [vmem:[%s0 + $0x8] sm:$0xff]
    %v69 = vld [vmem:[%s0 + $0x10] sm:$0xff]
    %v70 = vld [vmem:[%s0 + $0x18] sm:$0xff]
    %v71 = vld [vmem:[%s0 + $0x20] sm:$0xff]
    %72 = vset.pattern.permute.xlu0 0
    %73 = vperm.xlu0 %72, %v67
    %v74 = vpop.permute.xlu0 %73
    %75 = vset.pattern.permute.xlu0 0
    %76 = vperm.xlu0 %75, %v68
    %v77 = vpop.permute.xlu0 %76
    %78 = vset.pattern.permute.xlu0 0
    %79 = vperm.xlu0 %78, %v69
    %v80 = vpop.permute.xlu0 %79
    %81 = vset.pattern.permute.xlu0 0
    %82 = vperm.xlu0 %81, %v70
    %v83 = vpop.permute.xlu0 %82
    %84 = vset.pattern.permute.xlu0 0
    %85 = vperm.xlu0 %84, %v71
    %v86 = vpop.permute.xlu0 %85
    %vm87 = vcmp.eq.s32.totalorder %v65, %v74
    %vm88 = vcmp.eq.s32.totalorder %v65, %v77
    %vm89 = vcmp.eq.s32.totalorder %v65, %v80
    %vm90 = vcmp.eq.s32.totalorder %v65, %v83
    %vm91 = vcmp.eq.s32.totalorder %v65, %v86
    %v92 = vsel %vm87, 1, 0
    %v93 = vsel %vm88, 1, 0
    %v94 = vsel %vm89, 1, 0
    %v95 = vsel %vm90, 1, 0
    %v96 = vsel %vm91, 1, 0
    %v97 = vcvt.s32.f32 %v92
    %v98 = vcvt.s32.f32 %v93
    %v99 = vcvt.s32.f32 %v94
    %v100 = vcvt.s32.f32 %v95
    %v101 = vcvt.s32.f32 %v96
    %v102 = vpack.c.bf16 %v98, %v97
    %v103 = vpack.c.bf16 %v100, %v99
    %v104 = vpack.c.bf16 %v101, %v101
    %v105 = vld [vmem:[%s3] sm:$0xf]
    %v106 = vld [vmem:[%s3 + $0x4] sm:$0xf]
    %v107 = vld [vmem:[%s3 + $0x8] sm:$0xf]
    %v108 = vld [vmem:[%s3 + $0xc] sm:$0xf]
    %v113 = vunpack.c.l.b16 %v105
    %v114 = vunpack.c.l.b16 %v106
    %v115 = vunpack.c.l.b16 %v107
    %v116 = vunpack.c.l.b16 %v108
    %v117 = vpack.c.b16 %v114, %v113
    %v118 = vpack.c.b16 %v116, %v115
    %vm121 = vcmask 261120
    %v123 = vsel %vm121, %v102, 0
    %v126 = vsel %vm121, %v103, 0
    %v129 = vsel %vm121, %v104, 0
    %131 = vmatpush.bf16.msra.mxu0 0
    %132 = vmatpush.bf16.msra.mxu0 0
    %133 = vmatpush.bf16.msra.mxu0 0
    %134 = vmatpush.bf16.msra.mxu0 0
    %135 = vmatpush.bf16.msra.mxu0 0
    %136 = vmatpush.bf16.msra.mxu0 0
    %137 = vmatpush.bf16.msra.mxu0 %v118
    %138 = vmatpush.bf16.msra.mxu0 %v117
    %139 = vmatmul.bf16.gmra.mxu0 %v123
    %v140 = vpop.f32.mrf.mxu0
    %v141 = vadd.f32 0.0, %v140
    %v142 = vpop.f32.mrf.mxu0
    %v143 = vadd.f32 0.0, %v142
    %144 = vmatmul.bf16.gmra.mxu0 %v126
    %v145 = vpop.f32.mrf.mxu0
    %v146 = vadd.f32 0.0, %v145
    %v147 = vpop.f32.mrf.mxu0
    %v148 = vadd.f32 0.0, %v147
    %149 = vmatmul.bf16.gmra.mxu0 %v129
    %v150 = vpop.f32.mrf.mxu0
    %v151 = vadd.f32 0.0, %v150
    %v152 = vpop.f32.mrf.mxu0
    %153 = vdwg.mxu0
    %v154 = vld [vmem:[%s5] sm:$0xf]
    %v155 = vld [vmem:[%s5 + $0x4] sm:$0xf]
    %v156 = vld [vmem:[%s5 + $0x8] sm:$0xf]
    %v157 = vld [vmem:[%s5 + $0xc] sm:$0xf]
    %v158 = vpack.c.bf16 %v143, %v141
    %v159 = vpack.c.bf16 %v148, %v146
    %v160 = vpack.c.bf16 %v151, %v151
    %v161 = vld [vmem:[%s7] sm:$0x1]
    %vm162 = vcmp.lt.s32.totalorder %v65, 64
    %v163 = vsel %vm162, %v66, 0.0
    %v164 = vadd.f32 %v161, %v163
    %v166 = vperm.slane %v164, 0
    %v172 = vunpack.c.l.b16 %v154
    %v173 = vunpack.c.l.b16 %v155
    %v174 = vunpack.c.l.b16 %v156
    %v175 = vunpack.c.l.b16 %v157
    %v176 = vpack.c.b16 %v173, %v172
    %v177 = vpack.c.b16 %v175, %v174
    %v181 = vsel %vm121, %v158, 0
    %v184 = vsel %vm121, %v159, 0
    %v187 = vsel %vm121, %v160, 0
    %189 = vmatpush.bf16.msra.mxu0 0
    %190 = vmatpush.bf16.msra.mxu0 0
    %191 = vmatpush.bf16.msra.mxu0 0
    %192 = vmatpush.bf16.msra.mxu0 0
    %193 = vmatpush.bf16.msra.mxu0 0
    %194 = vmatpush.bf16.msra.mxu0 0
    %195 = vmatpush.bf16.msra.mxu0 %v177
    %196 = vmatpush.bf16.msra.mxu0 %v176
    %197 = vmatmul.bf16.gmra.mxu0 %v181
    %v198 = vpop.f32.mrf.mxu0
    %v199 = vadd.f32 %v166, %v198
    %v200 = vpop.f32.mrf.mxu0
    %v201 = vadd.f32 %v166, %v200
    %202 = vmatmul.bf16.gmra.mxu0 %v184
    %v203 = vpop.f32.mrf.mxu0
    %v204 = vadd.f32 %v166, %v203
    %v205 = vpop.f32.mrf.mxu0
    %v206 = vadd.f32 %v166, %v205
    %207 = vmatmul.bf16.gmra.mxu0 %v187
    %v208 = vpop.f32.mrf.mxu0
    %v209 = vadd.f32 %v166, %v208
    %v210 = vpop.f32.mrf.mxu0
    %211 = vdwg.mxu0
    %v212 = vld [vmem:[%s6] sm:$0xff]
    %v213 = vld [vmem:[%s6 + $0x8] sm:$0xff]
    %v214 = vld [vmem:[%s6 + $0x10] sm:$0xff]
    %v215 = vld [vmem:[%s6 + $0x18] sm:$0xff]
    %v217 = vperm.slane %v66, 0
    %v220 = vsel %vm121, 0.0, 0
    %222 = vmatpush.msra.mxu0 0.0
    %223 = vmatpush.msra.mxu0 0.0
    %224 = vmatpush.msra.mxu0 0.0
    %225 = vmatpush.msra.mxu0 0.0
    %226 = vmatpush.msra.mxu0 0.0
    %227 = vmatpush.msra.mxu0 0.0
    %228 = vmatpush.msra.mxu0 0.0
    %229 = vmatpush.msra.mxu0 0.0
    %230 = vmatpush.msra.mxu0 0.0
    %231 = vmatpush.msra.mxu0 0.0
    %232 = vmatpush.msra.mxu0 0.0
    %233 = vmatpush.msra.mxu0 0.0
    %234 = vmatpush.msra.mxu0 %v215
    %235 = vmatpush.msra.mxu0 %v214
    %236 = vmatpush.msra.mxu0 %v213
    %237 = vmatpush.msra.mxu0 %v212
    %238 = vmatmul.f32.gmra.mxu0 %v220
    %v239 = vpop.f32.mrf.mxu0
    %v240 = vadd.f32 0.0, %v239
    %241 = vdwg.mxu0
    %v242 = vadd.f32 %v199, %v240
    %v243 = vxor.u32 %v242, 2147483648
    %v244 = vmul.f32 %v243, 1.442695
    %v245 = vpow.pop %v244
    %v246 = vadd.f32 %v245, 1.0
    %v247 = vrcp.pop %v246
    %v248 = vmul.f32 %v246, %v247
    %v249 = vsub.f32 1.0, %v248
    %v250 = vmul.f32 %v247, %v249
    %v251 = vadd.f32 %v247, %v250
    %vm252 = vweird.f32 %v246
    %vm253 = vweird.f32 %v247
    %vm254 = vmor %vm252, %vm253
    %v255 = vsel %vm254, %v247, %v251
    %v256 = vand.u32 2147483647, %v246
    %vm257 = vcmp.eq.f32.partialorder %v256, 8.507059e+37
    %v258 = vand.u32 %v246, 2147483648
    %v259 = vor.u32 1.1754944e-38, %v258
    %v260 = vsel %vm257, %v259, %v255
    %v261 = vmul.f32 1.0, %v260
    %v262 = vadd.f32 %v240, %v217
    %264 = vrot.lane.b32.xlu0 %v262, 64
    %v265 = vpop.permute.xlu0 %264
    %v267 = vmul.f32 %v261, %v265
    %269 = vrot.lane.b32.xlu0 %v267, 64
    %v270 = vpop.permute.xlu0 %269
    %v272 = vadd.f32 %v199, %v270
    %v273 = vtanh.pop %v272
    %v274 = vsub.f32 0.0, %v273
    %276 = vrot.lane.b32.xlu0 %v274, 96
    %v277 = vpop.permute.xlu0 %276
    %v279 = vmul.f32 %v261, %v277
    %281 = vrot.lane.b32.xlu0 %v279, 32
    %v282 = vpop.permute.xlu0 %281
    %v284 = vadd.f32 %v273, %v282
    %286 = vrot.lane.b32.xlu0 %v284, 64
    %v287 = vpop.permute.xlu0 %286
    %v288 = vsel %vm121, %v287, 0
    %290 = vmatpush.msra.mxu0 0.0
    %291 = vmatpush.msra.mxu0 0.0
    %292 = vmatpush.msra.mxu0 0.0
    %293 = vmatpush.msra.mxu0 0.0
    %294 = vmatpush.msra.mxu0 0.0
    %295 = vmatpush.msra.mxu0 0.0
    %296 = vmatpush.msra.mxu0 0.0
    %297 = vmatpush.msra.mxu0 0.0
    %298 = vmatpush.msra.mxu0 0.0
    %299 = vmatpush.msra.mxu0 0.0
    %300 = vmatpush.msra.mxu0 0.0
    %301 = vmatpush.msra.mxu0 0.0
    %302 = vmatpush.msra.mxu0 %v215
    %303 = vmatpush.msra.mxu0 %v214
    %304 = vmatpush.msra.mxu0 %v213
    %305 = vmatpush.msra.mxu0 %v212
    %306 = vmatmul.f32.gmra.mxu0 %v288
    %v307 = vpop.f32.mrf.mxu0
    %v308 = vadd.f32 0.0, %v307
    %309 = vdwg.mxu0
    %v310 = vadd.f32 %v201, %v308
    %v311 = vxor.u32 %v310, 2147483648
    %v312 = vmul.f32 %v311, 1.442695
    %v313 = vpow.pop %v312
    %v314 = vadd.f32 %v313, 1.0
    %v315 = vrcp.pop %v314
    %v316 = vmul.f32 %v314, %v315
    %v317 = vsub.f32 1.0, %v316
    %v318 = vmul.f32 %v315, %v317
    %v319 = vadd.f32 %v315, %v318
    %vm320 = vweird.f32 %v314
    %vm321 = vweird.f32 %v315
    %vm322 = vmor %vm320, %vm321
    %v323 = vsel %vm322, %v315, %v319
    %v324 = vand.u32 2147483647, %v314
    %vm325 = vcmp.eq.f32.partialorder %v324, 8.507059e+37
    %v326 = vand.u32 %v314, 2147483648
    %v327 = vor.u32 1.1754944e-38, %v326
    %v328 = vsel %vm325, %v327, %v323
    %v329 = vmul.f32 1.0, %v328
    %v330 = vadd.f32 %v308, %v217
    %332 = vrot.lane.b32.xlu0 %v330, 64
    %v333 = vpop.permute.xlu0 %332
    %v335 = vmul.f32 %v329, %v333
    %337 = vrot.lane.b32.xlu0 %v335, 64
    %v338 = vpop.permute.xlu0 %337
    %v340 = vadd.f32 %v201, %v338
    %v341 = vtanh.pop %v340
    %v342 = vsub.f32 %v284, %v341
    %344 = vrot.lane.b32.xlu0 %v342, 96
    %v345 = vpop.permute.xlu0 %344
    %v347 = vmul.f32 %v329, %v345
    %349 = vrot.lane.b32.xlu0 %v347, 32
    %v350 = vpop.permute.xlu0 %349
    %v352 = vadd.f32 %v341, %v350
    %354 = vrot.lane.b32.xlu0 %v352, 64
    %v355 = vpop.permute.xlu0 %354
    %v356 = vsel %vm121, %v355, 0
    %358 = vmatpush.msra.mxu0 0.0
    %359 = vmatpush.msra.mxu0 0.0
    %360 = vmatpush.msra.mxu0 0.0
    %361 = vmatpush.msra.mxu0 0.0
    %362 = vmatpush.msra.mxu0 0.0
    %363 = vmatpush.msra.mxu0 0.0
    %364 = vmatpush.msra.mxu0 0.0
    %365 = vmatpush.msra.mxu0 0.0
    %366 = vmatpush.msra.mxu0 0.0
    %367 = vmatpush.msra.mxu0 0.0
    %368 = vmatpush.msra.mxu0 0.0
    %369 = vmatpush.msra.mxu0 0.0
    %370 = vmatpush.msra.mxu0 %v215
    %371 = vmatpush.msra.mxu0 %v214
    %372 = vmatpush.msra.mxu0 %v213
    %373 = vmatpush.msra.mxu0 %v212
    %374 = vmatmul.f32.gmra.mxu0 %v356
    %v375 = vpop.f32.mrf.mxu0
    %v376 = vadd.f32 0.0, %v375
    %377 = vdwg.mxu0
    %v378 = vadd.f32 %v204, %v376
    %v379 = vxor.u32 %v378, 2147483648
    %v380 = vmul.f32 %v379, 1.442695
    %v381 = vpow.pop %v380
    %v382 = vadd.f32 %v381, 1.0
    %v383 = vrcp.pop %v382
    %v384 = vmul.f32 %v382, %v383
    %v385 = vsub.f32 1.0, %v384
    %v386 = vmul.f32 %v383, %v385
    %v387 = vadd.f32 %v383, %v386
    %vm388 = vweird.f32 %v382
    %vm389 = vweird.f32 %v383
    %vm390 = vmor %vm388, %vm389
    %v391 = vsel %vm390, %v383, %v387
    %v392 = vand.u32 2147483647, %v382
    %vm393 = vcmp.eq.f32.partialorder %v392, 8.507059e+37
    %v394 = vand.u32 %v382, 2147483648
    %v395 = vor.u32 1.1754944e-38, %v394
    %v396 = vsel %vm393, %v395, %v391
    %v397 = vmul.f32 1.0, %v396
    %v398 = vadd.f32 %v376, %v217
    %400 = vrot.lane.b32.xlu0 %v398, 64
    %v401 = vpop.permute.xlu0 %400
    %v403 = vmul.f32 %v397, %v401
    %405 = vrot.lane.b32.xlu0 %v403, 64
    %v406 = vpop.permute.xlu0 %405
    %v408 = vadd.f32 %v204, %v406
    %v409 = vtanh.pop %v408
    %v410 = vsub.f32 %v352, %v409
    %412 = vrot.lane.b32.xlu0 %v410, 96
    %v413 = vpop.permute.xlu0 %412
    %v415 = vmul.f32 %v397, %v413
    %417 = vrot.lane.b32.xlu0 %v415, 32
    %v418 = vpop.permute.xlu0 %417
    %v420 = vadd.f32 %v409, %v418
    %422 = vrot.lane.b32.xlu0 %v420, 64
    %v423 = vpop.permute.xlu0 %422
    %v424 = vsel %vm121, %v423, 0
    %426 = vmatpush.msra.mxu0 0.0
    %427 = vmatpush.msra.mxu0 0.0
    %428 = vmatpush.msra.mxu0 0.0
    %429 = vmatpush.msra.mxu0 0.0
    %430 = vmatpush.msra.mxu0 0.0
    %431 = vmatpush.msra.mxu0 0.0
    %432 = vmatpush.msra.mxu0 0.0
    %433 = vmatpush.msra.mxu0 0.0
    %434 = vmatpush.msra.mxu0 0.0
    %435 = vmatpush.msra.mxu0 0.0
    %436 = vmatpush.msra.mxu0 0.0
    %437 = vmatpush.msra.mxu0 0.0
    %438 = vmatpush.msra.mxu0 %v215
    %439 = vmatpush.msra.mxu0 %v214
    %440 = vmatpush.msra.mxu0 %v213
    %441 = vmatpush.msra.mxu0 %v212
    %442 = vmatmul.f32.gmra.mxu0 %v424
    %v443 = vpop.f32.mrf.mxu0
    %v444 = vadd.f32 0.0, %v443
    %445 = vdwg.mxu0
    %v446 = vadd.f32 %v206, %v444
    %v447 = vxor.u32 %v446, 2147483648
    %v448 = vmul.f32 %v447, 1.442695
    %v449 = vpow.pop %v448
    %v450 = vadd.f32 %v449, 1.0
    %v451 = vrcp.pop %v450
    %v452 = vmul.f32 %v450, %v451
    %v453 = vsub.f32 1.0, %v452
    %v454 = vmul.f32 %v451, %v453
    %v455 = vadd.f32 %v451, %v454
    %vm456 = vweird.f32 %v450
    %vm457 = vweird.f32 %v451
    %vm458 = vmor %vm456, %vm457
    %v459 = vsel %vm458, %v451, %v455
    %v460 = vand.u32 2147483647, %v450
    %vm461 = vcmp.eq.f32.partialorder %v460, 8.507059e+37
    %v462 = vand.u32 %v450, 2147483648
    %v463 = vor.u32 1.1754944e-38, %v462
    %v464 = vsel %vm461, %v463, %v459
    %v465 = vmul.f32 1.0, %v464
    %v466 = vadd.f32 %v444, %v217
    %468 = vrot.lane.b32.xlu0 %v466, 64
    %v469 = vpop.permute.xlu0 %468
    %v471 = vmul.f32 %v465, %v469
    %473 = vrot.lane.b32.xlu0 %v471, 64
    %v474 = vpop.permute.xlu0 %473
    %v476 = vadd.f32 %v206, %v474
    %v477 = vtanh.pop %v476
    %v478 = vsub.f32 %v420, %v477
    %480 = vrot.lane.b32.xlu0 %v478, 96
    %v481 = vpop.permute.xlu0 %480
    %v483 = vmul.f32 %v465, %v481
    %485 = vrot.lane.b32.xlu0 %v483, 32
    %v486 = vpop.permute.xlu0 %485
    %v488 = vadd.f32 %v477, %v486
    %490 = vrot.lane.b32.xlu0 %v488, 64
    %v491 = vpop.permute.xlu0 %490
    %v492 = vsel %vm121, %v491, 0
    %494 = vmatpush.msra.mxu0 0.0
    %495 = vmatpush.msra.mxu0 0.0
    %496 = vmatpush.msra.mxu0 0.0
    %497 = vmatpush.msra.mxu0 0.0
    %498 = vmatpush.msra.mxu0 0.0
    %499 = vmatpush.msra.mxu0 0.0
    %500 = vmatpush.msra.mxu0 0.0
    %501 = vmatpush.msra.mxu0 0.0
    %502 = vmatpush.msra.mxu0 0.0
    %503 = vmatpush.msra.mxu0 0.0
    %504 = vmatpush.msra.mxu0 0.0
    %505 = vmatpush.msra.mxu0 0.0
    %506 = vmatpush.msra.mxu0 %v215
    %507 = vmatpush.msra.mxu0 %v214
    %508 = vmatpush.msra.mxu0 %v213
    %509 = vmatpush.msra.mxu0 %v212
    %510 = vmatmul.f32.gmra.mxu0 %v492
    %v511 = vpop.f32.mrf.mxu0
    %v512 = vadd.f32 0.0, %v511
    %513 = vdwg.mxu0
    %v514 = vadd.f32 %v209, %v512
    %v515 = vxor.u32 %v514, 2147483648
    %v516 = vmul.f32 %v515, 1.442695
    %v517 = vpow.pop %v516
    %v518 = vadd.f32 %v517, 1.0
    %v519 = vrcp.pop %v518
    %v520 = vmul.f32 %v518, %v519
    %v521 = vsub.f32 1.0, %v520
    %v522 = vmul.f32 %v519, %v521
    %v523 = vadd.f32 %v519, %v522
    %vm524 = vweird.f32 %v518
    %vm525 = vweird.f32 %v519
    %vm526 = vmor %vm524, %vm525
    %v527 = vsel %vm526, %v519, %v523
    %v528 = vand.u32 2147483647, %v518
    %vm529 = vcmp.eq.f32.partialorder %v528, 8.507059e+37
    %v530 = vand.u32 %v518, 2147483648
    %v531 = vor.u32 1.1754944e-38, %v530
    %v532 = vsel %vm529, %v531, %v527
    %v533 = vmul.f32 1.0, %v532
    %v534 = vadd.f32 %v512, %v217
    %536 = vrot.lane.b32.xlu0 %v534, 64
    %v537 = vpop.permute.xlu0 %536
    %v539 = vmul.f32 %v533, %v537
    %541 = vrot.lane.b32.xlu0 %v539, 64
    %v542 = vpop.permute.xlu0 %541
    %v544 = vadd.f32 %v209, %v542
    %v545 = vtanh.pop %v544
    %v546 = vsub.f32 %v488, %v545
    %548 = vrot.lane.b32.xlu0 %v546, 96
    %v549 = vpop.permute.xlu0 %548
    %v551 = vmul.f32 %v533, %v549
    %553 = vrot.lane.b32.xlu0 %v551, 32
    %v554 = vpop.permute.xlu0 %553
    %v556 = vadd.f32 %v545, %v554
    %v557 = vld [vmem:[%s9] sm:$0xf]
    %v558 = vld [vmem:[%s9 + $0x4] sm:$0xf]
    %v559 = vld [vmem:[%s9 + $0x8] sm:$0xf]
    %v560 = vld [vmem:[%s9 + $0xc] sm:$0xf]
    %v561 = vld [vmem:[%s12] sm:$0x1]
    %v562 = vld [vmem:[%s1] sm:$0xff]
    %v563 = vld [vmem:[%s1 + $0x8] sm:$0xff]
    %v564 = vld [vmem:[%s1 + $0x10] sm:$0xff]
    %v565 = vld [vmem:[%s1 + $0x18] sm:$0xff]
    %v566 = vld [vmem:[%s1 + $0x20] sm:$0xff]
    %v567 = vld [vmem:[%s1 + $0x28] sm:$0xff]
    %v568 = vld [vmem:[%s1 + $0x30] sm:$0xff]
    %v569 = vld [vmem:[%s1 + $0x38] sm:$0xff]
    %v570 = vld [vmem:[%s1 + $0x40] sm:$0xff]
    %v571 = vld [vmem:[%s1 + $0x48] sm:$0xff]
    %v572 = vld [vmem:[%s1 + $0x50] sm:$0xff]
    %v573 = vld [vmem:[%s1 + $0x58] sm:$0xff]
    %v574 = vld [vmem:[%s1 + $0x60] sm:$0xff]
    %v575 = vld [vmem:[%s1 + $0x68] sm:$0xff]
    %v576 = vld [vmem:[%s1 + $0x70] sm:$0xff]
    %v577 = vld [vmem:[%s1 + $0x78] sm:$0xff]
    %v578 = vld [vmem:[%s1 + $0x80] sm:$0xff]
    %v579 = vld [vmem:[%s1 + $0x88] sm:$0xff]
    %v580 = vld [vmem:[%s1 + $0x90] sm:$0xff]
    %v581 = vld [vmem:[%s1 + $0x98] sm:$0xff]
    %v582 = vld [vmem:[%s1 + $0xa0] sm:$0xff]
    %v583 = vld [vmem:[%s1 + $0xa8] sm:$0xff]
    %v584 = vld [vmem:[%s1 + $0xb0] sm:$0xff]
    %v585 = vld [vmem:[%s1 + $0xb8] sm:$0xff]
    %586 = vset.pattern.permute.xlu0 0
    %587 = vperm.xlu0 %586, %v562
    %v588 = vpop.permute.xlu0 %587
    %589 = vset.pattern.permute.xlu0 0
    %590 = vperm.xlu0 %589, %v563
    %v591 = vpop.permute.xlu0 %590
    %592 = vset.pattern.permute.xlu0 0
    %593 = vperm.xlu0 %592, %v564
    %v594 = vpop.permute.xlu0 %593
    %595 = vset.pattern.permute.xlu0 0
    %596 = vperm.xlu0 %595, %v565
    %v597 = vpop.permute.xlu0 %596
    %598 = vset.pattern.permute.xlu0 0
    %599 = vperm.xlu0 %598, %v566
    %v600 = vpop.permute.xlu0 %599
    %601 = vset.pattern.permute.xlu0 0
    %602 = vperm.xlu0 %601, %v567
    %v603 = vpop.permute.xlu0 %602
    %604 = vset.pattern.permute.xlu0 0
    %605 = vperm.xlu0 %604, %v568
    %v606 = vpop.permute.xlu0 %605
    %607 = vset.pattern.permute.xlu0 0
    %608 = vperm.xlu0 %607, %v569
    %v609 = vpop.permute.xlu0 %608
    %610 = vset.pattern.permute.xlu0 0
    %611 = vperm.xlu0 %610, %v570
    %v612 = vpop.permute.xlu0 %611
    %613 = vset.pattern.permute.xlu0 0
    %614 = vperm.xlu0 %613, %v571
    %v615 = vpop.permute.xlu0 %614
    %616 = vset.pattern.permute.xlu0 0
    %617 = vperm.xlu0 %616, %v572
    %v618 = vpop.permute.xlu0 %617
    %619 = vset.pattern.permute.xlu0 0
    %620 = vperm.xlu0 %619, %v573
    %v621 = vpop.permute.xlu0 %620
    %622 = vset.pattern.permute.xlu0 0
    %623 = vperm.xlu0 %622, %v574
    %v624 = vpop.permute.xlu0 %623
    %625 = vset.pattern.permute.xlu0 0
    %626 = vperm.xlu0 %625, %v575
    %v627 = vpop.permute.xlu0 %626
    %628 = vset.pattern.permute.xlu0 0
    %629 = vperm.xlu0 %628, %v576
    %v630 = vpop.permute.xlu0 %629
    %631 = vset.pattern.permute.xlu0 0
    %632 = vperm.xlu0 %631, %v577
    %v633 = vpop.permute.xlu0 %632
    %634 = vset.pattern.permute.xlu0 0
    %635 = vperm.xlu0 %634, %v578
    %v636 = vpop.permute.xlu0 %635
    %637 = vset.pattern.permute.xlu0 0
    %638 = vperm.xlu0 %637, %v579
    %v639 = vpop.permute.xlu0 %638
    %640 = vset.pattern.permute.xlu0 0
    %641 = vperm.xlu0 %640, %v580
    %v642 = vpop.permute.xlu0 %641
    %643 = vset.pattern.permute.xlu0 0
    %644 = vperm.xlu0 %643, %v581
    %v645 = vpop.permute.xlu0 %644
    %646 = vset.pattern.permute.xlu0 0
    %647 = vperm.xlu0 %646, %v582
    %v648 = vpop.permute.xlu0 %647
    %649 = vset.pattern.permute.xlu0 0
    %650 = vperm.xlu0 %649, %v583
    %v651 = vpop.permute.xlu0 %650
    %652 = vset.pattern.permute.xlu0 0
    %653 = vperm.xlu0 %652, %v584
    %v654 = vpop.permute.xlu0 %653
    %655 = vset.pattern.permute.xlu0 0
    %656 = vperm.xlu0 %655, %v585
    %v657 = vpop.permute.xlu0 %656
    %vm658 = vcmp.eq.s32.totalorder %v65, %v588
    %vm659 = vcmp.eq.s32.totalorder %v65, %v591
    %vm660 = vcmp.eq.s32.totalorder %v65, %v594
    %vm661 = vcmp.eq.s32.totalorder %v65, %v597
    %vm662 = vcmp.eq.s32.totalorder %v65, %v600
    %vm663 = vcmp.eq.s32.totalorder %v65, %v603
    %vm664 = vcmp.eq.s32.totalorder %v65, %v606
    %vm665 = vcmp.eq.s32.totalorder %v65, %v609
    %vm666 = vcmp.eq.s32.totalorder %v65, %v612
    %vm667 = vcmp.eq.s32.totalorder %v65, %v615
    %vm668 = vcmp.eq.s32.totalorder %v65, %v618
    %vm669 = vcmp.eq.s32.totalorder %v65, %v621
    %vm670 = vcmp.eq.s32.totalorder %v65, %v624
    %vm671 = vcmp.eq.s32.totalorder %v65, %v627
    %vm672 = vcmp.eq.s32.totalorder %v65, %v630
    %vm673 = vcmp.eq.s32.totalorder %v65, %v633
    %vm674 = vcmp.eq.s32.totalorder %v65, %v636
    %vm675 = vcmp.eq.s32.totalorder %v65, %v639
    %vm676 = vcmp.eq.s32.totalorder %v65, %v642
    %vm677 = vcmp.eq.s32.totalorder %v65, %v645
    %vm678 = vcmp.eq.s32.totalorder %v65, %v648
    %vm679 = vcmp.eq.s32.totalorder %v65, %v651
    %vm680 = vcmp.eq.s32.totalorder %v65, %v654
    %vm681 = vcmp.eq.s32.totalorder %v65, %v657
    %v682 = vsel %vm658, 1, 0
    %v683 = vsel %vm659, 1, 0
    %v684 = vsel %vm660, 1, 0
    %v685 = vsel %vm661, 1, 0
    %v686 = vsel %vm662, 1, 0
    %v687 = vsel %vm663, 1, 0
    %v688 = vsel %vm664, 1, 0
    %v689 = vsel %vm665, 1, 0
    %v690 = vsel %vm666, 1, 0
    %v691 = vsel %vm667, 1, 0
    %v692 = vsel %vm668, 1, 0
    %v693 = vsel %vm669, 1, 0
    %v694 = vsel %vm670, 1, 0
    %v695 = vsel %vm671, 1, 0
    %v696 = vsel %vm672, 1, 0
    %v697 = vsel %vm673, 1, 0
    %v698 = vsel %vm674, 1, 0
    %v699 = vsel %vm675, 1, 0
    %v700 = vsel %vm676, 1, 0
    %v701 = vsel %vm677, 1, 0
    %v702 = vsel %vm678, 1, 0
    %v703 = vsel %vm679, 1, 0
    %v704 = vsel %vm680, 1, 0
    %v705 = vsel %vm681, 1, 0
    %v706 = vcvt.s32.f32 %v682
    %v707 = vcvt.s32.f32 %v683
    %v708 = vcvt.s32.f32 %v684
    %v709 = vcvt.s32.f32 %v685
    %v710 = vcvt.s32.f32 %v686
    %v711 = vcvt.s32.f32 %v687
    %v712 = vcvt.s32.f32 %v688
    %v713 = vcvt.s32.f32 %v689
    %v714 = vcvt.s32.f32 %v690
    %v715 = vcvt.s32.f32 %v691
    %v716 = vcvt.s32.f32 %v692
    %v717 = vcvt.s32.f32 %v693
    %v718 = vcvt.s32.f32 %v694
    %v719 = vcvt.s32.f32 %v695
    %v720 = vcvt.s32.f32 %v696
    %v721 = vcvt.s32.f32 %v697
    %v722 = vcvt.s32.f32 %v698
    %v723 = vcvt.s32.f32 %v699
    %v724 = vcvt.s32.f32 %v700
    %v725 = vcvt.s32.f32 %v701
    %v726 = vcvt.s32.f32 %v702
    %v727 = vcvt.s32.f32 %v703
    %v728 = vcvt.s32.f32 %v704
    %v729 = vcvt.s32.f32 %v705
    %v730 = vpack.c.bf16 %v707, %v706
    %v731 = vpack.c.bf16 %v709, %v708
    %v732 = vpack.c.bf16 %v711, %v710
    %v733 = vpack.c.bf16 %v713, %v712
    %v734 = vpack.c.bf16 %v715, %v714
    %v735 = vpack.c.bf16 %v717, %v716
    %v736 = vpack.c.bf16 %v719, %v718
    %v737 = vpack.c.bf16 %v721, %v720
    %v738 = vpack.c.bf16 %v723, %v722
    %v739 = vpack.c.bf16 %v725, %v724
    %v740 = vpack.c.bf16 %v727, %v726
    %v741 = vpack.c.bf16 %v729, %v728
    %v742 = vld [vmem:[%s4] sm:$0xf]
    %v743 = vld [vmem:[%s4 + $0x4] sm:$0xf]
    %v744 = vld [vmem:[%s4 + $0x8] sm:$0xf]
    %v745 = vld [vmem:[%s4 + $0xc] sm:$0xf]
    %v750 = vunpack.c.l.b16 %v742
    %v751 = vunpack.c.l.b16 %v743
    %v752 = vunpack.c.l.b16 %v744
    %v753 = vunpack.c.l.b16 %v745
    %v754 = vpack.c.b16 %v751, %v750
    %v755 = vpack.c.b16 %v753, %v752
    %v759 = vsel %vm121, %v730, 0
    %v762 = vsel %vm121, %v731, 0
    %v765 = vsel %vm121, %v732, 0
    %v768 = vsel %vm121, %v733, 0
    %v771 = vsel %vm121, %v734, 0
    %v774 = vsel %vm121, %v735, 0
    %v777 = vsel %vm121, %v736, 0
    %v780 = vsel %vm121, %v737, 0
    %v783 = vsel %vm121, %v738, 0
    %v786 = vsel %vm121, %v739, 0
    %v789 = vsel %vm121, %v740, 0
    %v792 = vsel %vm121, %v741, 0
    %794 = vmatpush.bf16.msra.mxu0 0
    %795 = vmatpush.bf16.msra.mxu0 0
    %796 = vmatpush.bf16.msra.mxu0 0
    %797 = vmatpush.bf16.msra.mxu0 0
    %798 = vmatpush.bf16.msra.mxu0 0
    %799 = vmatpush.bf16.msra.mxu0 0
    %800 = vmatpush.bf16.msra.mxu0 %v755
    %801 = vmatpush.bf16.msra.mxu0 %v754
    %802 = vmatmul.bf16.gmra.mxu0 %v759
    %v803 = vpop.f32.mrf.mxu0
    %v804 = vadd.f32 0.0, %v803
    %v805 = vpop.f32.mrf.mxu0
    %v806 = vadd.f32 0.0, %v805
    %807 = vmatmul.bf16.gmra.mxu0 %v762
    %v808 = vpop.f32.mrf.mxu0
    %v809 = vadd.f32 0.0, %v808
    %v810 = vpop.f32.mrf.mxu0
    %v811 = vadd.f32 0.0, %v810
    %812 = vmatmul.bf16.gmra.mxu0 %v765
    %v813 = vpop.f32.mrf.mxu0
    %v814 = vadd.f32 0.0, %v813
    %v815 = vpop.f32.mrf.mxu0
    %v816 = vadd.f32 0.0, %v815
    %817 = vmatmul.bf16.gmra.mxu0 %v768
    %v818 = vpop.f32.mrf.mxu0
    %v819 = vadd.f32 0.0, %v818
    %v820 = vpop.f32.mrf.mxu0
    %v821 = vadd.f32 0.0, %v820
    %822 = vmatmul.bf16.gmra.mxu0 %v771
    %v823 = vpop.f32.mrf.mxu0
    %v824 = vadd.f32 0.0, %v823
    %v825 = vpop.f32.mrf.mxu0
    %v826 = vadd.f32 0.0, %v825
    %827 = vmatmul.bf16.gmra.mxu0 %v774
    %v828 = vpop.f32.mrf.mxu0
    %v829 = vadd.f32 0.0, %v828
    %v830 = vpop.f32.mrf.mxu0
    %v831 = vadd.f32 0.0, %v830
    %832 = vmatmul.bf16.gmra.mxu0 %v777
    %v833 = vpop.f32.mrf.mxu0
    %v834 = vadd.f32 0.0, %v833
    %v835 = vpop.f32.mrf.mxu0
    %v836 = vadd.f32 0.0, %v835
    %837 = vmatmul.bf16.gmra.mxu0 %v780
    %v838 = vpop.f32.mrf.mxu0
    %v839 = vadd.f32 0.0, %v838
    %v840 = vpop.f32.mrf.mxu0
    %v841 = vadd.f32 0.0, %v840
    %842 = vmatmul.bf16.gmra.mxu0 %v783
    %v843 = vpop.f32.mrf.mxu0
    %v844 = vadd.f32 0.0, %v843
    %v845 = vpop.f32.mrf.mxu0
    %v846 = vadd.f32 0.0, %v845
    %847 = vmatmul.bf16.gmra.mxu0 %v786
    %v848 = vpop.f32.mrf.mxu0
    %v849 = vadd.f32 0.0, %v848
    %v850 = vpop.f32.mrf.mxu0
    %v851 = vadd.f32 0.0, %v850
    %852 = vmatmul.bf16.gmra.mxu0 %v789
    %v853 = vpop.f32.mrf.mxu0
    %v854 = vadd.f32 0.0, %v853
    %v855 = vpop.f32.mrf.mxu0
    %v856 = vadd.f32 0.0, %v855
    %857 = vmatmul.bf16.gmra.mxu0 %v792
    %v858 = vpop.f32.mrf.mxu0
    %v859 = vadd.f32 0.0, %v858
    %v860 = vpop.f32.mrf.mxu0
    %v861 = vadd.f32 0.0, %v860
    %862 = vdwg.mxu0
    %v863 = vpack.c.bf16 %v556, %v556
    %v864 = vld [vmem:[%s11] sm:$0x1]
    %v865 = vsel %vm162, %v561, 0.0
    %v866 = vadd.f32 %v864, %v865
    %v868 = vperm.slane %v866, 0
    %871 = vrot.lane.b32.xlu0 %v863, 64
    %v872 = vpop.permute.xlu0 %871
    %v877 = vunpack.c.l.b16 %v557
    %v878 = vunpack.c.l.b16 %v558
    %v879 = vunpack.c.l.b16 %v559
    %v880 = vunpack.c.l.b16 %v560
    %v881 = vpack.c.b16 %v878, %v877
    %v882 = vpack.c.b16 %v880, %v879
    %v886 = vsel %vm121, %v872, 0
    %888 = vmatpush.bf16.msra.mxu0 0
    %889 = vmatpush.bf16.msra.mxu0 0
    %890 = vmatpush.bf16.msra.mxu0 0
    %891 = vmatpush.bf16.msra.mxu0 0
    %892 = vmatpush.bf16.msra.mxu0 0
    %893 = vmatpush.bf16.msra.mxu0 0
    %894 = vmatpush.bf16.msra.mxu0 %v882
    %895 = vmatpush.bf16.msra.mxu0 %v881
    %896 = vmatmul.bf16.gmra.mxu0 %v886
    %v897 = vpop.f32.mrf.mxu0
    %v898 = vadd.f32 %v868, %v897
    %v899 = vpop.f32.mrf.mxu0
    %900 = vdwg.mxu0
    %v901 = vpack.c.bf16 %v806, %v804
    %v902 = vpack.c.bf16 %v811, %v809
    %v903 = vpack.c.bf16 %v816, %v814
    %v904 = vpack.c.bf16 %v821, %v819
    %v905 = vpack.c.bf16 %v826, %v824
    %v906 = vpack.c.bf16 %v831, %v829
    %v907 = vpack.c.bf16 %v836, %v834
    %v908 = vpack.c.bf16 %v841, %v839
    %v909 = vpack.c.bf16 %v846, %v844
    %v910 = vpack.c.bf16 %v851, %v849
    %v911 = vpack.c.bf16 %v856, %v854
    %v912 = vpack.c.bf16 %v861, %v859
    %v914 = vsel %vm121, %v901, 0
    %v917 = vsel %vm121, %v902, 0
    %v920 = vsel %vm121, %v903, 0
    %v923 = vsel %vm121, %v904, 0
    %v926 = vsel %vm121, %v905, 0
    %v929 = vsel %vm121, %v906, 0
    %v932 = vsel %vm121, %v907, 0
    %v935 = vsel %vm121, %v908, 0
    %v938 = vsel %vm121, %v909, 0
    %v941 = vsel %vm121, %v910, 0
    %v944 = vsel %vm121, %v911, 0
    %v947 = vsel %vm121, %v912, 0
    %949 = vmatpush.bf16.msra.mxu0 0
    %950 = vmatpush.bf16.msra.mxu0 0
    %951 = vmatpush.bf16.msra.mxu0 0
    %952 = vmatpush.bf16.msra.mxu0 0
    %953 = vmatpush.bf16.msra.mxu0 0
    %954 = vmatpush.bf16.msra.mxu0 0
    %955 = vmatpush.bf16.msra.mxu0 %v882
    %956 = vmatpush.bf16.msra.mxu0 %v881
    %957 = vmatmul.bf16.gmra.mxu0 %v914
    %v958 = vpop.f32.mrf.mxu0
    %v959 = vadd.f32 %v898, %v958
    %v960 = vpop.f32.mrf.mxu0
    %v961 = vadd.f32 %v898, %v960
    %962 = vmatmul.bf16.gmra.mxu0 %v917
    %v963 = vpop.f32.mrf.mxu0
    %v964 = vadd.f32 %v898, %v963
    %v965 = vpop.f32.mrf.mxu0
    %v966 = vadd.f32 %v898, %v965
    %967 = vmatmul.bf16.gmra.mxu0 %v920
    %v968 = vpop.f32.mrf.mxu0
    %v969 = vadd.f32 %v898, %v968
    %v970 = vpop.f32.mrf.mxu0
    %v971 = vadd.f32 %v898, %v970
    %972 = vmatmul.bf16.gmra.mxu0 %v923
    %v973 = vpop.f32.mrf.mxu0
    %v974 = vadd.f32 %v898, %v973
    %v975 = vpop.f32.mrf.mxu0
    %v976 = vadd.f32 %v898, %v975
    %977 = vmatmul.bf16.gmra.mxu0 %v926
    %v978 = vpop.f32.mrf.mxu0
    %v979 = vadd.f32 %v898, %v978
    %v980 = vpop.f32.mrf.mxu0
    %v981 = vadd.f32 %v898, %v980
    %982 = vmatmul.bf16.gmra.mxu0 %v929
    %v983 = vpop.f32.mrf.mxu0
    %v984 = vadd.f32 %v898, %v983
    %v985 = vpop.f32.mrf.mxu0
    %v986 = vadd.f32 %v898, %v985
    %987 = vmatmul.bf16.gmra.mxu0 %v932
    %v988 = vpop.f32.mrf.mxu0
    %v989 = vadd.f32 %v898, %v988
    %v990 = vpop.f32.mrf.mxu0
    %v991 = vadd.f32 %v898, %v990
    %992 = vmatmul.bf16.gmra.mxu0 %v935
    %v993 = vpop.f32.mrf.mxu0
    %v994 = vadd.f32 %v898, %v993
    %v995 = vpop.f32.mrf.mxu0
    %v996 = vadd.f32 %v898, %v995
    %997 = vmatmul.bf16.gmra.mxu0 %v938
    %v998 = vpop.f32.mrf.mxu0
    %v999 = vadd.f32 %v898, %v998
    %v1000 = vpop.f32.mrf.mxu0
    %v1001 = vadd.f32 %v898, %v1000
    %1002 = vmatmul.bf16.gmra.mxu0 %v941
    %v1003 = vpop.f32.mrf.mxu0
    %v1004 = vadd.f32 %v898, %v1003
    %v1005 = vpop.f32.mrf.mxu0
    %v1006 = vadd.f32 %v898, %v1005
    %1007 = vmatmul.bf16.gmra.mxu0 %v944
    %v1008 = vpop.f32.mrf.mxu0
    %v1009 = vadd.f32 %v898, %v1008
    %v1010 = vpop.f32.mrf.mxu0
    %v1011 = vadd.f32 %v898, %v1010
    %1012 = vmatmul.bf16.gmra.mxu0 %v947
    %v1013 = vpop.f32.mrf.mxu0
    %v1014 = vadd.f32 %v898, %v1013
    %v1015 = vpop.f32.mrf.mxu0
    %v1016 = vadd.f32 %v898, %v1015
    %1017 = vdwg.mxu0
    %v1018 = vld [vmem:[%s10] sm:$0xff]
    %v1019 = vld [vmem:[%s10 + $0x8] sm:$0xff]
    %v1020 = vld [vmem:[%s10 + $0x10] sm:$0xff]
    %v1021 = vld [vmem:[%s10 + $0x18] sm:$0xff]
    %v1023 = vperm.slane %v561, 0
    %1025 = vmatpush.msra.mxu0 0.0
    %1026 = vmatpush.msra.mxu0 0.0
    %1027 = vmatpush.msra.mxu0 0.0
    %1028 = vmatpush.msra.mxu0 0.0
    %1029 = vmatpush.msra.mxu0 0.0
    %1030 = vmatpush.msra.mxu0 0.0
    %1031 = vmatpush.msra.mxu0 0.0
    %1032 = vmatpush.msra.mxu0 0.0
    %1033 = vmatpush.msra.mxu0 0.0
    %1034 = vmatpush.msra.mxu0 0.0
    %1035 = vmatpush.msra.mxu0 0.0
    %1036 = vmatpush.msra.mxu0 0.0
    %1037 = vmatpush.msra.mxu0 %v1021
    %1038 = vmatpush.msra.mxu0 %v1020
    %1039 = vmatpush.msra.mxu0 %v1019
    %1040 = vmatpush.msra.mxu0 %v1018
    %1041 = vmatmul.f32.gmra.mxu0 %v220
    %v1042 = vpop.f32.mrf.mxu0
    %v1043 = vadd.f32 0.0, %v1042
    %1044 = vmatmul.f32.gmra.mxu0 %v220
    %v1045 = vpop.f32.mrf.mxu0
    %v1046 = vadd.f32 0.0, %v1045
    %1047 = vmatmul.f32.gmra.mxu0 %v220
    %v1048 = vpop.f32.mrf.mxu0
    %v1049 = vadd.f32 0.0, %v1048
    %1050 = vmatmul.f32.gmra.mxu0 %v220
    %v1051 = vpop.f32.mrf.mxu0
    %v1052 = vadd.f32 0.0, %v1051
    %1053 = vdwg.mxu0
    %v1054 = vadd.f32 %v959, %v1043
    %v1055 = vadd.f32 %v961, %v1046
    %v1056 = vadd.f32 %v964, %v1049
    %v1057 = vadd.f32 %v966, %v1052
    %v1058 = vxor.u32 %v1054, 2147483648
    %v1059 = vxor.u32 %v1055, 2147483648
    %v1060 = vxor.u32 %v1056, 2147483648
    %v1061 = vxor.u32 %v1057, 2147483648
    %v1062 = vmul.f32 %v1058, 1.442695
    %v1063 = vpow.pop %v1062
    %v1064 = vmul.f32 %v1059, 1.442695
    %v1065 = vpow.pop %v1064
    %v1066 = vmul.f32 %v1060, 1.442695
    %v1067 = vpow.pop %v1066
    %v1068 = vmul.f32 %v1061, 1.442695
    %v1069 = vpow.pop %v1068
    %v1070 = vadd.f32 %v1063, 1.0
    %v1071 = vadd.f32 %v1065, 1.0
    %v1072 = vadd.f32 %v1067, 1.0
    %v1073 = vadd.f32 %v1069, 1.0
    %v1074 = vrcp.pop %v1070
    %v1075 = vmul.f32 %v1070, %v1074
    %v1076 = vsub.f32 1.0, %v1075
    %v1077 = vmul.f32 %v1074, %v1076
    %v1078 = vadd.f32 %v1074, %v1077
    %vm1079 = vweird.f32 %v1070
    %vm1080 = vweird.f32 %v1074
    %vm1081 = vmor %vm1079, %vm1080
    %v1082 = vsel %vm1081, %v1074, %v1078
    %v1083 = vand.u32 2147483647, %v1070
    %vm1084 = vcmp.eq.f32.partialorder %v1083, 8.507059e+37
    %v1085 = vand.u32 %v1070, 2147483648
    %v1086 = vor.u32 1.1754944e-38, %v1085
    %v1087 = vsel %vm1084, %v1086, %v1082
    %v1088 = vmul.f32 1.0, %v1087
    %v1089 = vrcp.pop %v1071
    %v1090 = vmul.f32 %v1071, %v1089
    %v1091 = vsub.f32 1.0, %v1090
    %v1092 = vmul.f32 %v1089, %v1091
    %v1093 = vadd.f32 %v1089, %v1092
    %vm1094 = vweird.f32 %v1071
    %vm1095 = vweird.f32 %v1089
    %vm1096 = vmor %vm1094, %vm1095
    %v1097 = vsel %vm1096, %v1089, %v1093
    %v1098 = vand.u32 2147483647, %v1071
    %vm1099 = vcmp.eq.f32.partialorder %v1098, 8.507059e+37
    %v1100 = vand.u32 %v1071, 2147483648
    %v1101 = vor.u32 1.1754944e-38, %v1100
    %v1102 = vsel %vm1099, %v1101, %v1097
    %v1103 = vmul.f32 1.0, %v1102
    %v1104 = vrcp.pop %v1072
    %v1105 = vmul.f32 %v1072, %v1104
    %v1106 = vsub.f32 1.0, %v1105
    %v1107 = vmul.f32 %v1104, %v1106
    %v1108 = vadd.f32 %v1104, %v1107
    %vm1109 = vweird.f32 %v1072
    %vm1110 = vweird.f32 %v1104
    %vm1111 = vmor %vm1109, %vm1110
    %v1112 = vsel %vm1111, %v1104, %v1108
    %v1113 = vand.u32 2147483647, %v1072
    %vm1114 = vcmp.eq.f32.partialorder %v1113, 8.507059e+37
    %v1115 = vand.u32 %v1072, 2147483648
    %v1116 = vor.u32 1.1754944e-38, %v1115
    %v1117 = vsel %vm1114, %v1116, %v1112
    %v1118 = vmul.f32 1.0, %v1117
    %v1119 = vrcp.pop %v1073
    %v1120 = vmul.f32 %v1073, %v1119
    %v1121 = vsub.f32 1.0, %v1120
    %v1122 = vmul.f32 %v1119, %v1121
    %v1123 = vadd.f32 %v1119, %v1122
    %vm1124 = vweird.f32 %v1073
    %vm1125 = vweird.f32 %v1119
    %vm1126 = vmor %vm1124, %vm1125
    %v1127 = vsel %vm1126, %v1119, %v1123
    %v1128 = vand.u32 2147483647, %v1073
    %vm1129 = vcmp.eq.f32.partialorder %v1128, 8.507059e+37
    %v1130 = vand.u32 %v1073, 2147483648
    %v1131 = vor.u32 1.1754944e-38, %v1130
    %v1132 = vsel %vm1129, %v1131, %v1127
    %v1133 = vmul.f32 1.0, %v1132
    %v1134 = vadd.f32 %v1043, %v1023
    %v1135 = vadd.f32 %v1046, %v1023
    %v1136 = vadd.f32 %v1049, %v1023
    %v1137 = vadd.f32 %v1052, %v1023
    %1142 = vrot.lane.b32.xlu0 %v1134, 64
    %v1143 = vpop.permute.xlu0 %1142
    %1144 = vrot.lane.b32.xlu0 %v1135, 64
    %v1145 = vpop.permute.xlu0 %1144
    %1146 = vrot.lane.b32.xlu0 %v1136, 64
    %v1147 = vpop.permute.xlu0 %1146
    %1148 = vrot.lane.b32.xlu0 %v1137, 64
    %v1149 = vpop.permute.xlu0 %1148
    %v1154 = vmul.f32 %v1088, %v1143
    %v1155 = vmul.f32 %v1103, %v1145
    %v1156 = vmul.f32 %v1118, %v1147
    %v1157 = vmul.f32 %v1133, %v1149
    %1162 = vrot.lane.b32.xlu0 %v1154, 64
    %v1163 = vpop.permute.xlu0 %1162
    %1164 = vrot.lane.b32.xlu0 %v1155, 64
    %v1165 = vpop.permute.xlu0 %1164
    %1166 = vrot.lane.b32.xlu0 %v1156, 64
    %v1167 = vpop.permute.xlu0 %1166
    %1168 = vrot.lane.b32.xlu0 %v1157, 64
    %v1169 = vpop.permute.xlu0 %1168
    %v1174 = vadd.f32 %v959, %v1163
    %v1175 = vadd.f32 %v961, %v1165
    %v1176 = vadd.f32 %v964, %v1167
    %v1177 = vadd.f32 %v966, %v1169
    %v1178 = vtanh.pop %v1174
    %v1179 = vtanh.pop %v1175
    %v1180 = vtanh.pop %v1176
    %v1181 = vtanh.pop %v1177
    %v1182 = vsub.f32 0.0, %v1178
    %v1183 = vsub.f32 0.0, %v1179
    %v1184 = vsub.f32 0.0, %v1180
    %v1185 = vsub.f32 0.0, %v1181
    %1190 = vrot.lane.b32.xlu0 %v1182, 96
    %v1191 = vpop.permute.xlu0 %1190
    %1192 = vrot.lane.b32.xlu0 %v1183, 96
    %v1193 = vpop.permute.xlu0 %1192
    %1194 = vrot.lane.b32.xlu0 %v1184, 96
    %v1195 = vpop.permute.xlu0 %1194
    %1196 = vrot.lane.b32.xlu0 %v1185, 96
    %v1197 = vpop.permute.xlu0 %1196
    %v1202 = vmul.f32 %v1088, %v1191
    %v1203 = vmul.f32 %v1103, %v1193
    %v1204 = vmul.f32 %v1118, %v1195
    %v1205 = vmul.f32 %v1133, %v1197
    %1210 = vrot.lane.b32.xlu0 %v1202, 32
    %v1211 = vpop.permute.xlu0 %1210
    %1212 = vrot.lane.b32.xlu0 %v1203, 32
    %v1213 = vpop.permute.xlu0 %1212
    %1214 = vrot.lane.b32.xlu0 %v1204, 32
    %v1215 = vpop.permute.xlu0 %1214
    %1216 = vrot.lane.b32.xlu0 %v1205, 32
    %v1217 = vpop.permute.xlu0 %1216
    %v1222 = vadd.f32 %v1178, %v1211
    %v1223 = vadd.f32 %v1179, %v1213
    %v1224 = vadd.f32 %v1180, %v1215
    %v1225 = vadd.f32 %v1181, %v1217
    %1230 = vrot.lane.b32.xlu0 %v1222, 64
    %v1231 = vpop.permute.xlu0 %1230
    %1232 = vrot.lane.b32.xlu0 %v1223, 64
    %v1233 = vpop.permute.xlu0 %1232
    %1234 = vrot.lane.b32.xlu0 %v1224, 64
    %v1235 = vpop.permute.xlu0 %1234
    %1236 = vrot.lane.b32.xlu0 %v1225, 64
    %v1237 = vpop.permute.xlu0 %1236
    %v1238 = vsel %vm121, %v1231, 0
    %v1240 = vsel %vm121, %v1233, 0
    %v1242 = vsel %vm121, %v1235, 0
    %v1244 = vsel %vm121, %v1237, 0
    %1246 = vmatpush.msra.mxu0 0.0
    %1247 = vmatpush.msra.mxu0 0.0
    %1248 = vmatpush.msra.mxu0 0.0
    %1249 = vmatpush.msra.mxu0 0.0
    %1250 = vmatpush.msra.mxu0 0.0
    %1251 = vmatpush.msra.mxu0 0.0
    %1252 = vmatpush.msra.mxu0 0.0
    %1253 = vmatpush.msra.mxu0 0.0
    %1254 = vmatpush.msra.mxu0 0.0
    %1255 = vmatpush.msra.mxu0 0.0
    %1256 = vmatpush.msra.mxu0 0.0
    %1257 = vmatpush.msra.mxu0 0.0
    %1258 = vmatpush.msra.mxu0 %v1021
    %1259 = vmatpush.msra.mxu0 %v1020
    %1260 = vmatpush.msra.mxu0 %v1019
    %1261 = vmatpush.msra.mxu0 %v1018
    %1262 = vmatmul.f32.gmra.mxu0 %v1238
    %v1263 = vpop.f32.mrf.mxu0
    %v1264 = vadd.f32 0.0, %v1263
    %1265 = vmatmul.f32.gmra.mxu0 %v1240
    %v1266 = vpop.f32.mrf.mxu0
    %v1267 = vadd.f32 0.0, %v1266
    %1268 = vmatmul.f32.gmra.mxu0 %v1242
    %v1269 = vpop.f32.mrf.mxu0
    %v1270 = vadd.f32 0.0, %v1269
    %1271 = vmatmul.f32.gmra.mxu0 %v1244
    %v1272 = vpop.f32.mrf.mxu0
    %v1273 = vadd.f32 0.0, %v1272
    %1274 = vdwg.mxu0
    %v1275 = vadd.f32 %v969, %v1264
    %v1276 = vadd.f32 %v971, %v1267
    %v1277 = vadd.f32 %v974, %v1270
    %v1278 = vadd.f32 %v976, %v1273
    %v1279 = vxor.u32 %v1275, 2147483648
    %v1280 = vxor.u32 %v1276, 2147483648
    %v1281 = vxor.u32 %v1277, 2147483648
    %v1282 = vxor.u32 %v1278, 2147483648
    %v1283 = vmul.f32 %v1279, 1.442695
    %v1284 = vpow.pop %v1283
    %v1285 = vmul.f32 %v1280, 1.442695
    %v1286 = vpow.pop %v1285
    %v1287 = vmul.f32 %v1281, 1.442695
    %v1288 = vpow.pop %v1287
    %v1289 = vmul.f32 %v1282, 1.442695
    %v1290 = vpow.pop %v1289
    %v1291 = vadd.f32 %v1284, 1.0
    %v1292 = vadd.f32 %v1286, 1.0
    %v1293 = vadd.f32 %v1288, 1.0
    %v1294 = vadd.f32 %v1290, 1.0
    %v1295 = vrcp.pop %v1291
    %v1296 = vmul.f32 %v1291, %v1295
    %v1297 = vsub.f32 1.0, %v1296
    %v1298 = vmul.f32 %v1295, %v1297
    %v1299 = vadd.f32 %v1295, %v1298
    %vm1300 = vweird.f32 %v1291
    %vm1301 = vweird.f32 %v1295
    %vm1302 = vmor %vm1300, %vm1301
    %v1303 = vsel %vm1302, %v1295, %v1299
    %v1304 = vand.u32 2147483647, %v1291
    %vm1305 = vcmp.eq.f32.partialorder %v1304, 8.507059e+37
    %v1306 = vand.u32 %v1291, 2147483648
    %v1307 = vor.u32 1.1754944e-38, %v1306
    %v1308 = vsel %vm1305, %v1307, %v1303
    %v1309 = vmul.f32 1.0, %v1308
    %v1310 = vrcp.pop %v1292
    %v1311 = vmul.f32 %v1292, %v1310
    %v1312 = vsub.f32 1.0, %v1311
    %v1313 = vmul.f32 %v1310, %v1312
    %v1314 = vadd.f32 %v1310, %v1313
    %vm1315 = vweird.f32 %v1292
    %vm1316 = vweird.f32 %v1310
    %vm1317 = vmor %vm1315, %vm1316
    %v1318 = vsel %vm1317, %v1310, %v1314
    %v1319 = vand.u32 2147483647, %v1292
    %vm1320 = vcmp.eq.f32.partialorder %v1319, 8.507059e+37
    %v1321 = vand.u32 %v1292, 2147483648
    %v1322 = vor.u32 1.1754944e-38, %v1321
    %v1323 = vsel %vm1320, %v1322, %v1318
    %v1324 = vmul.f32 1.0, %v1323
    %v1325 = vrcp.pop %v1293
    %v1326 = vmul.f32 %v1293, %v1325
    %v1327 = vsub.f32 1.0, %v1326
    %v1328 = vmul.f32 %v1325, %v1327
    %v1329 = vadd.f32 %v1325, %v1328
    %vm1330 = vweird.f32 %v1293
    %vm1331 = vweird.f32 %v1325
    %vm1332 = vmor %vm1330, %vm1331
    %v1333 = vsel %vm1332, %v1325, %v1329
    %v1334 = vand.u32 2147483647, %v1293
    %vm1335 = vcmp.eq.f32.partialorder %v1334, 8.507059e+37
    %v1336 = vand.u32 %v1293, 2147483648
    %v1337 = vor.u32 1.1754944e-38, %v1336
    %v1338 = vsel %vm1335, %v1337, %v1333
    %v1339 = vmul.f32 1.0, %v1338
    %v1340 = vrcp.pop %v1294
    %v1341 = vmul.f32 %v1294, %v1340
    %v1342 = vsub.f32 1.0, %v1341
    %v1343 = vmul.f32 %v1340, %v1342
    %v1344 = vadd.f32 %v1340, %v1343
    %vm1345 = vweird.f32 %v1294
    %vm1346 = vweird.f32 %v1340
    %vm1347 = vmor %vm1345, %vm1346
    %v1348 = vsel %vm1347, %v1340, %v1344
    %v1349 = vand.u32 2147483647, %v1294
    %vm1350 = vcmp.eq.f32.partialorder %v1349, 8.507059e+37
    %v1351 = vand.u32 %v1294, 2147483648
    %v1352 = vor.u32 1.1754944e-38, %v1351
    %v1353 = vsel %vm1350, %v1352, %v1348
    %v1354 = vmul.f32 1.0, %v1353
    %v1355 = vadd.f32 %v1264, %v1023
    %v1356 = vadd.f32 %v1267, %v1023
    %v1357 = vadd.f32 %v1270, %v1023
    %v1358 = vadd.f32 %v1273, %v1023
    %1363 = vrot.lane.b32.xlu0 %v1355, 64
    %v1364 = vpop.permute.xlu0 %1363
    %1365 = vrot.lane.b32.xlu0 %v1356, 64
    %v1366 = vpop.permute.xlu0 %1365
    %1367 = vrot.lane.b32.xlu0 %v1357, 64
    %v1368 = vpop.permute.xlu0 %1367
    %1369 = vrot.lane.b32.xlu0 %v1358, 64
    %v1370 = vpop.permute.xlu0 %1369
    %v1375 = vmul.f32 %v1309, %v1364
    %v1376 = vmul.f32 %v1324, %v1366
    %v1377 = vmul.f32 %v1339, %v1368
    %v1378 = vmul.f32 %v1354, %v1370
    %1383 = vrot.lane.b32.xlu0 %v1375, 64
    %v1384 = vpop.permute.xlu0 %1383
    %1385 = vrot.lane.b32.xlu0 %v1376, 64
    %v1386 = vpop.permute.xlu0 %1385
    %1387 = vrot.lane.b32.xlu0 %v1377, 64
    %v1388 = vpop.permute.xlu0 %1387
    %1389 = vrot.lane.b32.xlu0 %v1378, 64
    %v1390 = vpop.permute.xlu0 %1389
    %v1395 = vadd.f32 %v969, %v1384
    %v1396 = vadd.f32 %v971, %v1386
    %v1397 = vadd.f32 %v974, %v1388
    %v1398 = vadd.f32 %v976, %v1390
    %v1399 = vtanh.pop %v1395
    %v1400 = vtanh.pop %v1396
    %v1401 = vtanh.pop %v1397
    %v1402 = vtanh.pop %v1398
    %v1403 = vsub.f32 %v1222, %v1399
    %v1404 = vsub.f32 %v1223, %v1400
    %v1405 = vsub.f32 %v1224, %v1401
    %v1406 = vsub.f32 %v1225, %v1402
    %1411 = vrot.lane.b32.xlu0 %v1403, 96
    %v1412 = vpop.permute.xlu0 %1411
    %1413 = vrot.lane.b32.xlu0 %v1404, 96
    %v1414 = vpop.permute.xlu0 %1413
    %1415 = vrot.lane.b32.xlu0 %v1405, 96
    %v1416 = vpop.permute.xlu0 %1415
    %1417 = vrot.lane.b32.xlu0 %v1406, 96
    %v1418 = vpop.permute.xlu0 %1417
    %v1423 = vmul.f32 %v1309, %v1412
    %v1424 = vmul.f32 %v1324, %v1414
    %v1425 = vmul.f32 %v1339, %v1416
    %v1426 = vmul.f32 %v1354, %v1418
    %1431 = vrot.lane.b32.xlu0 %v1423, 32
    %v1432 = vpop.permute.xlu0 %1431
    %1433 = vrot.lane.b32.xlu0 %v1424, 32
    %v1434 = vpop.permute.xlu0 %1433
    %1435 = vrot.lane.b32.xlu0 %v1425, 32
    %v1436 = vpop.permute.xlu0 %1435
    %1437 = vrot.lane.b32.xlu0 %v1426, 32
    %v1438 = vpop.permute.xlu0 %1437
    %v1443 = vadd.f32 %v1399, %v1432
    %v1444 = vadd.f32 %v1400, %v1434
    %v1445 = vadd.f32 %v1401, %v1436
    %v1446 = vadd.f32 %v1402, %v1438
    %1451 = vrot.lane.b32.xlu0 %v1443, 64
    %v1452 = vpop.permute.xlu0 %1451
    %1453 = vrot.lane.b32.xlu0 %v1444, 64
    %v1454 = vpop.permute.xlu0 %1453
    %1455 = vrot.lane.b32.xlu0 %v1445, 64
    %v1456 = vpop.permute.xlu0 %1455
    %1457 = vrot.lane.b32.xlu0 %v1446, 64
    %v1458 = vpop.permute.xlu0 %1457
    %v1459 = vsel %vm121, %v1452, 0
    %v1461 = vsel %vm121, %v1454, 0
    %v1463 = vsel %vm121, %v1456, 0
    %v1465 = vsel %vm121, %v1458, 0
    %1467 = vmatpush.msra.mxu0 0.0
    %1468 = vmatpush.msra.mxu0 0.0
    %1469 = vmatpush.msra.mxu0 0.0
    %1470 = vmatpush.msra.mxu0 0.0
    %1471 = vmatpush.msra.mxu0 0.0
    %1472 = vmatpush.msra.mxu0 0.0
    %1473 = vmatpush.msra.mxu0 0.0
    %1474 = vmatpush.msra.mxu0 0.0
    %1475 = vmatpush.msra.mxu0 0.0
    %1476 = vmatpush.msra.mxu0 0.0
    %1477 = vmatpush.msra.mxu0 0.0
    %1478 = vmatpush.msra.mxu0 0.0
    %1479 = vmatpush.msra.mxu0 %v1021
    %1480 = vmatpush.msra.mxu0 %v1020
    %1481 = vmatpush.msra.mxu0 %v1019
    %1482 = vmatpush.msra.mxu0 %v1018
    %1483 = vmatmul.f32.gmra.mxu0 %v1459
    %v1484 = vpop.f32.mrf.mxu0
    %v1485 = vadd.f32 0.0, %v1484
    %1486 = vmatmul.f32.gmra.mxu0 %v1461
    %v1487 = vpop.f32.mrf.mxu0
    %v1488 = vadd.f32 0.0, %v1487
    %1489 = vmatmul.f32.gmra.mxu0 %v1463
    %v1490 = vpop.f32.mrf.mxu0
    %v1491 = vadd.f32 0.0, %v1490
    %1492 = vmatmul.f32.gmra.mxu0 %v1465
    %v1493 = vpop.f32.mrf.mxu0
    %v1494 = vadd.f32 0.0, %v1493
    %1495 = vdwg.mxu0
    %v1496 = vadd.f32 %v979, %v1485
    %v1497 = vadd.f32 %v981, %v1488
    %v1498 = vadd.f32 %v984, %v1491
    %v1499 = vadd.f32 %v986, %v1494
    %v1500 = vxor.u32 %v1496, 2147483648
    %v1501 = vxor.u32 %v1497, 2147483648
    %v1502 = vxor.u32 %v1498, 2147483648
    %v1503 = vxor.u32 %v1499, 2147483648
    %v1504 = vmul.f32 %v1500, 1.442695
    %v1505 = vpow.pop %v1504
    %v1506 = vmul.f32 %v1501, 1.442695
    %v1507 = vpow.pop %v1506
    %v1508 = vmul.f32 %v1502, 1.442695
    %v1509 = vpow.pop %v1508
    %v1510 = vmul.f32 %v1503, 1.442695
    %v1511 = vpow.pop %v1510
    %v1512 = vadd.f32 %v1505, 1.0
    %v1513 = vadd.f32 %v1507, 1.0
    %v1514 = vadd.f32 %v1509, 1.0
    %v1515 = vadd.f32 %v1511, 1.0
    %v1516 = vrcp.pop %v1512
    %v1517 = vmul.f32 %v1512, %v1516
    %v1518 = vsub.f32 1.0, %v1517
    %v1519 = vmul.f32 %v1516, %v1518
    %v1520 = vadd.f32 %v1516, %v1519
    %vm1521 = vweird.f32 %v1512
    %vm1522 = vweird.f32 %v1516
    %vm1523 = vmor %vm1521, %vm1522
    %v1524 = vsel %vm1523, %v1516, %v1520
    %v1525 = vand.u32 2147483647, %v1512
    %vm1526 = vcmp.eq.f32.partialorder %v1525, 8.507059e+37
    %v1527 = vand.u32 %v1512, 2147483648
    %v1528 = vor.u32 1.1754944e-38, %v1527
    %v1529 = vsel %vm1526, %v1528, %v1524
    %v1530 = vmul.f32 1.0, %v1529
    %v1531 = vrcp.pop %v1513
    %v1532 = vmul.f32 %v1513, %v1531
    %v1533 = vsub.f32 1.0, %v1532
    %v1534 = vmul.f32 %v1531, %v1533
    %v1535 = vadd.f32 %v1531, %v1534
    %vm1536 = vweird.f32 %v1513
    %vm1537 = vweird.f32 %v1531
    %vm1538 = vmor %vm1536, %vm1537
    %v1539 = vsel %vm1538, %v1531, %v1535
    %v1540 = vand.u32 2147483647, %v1513
    %vm1541 = vcmp.eq.f32.partialorder %v1540, 8.507059e+37
    %v1542 = vand.u32 %v1513, 2147483648
    %v1543 = vor.u32 1.1754944e-38, %v1542
    %v1544 = vsel %vm1541, %v1543, %v1539
    %v1545 = vmul.f32 1.0, %v1544
    %v1546 = vrcp.pop %v1514
    %v1547 = vmul.f32 %v1514, %v1546
    %v1548 = vsub.f32 1.0, %v1547
    %v1549 = vmul.f32 %v1546, %v1548
    %v1550 = vadd.f32 %v1546, %v1549
    %vm1551 = vweird.f32 %v1514
    %vm1552 = vweird.f32 %v1546
    %vm1553 = vmor %vm1551, %vm1552
    %v1554 = vsel %vm1553, %v1546, %v1550
    %v1555 = vand.u32 2147483647, %v1514
    %vm1556 = vcmp.eq.f32.partialorder %v1555, 8.507059e+37
    %v1557 = vand.u32 %v1514, 2147483648
    %v1558 = vor.u32 1.1754944e-38, %v1557
    %v1559 = vsel %vm1556, %v1558, %v1554
    %v1560 = vmul.f32 1.0, %v1559
    %v1561 = vrcp.pop %v1515
    %v1562 = vmul.f32 %v1515, %v1561
    %v1563 = vsub.f32 1.0, %v1562
    %v1564 = vmul.f32 %v1561, %v1563
    %v1565 = vadd.f32 %v1561, %v1564
    %vm1566 = vweird.f32 %v1515
    %vm1567 = vweird.f32 %v1561
    %vm1568 = vmor %vm1566, %vm1567
    %v1569 = vsel %vm1568, %v1561, %v1565
    %v1570 = vand.u32 2147483647, %v1515
    %vm1571 = vcmp.eq.f32.partialorder %v1570, 8.507059e+37
    %v1572 = vand.u32 %v1515, 2147483648
    %v1573 = vor.u32 1.1754944e-38, %v1572
    %v1574 = vsel %vm1571, %v1573, %v1569
    %v1575 = vmul.f32 1.0, %v1574
    %v1576 = vadd.f32 %v1485, %v1023
    %v1577 = vadd.f32 %v1488, %v1023
    %v1578 = vadd.f32 %v1491, %v1023
    %v1579 = vadd.f32 %v1494, %v1023
    %1584 = vrot.lane.b32.xlu0 %v1576, 64
    %v1585 = vpop.permute.xlu0 %1584
    %1586 = vrot.lane.b32.xlu0 %v1577, 64
    %v1587 = vpop.permute.xlu0 %1586
    %1588 = vrot.lane.b32.xlu0 %v1578, 64
    %v1589 = vpop.permute.xlu0 %1588
    %1590 = vrot.lane.b32.xlu0 %v1579, 64
    %v1591 = vpop.permute.xlu0 %1590
    %v1596 = vmul.f32 %v1530, %v1585
    %v1597 = vmul.f32 %v1545, %v1587
    %v1598 = vmul.f32 %v1560, %v1589
    %v1599 = vmul.f32 %v1575, %v1591
    %1604 = vrot.lane.b32.xlu0 %v1596, 64
    %v1605 = vpop.permute.xlu0 %1604
    %1606 = vrot.lane.b32.xlu0 %v1597, 64
    %v1607 = vpop.permute.xlu0 %1606
    %1608 = vrot.lane.b32.xlu0 %v1598, 64
    %v1609 = vpop.permute.xlu0 %1608
    %1610 = vrot.lane.b32.xlu0 %v1599, 64
    %v1611 = vpop.permute.xlu0 %1610
    %v1616 = vadd.f32 %v979, %v1605
    %v1617 = vadd.f32 %v981, %v1607
    %v1618 = vadd.f32 %v984, %v1609
    %v1619 = vadd.f32 %v986, %v1611
    %v1620 = vtanh.pop %v1616
    %v1621 = vtanh.pop %v1617
    %v1622 = vtanh.pop %v1618
    %v1623 = vtanh.pop %v1619
    %v1624 = vsub.f32 %v1443, %v1620
    %v1625 = vsub.f32 %v1444, %v1621
    %v1626 = vsub.f32 %v1445, %v1622
    %v1627 = vsub.f32 %v1446, %v1623
    %1632 = vrot.lane.b32.xlu0 %v1624, 96
    %v1633 = vpop.permute.xlu0 %1632
    %1634 = vrot.lane.b32.xlu0 %v1625, 96
    %v1635 = vpop.permute.xlu0 %1634
    %1636 = vrot.lane.b32.xlu0 %v1626, 96
    %v1637 = vpop.permute.xlu0 %1636
    %1638 = vrot.lane.b32.xlu0 %v1627, 96
    %v1639 = vpop.permute.xlu0 %1638
    %v1644 = vmul.f32 %v1530, %v1633
    %v1645 = vmul.f32 %v1545, %v1635
    %v1646 = vmul.f32 %v1560, %v1637
    %v1647 = vmul.f32 %v1575, %v1639
    %1652 = vrot.lane.b32.xlu0 %v1644, 32
    %v1653 = vpop.permute.xlu0 %1652
    %1654 = vrot.lane.b32.xlu0 %v1645, 32
    %v1655 = vpop.permute.xlu0 %1654
    %1656 = vrot.lane.b32.xlu0 %v1646, 32
    %v1657 = vpop.permute.xlu0 %1656
    %1658 = vrot.lane.b32.xlu0 %v1647, 32
    %v1659 = vpop.permute.xlu0 %1658
    %v1664 = vadd.f32 %v1620, %v1653
    %v1665 = vadd.f32 %v1621, %v1655
    %v1666 = vadd.f32 %v1622, %v1657
    %v1667 = vadd.f32 %v1623, %v1659
    %1672 = vrot.lane.b32.xlu0 %v1664, 64
    %v1673 = vpop.permute.xlu0 %1672
    %1674 = vrot.lane.b32.xlu0 %v1665, 64
    %v1675 = vpop.permute.xlu0 %1674
    %1676 = vrot.lane.b32.xlu0 %v1666, 64
    %v1677 = vpop.permute.xlu0 %1676
    %1678 = vrot.lane.b32.xlu0 %v1667, 64
    %v1679 = vpop.permute.xlu0 %1678
    %v1680 = vsel %vm121, %v1673, 0
    %v1682 = vsel %vm121, %v1675, 0
    %v1684 = vsel %vm121, %v1677, 0
    %v1686 = vsel %vm121, %v1679, 0
    %1688 = vmatpush.msra.mxu0 0.0
    %1689 = vmatpush.msra.mxu0 0.0
    %1690 = vmatpush.msra.mxu0 0.0
    %1691 = vmatpush.msra.mxu0 0.0
    %1692 = vmatpush.msra.mxu0 0.0
    %1693 = vmatpush.msra.mxu0 0.0
    %1694 = vmatpush.msra.mxu0 0.0
    %1695 = vmatpush.msra.mxu0 0.0
    %1696 = vmatpush.msra.mxu0 0.0
    %1697 = vmatpush.msra.mxu0 0.0
    %1698 = vmatpush.msra.mxu0 0.0
    %1699 = vmatpush.msra.mxu0 0.0
    %1700 = vmatpush.msra.mxu0 %v1021
    %1701 = vmatpush.msra.mxu0 %v1020
    %1702 = vmatpush.msra.mxu0 %v1019
    %1703 = vmatpush.msra.mxu0 %v1018
    %1704 = vmatmul.f32.gmra.mxu0 %v1680
    %v1705 = vpop.f32.mrf.mxu0
    %v1706 = vadd.f32 0.0, %v1705
    %1707 = vmatmul.f32.gmra.mxu0 %v1682
    %v1708 = vpop.f32.mrf.mxu0
    %v1709 = vadd.f32 0.0, %v1708
    %1710 = vmatmul.f32.gmra.mxu0 %v1684
    %v1711 = vpop.f32.mrf.mxu0
    %v1712 = vadd.f32 0.0, %v1711
    %1713 = vmatmul.f32.gmra.mxu0 %v1686
    %v1714 = vpop.f32.mrf.mxu0
    %v1715 = vadd.f32 0.0, %v1714
    %1716 = vdwg.mxu0
    %v1717 = vadd.f32 %v989, %v1706
    %v1718 = vadd.f32 %v991, %v1709
    %v1719 = vadd.f32 %v994, %v1712
    %v1720 = vadd.f32 %v996, %v1715
    %v1721 = vxor.u32 %v1717, 2147483648
    %v1722 = vxor.u32 %v1718, 2147483648
    %v1723 = vxor.u32 %v1719, 2147483648
    %v1724 = vxor.u32 %v1720, 2147483648
    %v1725 = vmul.f32 %v1721, 1.442695
    %v1726 = vpow.pop %v1725
    %v1727 = vmul.f32 %v1722, 1.442695
    %v1728 = vpow.pop %v1727
    %v1729 = vmul.f32 %v1723, 1.442695
    %v1730 = vpow.pop %v1729
    %v1731 = vmul.f32 %v1724, 1.442695
    %v1732 = vpow.pop %v1731
    %v1733 = vadd.f32 %v1726, 1.0
    %v1734 = vadd.f32 %v1728, 1.0
    %v1735 = vadd.f32 %v1730, 1.0
    %v1736 = vadd.f32 %v1732, 1.0
    %v1737 = vrcp.pop %v1733
    %v1738 = vmul.f32 %v1733, %v1737
    %v1739 = vsub.f32 1.0, %v1738
    %v1740 = vmul.f32 %v1737, %v1739
    %v1741 = vadd.f32 %v1737, %v1740
    %vm1742 = vweird.f32 %v1733
    %vm1743 = vweird.f32 %v1737
    %vm1744 = vmor %vm1742, %vm1743
    %v1745 = vsel %vm1744, %v1737, %v1741
    %v1746 = vand.u32 2147483647, %v1733
    %vm1747 = vcmp.eq.f32.partialorder %v1746, 8.507059e+37
    %v1748 = vand.u32 %v1733, 2147483648
    %v1749 = vor.u32 1.1754944e-38, %v1748
    %v1750 = vsel %vm1747, %v1749, %v1745
    %v1751 = vmul.f32 1.0, %v1750
    %v1752 = vrcp.pop %v1734
    %v1753 = vmul.f32 %v1734, %v1752
    %v1754 = vsub.f32 1.0, %v1753
    %v1755 = vmul.f32 %v1752, %v1754
    %v1756 = vadd.f32 %v1752, %v1755
    %vm1757 = vweird.f32 %v1734
    %vm1758 = vweird.f32 %v1752
    %vm1759 = vmor %vm1757, %vm1758
    %v1760 = vsel %vm1759, %v1752, %v1756
    %v1761 = vand.u32 2147483647, %v1734
    %vm1762 = vcmp.eq.f32.partialorder %v1761, 8.507059e+37
    %v1763 = vand.u32 %v1734, 2147483648
    %v1764 = vor.u32 1.1754944e-38, %v1763
    %v1765 = vsel %vm1762, %v1764, %v1760
    %v1766 = vmul.f32 1.0, %v1765
    %v1767 = vrcp.pop %v1735
    %v1768 = vmul.f32 %v1735, %v1767
    %v1769 = vsub.f32 1.0, %v1768
    %v1770 = vmul.f32 %v1767, %v1769
    %v1771 = vadd.f32 %v1767, %v1770
    %vm1772 = vweird.f32 %v1735
    %vm1773 = vweird.f32 %v1767
    %vm1774 = vmor %vm1772, %vm1773
    %v1775 = vsel %vm1774, %v1767, %v1771
    %v1776 = vand.u32 2147483647, %v1735
    %vm1777 = vcmp.eq.f32.partialorder %v1776, 8.507059e+37
    %v1778 = vand.u32 %v1735, 2147483648
    %v1779 = vor.u32 1.1754944e-38, %v1778
    %v1780 = vsel %vm1777, %v1779, %v1775
    %v1781 = vmul.f32 1.0, %v1780
    %v1782 = vrcp.pop %v1736
    %v1783 = vmul.f32 %v1736, %v1782
    %v1784 = vsub.f32 1.0, %v1783
    %v1785 = vmul.f32 %v1782, %v1784
    %v1786 = vadd.f32 %v1782, %v1785
    %vm1787 = vweird.f32 %v1736
    %vm1788 = vweird.f32 %v1782
    %vm1789 = vmor %vm1787, %vm1788
    %v1790 = vsel %vm1789, %v1782, %v1786
    %v1791 = vand.u32 2147483647, %v1736
    %vm1792 = vcmp.eq.f32.partialorder %v1791, 8.507059e+37
    %v1793 = vand.u32 %v1736, 2147483648
    %v1794 = vor.u32 1.1754944e-38, %v1793
    %v1795 = vsel %vm1792, %v1794, %v1790
    %v1796 = vmul.f32 1.0, %v1795
    %v1797 = vadd.f32 %v1706, %v1023
    %v1798 = vadd.f32 %v1709, %v1023
    %v1799 = vadd.f32 %v1712, %v1023
    %v1800 = vadd.f32 %v1715, %v1023
    %1805 = vrot.lane.b32.xlu0 %v1797, 64
    %v1806 = vpop.permute.xlu0 %1805
    %1807 = vrot.lane.b32.xlu0 %v1798, 64
    %v1808 = vpop.permute.xlu0 %1807
    %1809 = vrot.lane.b32.xlu0 %v1799, 64
    %v1810 = vpop.permute.xlu0 %1809
    %1811 = vrot.lane.b32.xlu0 %v1800, 64
    %v1812 = vpop.permute.xlu0 %1811
    %v1817 = vmul.f32 %v1751, %v1806
    %v1818 = vmul.f32 %v1766, %v1808
    %v1819 = vmul.f32 %v1781, %v1810
    %v1820 = vmul.f32 %v1796, %v1812
    %1825 = vrot.lane.b32.xlu0 %v1817, 64
    %v1826 = vpop.permute.xlu0 %1825
    %1827 = vrot.lane.b32.xlu0 %v1818, 64
    %v1828 = vpop.permute.xlu0 %1827
    %1829 = vrot.lane.b32.xlu0 %v1819, 64
    %v1830 = vpop.permute.xlu0 %1829
    %1831 = vrot.lane.b32.xlu0 %v1820, 64
    %v1832 = vpop.permute.xlu0 %1831
    %v1837 = vadd.f32 %v989, %v1826
    %v1838 = vadd.f32 %v991, %v1828
    %v1839 = vadd.f32 %v994, %v1830
    %v1840 = vadd.f32 %v996, %v1832
    %v1841 = vtanh.pop %v1837
    %v1842 = vtanh.pop %v1838
    %v1843 = vtanh.pop %v1839
    %v1844 = vtanh.pop %v1840
    %v1845 = vsub.f32 %v1664, %v1841
    %v1846 = vsub.f32 %v1665, %v1842
    %v1847 = vsub.f32 %v1666, %v1843
    %v1848 = vsub.f32 %v1667, %v1844
    %1853 = vrot.lane.b32.xlu0 %v1845, 96
    %v1854 = vpop.permute.xlu0 %1853
    %1855 = vrot.lane.b32.xlu0 %v1846, 96
    %v1856 = vpop.permute.xlu0 %1855
    %1857 = vrot.lane.b32.xlu0 %v1847, 96
    %v1858 = vpop.permute.xlu0 %1857
    %1859 = vrot.lane.b32.xlu0 %v1848, 96
    %v1860 = vpop.permute.xlu0 %1859
    %v1865 = vmul.f32 %v1751, %v1854
    %v1866 = vmul.f32 %v1766, %v1856
    %v1867 = vmul.f32 %v1781, %v1858
    %v1868 = vmul.f32 %v1796, %v1860
    %1873 = vrot.lane.b32.xlu0 %v1865, 32
    %v1874 = vpop.permute.xlu0 %1873
    %1875 = vrot.lane.b32.xlu0 %v1866, 32
    %v1876 = vpop.permute.xlu0 %1875
    %1877 = vrot.lane.b32.xlu0 %v1867, 32
    %v1878 = vpop.permute.xlu0 %1877
    %1879 = vrot.lane.b32.xlu0 %v1868, 32
    %v1880 = vpop.permute.xlu0 %1879
    %v1885 = vadd.f32 %v1841, %v1874
    %v1886 = vadd.f32 %v1842, %v1876
    %v1887 = vadd.f32 %v1843, %v1878
    %v1888 = vadd.f32 %v1844, %v1880
    %1893 = vrot.lane.b32.xlu0 %v1885, 64
    %v1894 = vpop.permute.xlu0 %1893
    %1895 = vrot.lane.b32.xlu0 %v1886, 64
    %v1896 = vpop.permute.xlu0 %1895
    %1897 = vrot.lane.b32.xlu0 %v1887, 64
    %v1898 = vpop.permute.xlu0 %1897
    %1899 = vrot.lane.b32.xlu0 %v1888, 64
    %v1900 = vpop.permute.xlu0 %1899
    %v1901 = vsel %vm121, %v1894, 0
    %v1903 = vsel %vm121, %v1896, 0
    %v1905 = vsel %vm121, %v1898, 0
    %v1907 = vsel %vm121, %v1900, 0
    %1909 = vmatpush.msra.mxu0 0.0
    %1910 = vmatpush.msra.mxu0 0.0
    %1911 = vmatpush.msra.mxu0 0.0
    %1912 = vmatpush.msra.mxu0 0.0
    %1913 = vmatpush.msra.mxu0 0.0
    %1914 = vmatpush.msra.mxu0 0.0
    %1915 = vmatpush.msra.mxu0 0.0
    %1916 = vmatpush.msra.mxu0 0.0
    %1917 = vmatpush.msra.mxu0 0.0
    %1918 = vmatpush.msra.mxu0 0.0
    %1919 = vmatpush.msra.mxu0 0.0
    %1920 = vmatpush.msra.mxu0 0.0
    %1921 = vmatpush.msra.mxu0 %v1021
    %1922 = vmatpush.msra.mxu0 %v1020
    %1923 = vmatpush.msra.mxu0 %v1019
    %1924 = vmatpush.msra.mxu0 %v1018
    %1925 = vmatmul.f32.gmra.mxu0 %v1901
    %v1926 = vpop.f32.mrf.mxu0
    %v1927 = vadd.f32 0.0, %v1926
    %1928 = vmatmul.f32.gmra.mxu0 %v1903
    %v1929 = vpop.f32.mrf.mxu0
    %v1930 = vadd.f32 0.0, %v1929
    %1931 = vmatmul.f32.gmra.mxu0 %v1905
    %v1932 = vpop.f32.mrf.mxu0
    %v1933 = vadd.f32 0.0, %v1932
    %1934 = vmatmul.f32.gmra.mxu0 %v1907
    %v1935 = vpop.f32.mrf.mxu0
    %v1936 = vadd.f32 0.0, %v1935
    %1937 = vdwg.mxu0
    %v1938 = vadd.f32 %v999, %v1927
    %v1939 = vadd.f32 %v1001, %v1930
    %v1940 = vadd.f32 %v1004, %v1933
    %v1941 = vadd.f32 %v1006, %v1936
    %v1942 = vxor.u32 %v1938, 2147483648
    %v1943 = vxor.u32 %v1939, 2147483648
    %v1944 = vxor.u32 %v1940, 2147483648
    %v1945 = vxor.u32 %v1941, 2147483648
    %v1946 = vmul.f32 %v1942, 1.442695
    %v1947 = vpow.pop %v1946
    %v1948 = vmul.f32 %v1943, 1.442695
    %v1949 = vpow.pop %v1948
    %v1950 = vmul.f32 %v1944, 1.442695
    %v1951 = vpow.pop %v1950
    %v1952 = vmul.f32 %v1945, 1.442695
    %v1953 = vpow.pop %v1952
    %v1954 = vadd.f32 %v1947, 1.0
    %v1955 = vadd.f32 %v1949, 1.0
    %v1956 = vadd.f32 %v1951, 1.0
    %v1957 = vadd.f32 %v1953, 1.0
    %v1958 = vrcp.pop %v1954
    %v1959 = vmul.f32 %v1954, %v1958
    %v1960 = vsub.f32 1.0, %v1959
    %v1961 = vmul.f32 %v1958, %v1960
    %v1962 = vadd.f32 %v1958, %v1961
    %vm1963 = vweird.f32 %v1954
    %vm1964 = vweird.f32 %v1958
    %vm1965 = vmor %vm1963, %vm1964
    %v1966 = vsel %vm1965, %v1958, %v1962
    %v1967 = vand.u32 2147483647, %v1954
    %vm1968 = vcmp.eq.f32.partialorder %v1967, 8.507059e+37
    %v1969 = vand.u32 %v1954, 2147483648
    %v1970 = vor.u32 1.1754944e-38, %v1969
    %v1971 = vsel %vm1968, %v1970, %v1966
    %v1972 = vmul.f32 1.0, %v1971
    %v1973 = vrcp.pop %v1955
    %v1974 = vmul.f32 %v1955, %v1973
    %v1975 = vsub.f32 1.0, %v1974
    %v1976 = vmul.f32 %v1973, %v1975
    %v1977 = vadd.f32 %v1973, %v1976
    %vm1978 = vweird.f32 %v1955
    %vm1979 = vweird.f32 %v1973
    %vm1980 = vmor %vm1978, %vm1979
    %v1981 = vsel %vm1980, %v1973, %v1977
    %v1982 = vand.u32 2147483647, %v1955
    %vm1983 = vcmp.eq.f32.partialorder %v1982, 8.507059e+37
    %v1984 = vand.u32 %v1955, 2147483648
    %v1985 = vor.u32 1.1754944e-38, %v1984
    %v1986 = vsel %vm1983, %v1985, %v1981
    %v1987 = vmul.f32 1.0, %v1986
    %v1988 = vrcp.pop %v1956
    %v1989 = vmul.f32 %v1956, %v1988
    %v1990 = vsub.f32 1.0, %v1989
    %v1991 = vmul.f32 %v1988, %v1990
    %v1992 = vadd.f32 %v1988, %v1991
    %vm1993 = vweird.f32 %v1956
    %vm1994 = vweird.f32 %v1988
    %vm1995 = vmor %vm1993, %vm1994
    %v1996 = vsel %vm1995, %v1988, %v1992
    %v1997 = vand.u32 2147483647, %v1956
    %vm1998 = vcmp.eq.f32.partialorder %v1997, 8.507059e+37
    %v1999 = vand.u32 %v1956, 2147483648
    %v2000 = vor.u32 1.1754944e-38, %v1999
    %v2001 = vsel %vm1998, %v2000, %v1996
    %v2002 = vmul.f32 1.0, %v2001
    %v2003 = vrcp.pop %v1957
    %v2004 = vmul.f32 %v1957, %v2003
    %v2005 = vsub.f32 1.0, %v2004
    %v2006 = vmul.f32 %v2003, %v2005
    %v2007 = vadd.f32 %v2003, %v2006
    %vm2008 = vweird.f32 %v1957
    %vm2009 = vweird.f32 %v2003
    %vm2010 = vmor %vm2008, %vm2009
    %v2011 = vsel %vm2010, %v2003, %v2007
    %v2012 = vand.u32 2147483647, %v1957
    %vm2013 = vcmp.eq.f32.partialorder %v2012, 8.507059e+37
    %v2014 = vand.u32 %v1957, 2147483648
    %v2015 = vor.u32 1.1754944e-38, %v2014
    %v2016 = vsel %vm2013, %v2015, %v2011
    %v2017 = vmul.f32 1.0, %v2016
    %v2018 = vadd.f32 %v1927, %v1023
    %v2019 = vadd.f32 %v1930, %v1023
    %v2020 = vadd.f32 %v1933, %v1023
    %v2021 = vadd.f32 %v1936, %v1023
    %2026 = vrot.lane.b32.xlu0 %v2018, 64
    %v2027 = vpop.permute.xlu0 %2026
    %2028 = vrot.lane.b32.xlu0 %v2019, 64
    %v2029 = vpop.permute.xlu0 %2028
    %2030 = vrot.lane.b32.xlu0 %v2020, 64
    %v2031 = vpop.permute.xlu0 %2030
    %2032 = vrot.lane.b32.xlu0 %v2021, 64
    %v2033 = vpop.permute.xlu0 %2032
    %v2038 = vmul.f32 %v1972, %v2027
    %v2039 = vmul.f32 %v1987, %v2029
    %v2040 = vmul.f32 %v2002, %v2031
    %v2041 = vmul.f32 %v2017, %v2033
    %2046 = vrot.lane.b32.xlu0 %v2038, 64
    %v2047 = vpop.permute.xlu0 %2046
    %2048 = vrot.lane.b32.xlu0 %v2039, 64
    %v2049 = vpop.permute.xlu0 %2048
    %2050 = vrot.lane.b32.xlu0 %v2040, 64
    %v2051 = vpop.permute.xlu0 %2050
    %2052 = vrot.lane.b32.xlu0 %v2041, 64
    %v2053 = vpop.permute.xlu0 %2052
    %v2058 = vadd.f32 %v999, %v2047
    %v2059 = vadd.f32 %v1001, %v2049
    %v2060 = vadd.f32 %v1004, %v2051
    %v2061 = vadd.f32 %v1006, %v2053
    %v2062 = vtanh.pop %v2058
    %v2063 = vtanh.pop %v2059
    %v2064 = vtanh.pop %v2060
    %v2065 = vtanh.pop %v2061
    %v2066 = vsub.f32 %v1885, %v2062
    %v2067 = vsub.f32 %v1886, %v2063
    %v2068 = vsub.f32 %v1887, %v2064
    %v2069 = vsub.f32 %v1888, %v2065
    %2074 = vrot.lane.b32.xlu0 %v2066, 96
    %v2075 = vpop.permute.xlu0 %2074
    %2076 = vrot.lane.b32.xlu0 %v2067, 96
    %v2077 = vpop.permute.xlu0 %2076
    %2078 = vrot.lane.b32.xlu0 %v2068, 96
    %v2079 = vpop.permute.xlu0 %2078
    %2080 = vrot.lane.b32.xlu0 %v2069, 96
    %v2081 = vpop.permute.xlu0 %2080
    %v2086 = vmul.f32 %v1972, %v2075
    %v2087 = vmul.f32 %v1987, %v2077
    %v2088 = vmul.f32 %v2002, %v2079
    %v2089 = vmul.f32 %v2017, %v2081
    %2094 = vrot.lane.b32.xlu0 %v2086, 32
    %v2095 = vpop.permute.xlu0 %2094
    %2096 = vrot.lane.b32.xlu0 %v2087, 32
    %v2097 = vpop.permute.xlu0 %2096
    %2098 = vrot.lane.b32.xlu0 %v2088, 32
    %v2099 = vpop.permute.xlu0 %2098
    %2100 = vrot.lane.b32.xlu0 %v2089, 32
    %v2101 = vpop.permute.xlu0 %2100
    %v2106 = vadd.f32 %v2062, %v2095
    %v2107 = vadd.f32 %v2063, %v2097
    %v2108 = vadd.f32 %v2064, %v2099
    %v2109 = vadd.f32 %v2065, %v2101
    %2114 = vrot.lane.b32.xlu0 %v2106, 64
    %v2115 = vpop.permute.xlu0 %2114
    %2116 = vrot.lane.b32.xlu0 %v2107, 64
    %v2117 = vpop.permute.xlu0 %2116
    %2118 = vrot.lane.b32.xlu0 %v2108, 64
    %v2119 = vpop.permute.xlu0 %2118
    %2120 = vrot.lane.b32.xlu0 %v2109, 64
    %v2121 = vpop.permute.xlu0 %2120
    %v2122 = vsel %vm121, %v2115, 0
    %v2124 = vsel %vm121, %v2117, 0
    %v2126 = vsel %vm121, %v2119, 0
    %v2128 = vsel %vm121, %v2121, 0
    %2130 = vmatpush.msra.mxu0 0.0
    %2131 = vmatpush.msra.mxu0 0.0
    %2132 = vmatpush.msra.mxu0 0.0
    %2133 = vmatpush.msra.mxu0 0.0
    %2134 = vmatpush.msra.mxu0 0.0
    %2135 = vmatpush.msra.mxu0 0.0
    %2136 = vmatpush.msra.mxu0 0.0
    %2137 = vmatpush.msra.mxu0 0.0
    %2138 = vmatpush.msra.mxu0 0.0
    %2139 = vmatpush.msra.mxu0 0.0
    %2140 = vmatpush.msra.mxu0 0.0
    %2141 = vmatpush.msra.mxu0 0.0
    %2142 = vmatpush.msra.mxu0 %v1021
    %2143 = vmatpush.msra.mxu0 %v1020
    %2144 = vmatpush.msra.mxu0 %v1019
    %2145 = vmatpush.msra.mxu0 %v1018
    %2146 = vmatmul.f32.gmra.mxu0 %v2122
    %v2147 = vpop.f32.mrf.mxu0
    %v2148 = vadd.f32 0.0, %v2147
    %2149 = vmatmul.f32.gmra.mxu0 %v2124
    %v2150 = vpop.f32.mrf.mxu0
    %v2151 = vadd.f32 0.0, %v2150
    %2152 = vmatmul.f32.gmra.mxu0 %v2126
    %v2153 = vpop.f32.mrf.mxu0
    %v2154 = vadd.f32 0.0, %v2153
    %2155 = vmatmul.f32.gmra.mxu0 %v2128
    %v2156 = vpop.f32.mrf.mxu0
    %v2157 = vadd.f32 0.0, %v2156
    %2158 = vdwg.mxu0
    %v2159 = vadd.f32 %v1009, %v2148
    %v2160 = vadd.f32 %v1011, %v2151
    %v2161 = vadd.f32 %v1014, %v2154
    %v2162 = vadd.f32 %v1016, %v2157
    %v2163 = vxor.u32 %v2159, 2147483648
    %v2164 = vxor.u32 %v2160, 2147483648
    %v2165 = vxor.u32 %v2161, 2147483648
    %v2166 = vxor.u32 %v2162, 2147483648
    %v2167 = vmul.f32 %v2163, 1.442695
    %v2168 = vpow.pop %v2167
    %v2169 = vmul.f32 %v2164, 1.442695
    %v2170 = vpow.pop %v2169
    %v2171 = vmul.f32 %v2165, 1.442695
    %v2172 = vpow.pop %v2171
    %v2173 = vmul.f32 %v2166, 1.442695
    %v2174 = vpow.pop %v2173
    %v2175 = vadd.f32 %v2168, 1.0
    %v2176 = vadd.f32 %v2170, 1.0
    %v2177 = vadd.f32 %v2172, 1.0
    %v2178 = vadd.f32 %v2174, 1.0
    %v2179 = vrcp.pop %v2175
    %v2180 = vmul.f32 %v2175, %v2179
    %v2181 = vsub.f32 1.0, %v2180
    %v2182 = vmul.f32 %v2179, %v2181
    %v2183 = vadd.f32 %v2179, %v2182
    %vm2184 = vweird.f32 %v2175
    %vm2185 = vweird.f32 %v2179
    %vm2186 = vmor %vm2184, %vm2185
    %v2187 = vsel %vm2186, %v2179, %v2183
    %v2188 = vand.u32 2147483647, %v2175
    %vm2189 = vcmp.eq.f32.partialorder %v2188, 8.507059e+37
    %v2190 = vand.u32 %v2175, 2147483648
    %v2191 = vor.u32 1.1754944e-38, %v2190
    %v2192 = vsel %vm2189, %v2191, %v2187
    %v2193 = vmul.f32 1.0, %v2192
    %v2194 = vrcp.pop %v2176
    %v2195 = vmul.f32 %v2176, %v2194
    %v2196 = vsub.f32 1.0, %v2195
    %v2197 = vmul.f32 %v2194, %v2196
    %v2198 = vadd.f32 %v2194, %v2197
    %vm2199 = vweird.f32 %v2176
    %vm2200 = vweird.f32 %v2194
    %vm2201 = vmor %vm2199, %vm2200
    %v2202 = vsel %vm2201, %v2194, %v2198
    %v2203 = vand.u32 2147483647, %v2176
    %vm2204 = vcmp.eq.f32.partialorder %v2203, 8.507059e+37
    %v2205 = vand.u32 %v2176, 2147483648
    %v2206 = vor.u32 1.1754944e-38, %v2205
    %v2207 = vsel %vm2204, %v2206, %v2202
    %v2208 = vmul.f32 1.0, %v2207
    %v2209 = vrcp.pop %v2177
    %v2210 = vmul.f32 %v2177, %v2209
    %v2211 = vsub.f32 1.0, %v2210
    %v2212 = vmul.f32 %v2209, %v2211
    %v2213 = vadd.f32 %v2209, %v2212
    %vm2214 = vweird.f32 %v2177
    %vm2215 = vweird.f32 %v2209
    %vm2216 = vmor %vm2214, %vm2215
    %v2217 = vsel %vm2216, %v2209, %v2213
    %v2218 = vand.u32 2147483647, %v2177
    %vm2219 = vcmp.eq.f32.partialorder %v2218, 8.507059e+37
    %v2220 = vand.u32 %v2177, 2147483648
    %v2221 = vor.u32 1.1754944e-38, %v2220
    %v2222 = vsel %vm2219, %v2221, %v2217
    %v2223 = vmul.f32 1.0, %v2222
    %v2224 = vrcp.pop %v2178
    %v2225 = vmul.f32 %v2178, %v2224
    %v2226 = vsub.f32 1.0, %v2225
    %v2227 = vmul.f32 %v2224, %v2226
    %v2228 = vadd.f32 %v2224, %v2227
    %vm2229 = vweird.f32 %v2178
    %vm2230 = vweird.f32 %v2224
    %vm2231 = vmor %vm2229, %vm2230
    %v2232 = vsel %vm2231, %v2224, %v2228
    %v2233 = vand.u32 2147483647, %v2178
    %vm2234 = vcmp.eq.f32.partialorder %v2233, 8.507059e+37
    %v2235 = vand.u32 %v2178, 2147483648
    %v2236 = vor.u32 1.1754944e-38, %v2235
    %v2237 = vsel %vm2234, %v2236, %v2232
    %v2238 = vmul.f32 1.0, %v2237
    %v2239 = vadd.f32 %v2148, %v1023
    %v2240 = vadd.f32 %v2151, %v1023
    %v2241 = vadd.f32 %v2154, %v1023
    %v2242 = vadd.f32 %v2157, %v1023
    %2247 = vrot.lane.b32.xlu0 %v2239, 64
    %v2248 = vpop.permute.xlu0 %2247
    %2249 = vrot.lane.b32.xlu0 %v2240, 64
    %v2250 = vpop.permute.xlu0 %2249
    %2251 = vrot.lane.b32.xlu0 %v2241, 64
    %v2252 = vpop.permute.xlu0 %2251
    %2253 = vrot.lane.b32.xlu0 %v2242, 64
    %v2254 = vpop.permute.xlu0 %2253
    %v2259 = vmul.f32 %v2193, %v2248
    %v2260 = vmul.f32 %v2208, %v2250
    %v2261 = vmul.f32 %v2223, %v2252
    %v2262 = vmul.f32 %v2238, %v2254
    %2267 = vrot.lane.b32.xlu0 %v2259, 64
    %v2268 = vpop.permute.xlu0 %2267
    %2269 = vrot.lane.b32.xlu0 %v2260, 64
    %v2270 = vpop.permute.xlu0 %2269
    %2271 = vrot.lane.b32.xlu0 %v2261, 64
    %v2272 = vpop.permute.xlu0 %2271
    %2273 = vrot.lane.b32.xlu0 %v2262, 64
    %v2274 = vpop.permute.xlu0 %2273
    %v2279 = vadd.f32 %v1009, %v2268
    %v2280 = vadd.f32 %v1011, %v2270
    %v2281 = vadd.f32 %v1014, %v2272
    %v2282 = vadd.f32 %v1016, %v2274
    %v2283 = vtanh.pop %v2279
    %v2284 = vtanh.pop %v2280
    %v2285 = vtanh.pop %v2281
    %v2286 = vtanh.pop %v2282
    %v2287 = vsub.f32 %v2106, %v2283
    %v2288 = vsub.f32 %v2107, %v2284
    %v2289 = vsub.f32 %v2108, %v2285
    %v2290 = vsub.f32 %v2109, %v2286
    %2295 = vrot.lane.b32.xlu0 %v2287, 96
    %v2296 = vpop.permute.xlu0 %2295
    %2297 = vrot.lane.b32.xlu0 %v2288, 96
    %v2298 = vpop.permute.xlu0 %2297
    %2299 = vrot.lane.b32.xlu0 %v2289, 96
    %v2300 = vpop.permute.xlu0 %2299
    %2301 = vrot.lane.b32.xlu0 %v2290, 96
    %v2302 = vpop.permute.xlu0 %2301
    %v2307 = vmul.f32 %v2193, %v2296
    %v2308 = vmul.f32 %v2208, %v2298
    %v2309 = vmul.f32 %v2223, %v2300
    %v2310 = vmul.f32 %v2238, %v2302
    %2315 = vrot.lane.b32.xlu0 %v2307, 32
    %v2316 = vpop.permute.xlu0 %2315
    %2317 = vrot.lane.b32.xlu0 %v2308, 32
    %v2318 = vpop.permute.xlu0 %2317
    %2319 = vrot.lane.b32.xlu0 %v2309, 32
    %v2320 = vpop.permute.xlu0 %2319
    %2321 = vrot.lane.b32.xlu0 %v2310, 32
    %v2322 = vpop.permute.xlu0 %2321
    %v2327 = vadd.f32 %v2283, %v2316
    %v2328 = vadd.f32 %v2284, %v2318
    %v2329 = vadd.f32 %v2285, %v2320
    %v2330 = vadd.f32 %v2286, %v2322
    %v2331 = vld [vmem:[%s13] sm:$0xf]
    %v2332 = vld [vmem:[%s13 + $0x4] sm:$0xf]
    %v2333 = vld [vmem:[%s13 + $0x8] sm:$0xf]
    %v2334 = vld [vmem:[%s13 + $0xc] sm:$0xf]
    %v2335 = vld [vmem:[%s16] sm:$0x1]
    %v2336 = vld [vmem:[%s15] sm:$0x1]
    %v2337 = vsel %vm162, %v2335, 0.0
    %v2338 = vadd.f32 %v2336, %v2337
    %v2340 = vperm.slane %v2338, 0
    %v2346 = vunpack.c.l.b16 %v2331
    %v2347 = vunpack.c.l.b16 %v2332
    %v2348 = vunpack.c.l.b16 %v2333
    %v2349 = vunpack.c.l.b16 %v2334
    %v2350 = vpack.c.b16 %v2347, %v2346
    %v2351 = vpack.c.b16 %v2349, %v2348
    %2354 = vmatpush.bf16.msra.mxu0 0
    %2355 = vmatpush.bf16.msra.mxu0 0
    %2356 = vmatpush.bf16.msra.mxu0 0
    %2357 = vmatpush.bf16.msra.mxu0 0
    %2358 = vmatpush.bf16.msra.mxu0 0
    %2359 = vmatpush.bf16.msra.mxu0 0
    %2360 = vmatpush.bf16.msra.mxu0 %v2351
    %2361 = vmatpush.bf16.msra.mxu0 %v2350
    %2362 = vmatmul.bf16.gmra.mxu0 %v886
    %v2363 = vpop.f32.mrf.mxu0
    %v2364 = vadd.f32 %v2340, %v2363
    %v2365 = vpop.f32.mrf.mxu0
    %2366 = vdwg.mxu0
    %v2367 = vpack.c.bf16 %v2328, %v2327
    %v2368 = vpack.c.bf16 %v2330, %v2329
    %2371 = vrot.lane.b32.xlu0 %v2367, 64
    %v2372 = vpop.permute.xlu0 %2371
    %2373 = vrot.lane.b32.xlu0 %v2368, 64
    %v2374 = vpop.permute.xlu0 %2373
    %v2376 = vsel %vm121, %v2372, 0
    %v2379 = vsel %vm121, %v2374, 0
    %2381 = vmatpush.bf16.msra.mxu0 0
    %2382 = vmatpush.bf16.msra.mxu0 0
    %2383 = vmatpush.bf16.msra.mxu0 0
    %2384 = vmatpush.bf16.msra.mxu0 0
    %2385 = vmatpush.bf16.msra.mxu0 0
    %2386 = vmatpush.bf16.msra.mxu0 0
    %2387 = vmatpush.bf16.msra.mxu0 %v2351
    %2388 = vmatpush.bf16.msra.mxu0 %v2350
    %2389 = vmatmul.bf16.gmra.mxu0 %v2376
    %v2390 = vpop.f32.mrf.mxu0
    %v2391 = vadd.f32 %v2364, %v2390
    %v2392 = vpop.f32.mrf.mxu0
    %v2393 = vadd.f32 %v2364, %v2392
    %2394 = vmatmul.bf16.gmra.mxu0 %v2379
    %v2395 = vpop.f32.mrf.mxu0
    %v2396 = vadd.f32 %v2364, %v2395
    %v2397 = vpop.f32.mrf.mxu0
    %v2398 = vadd.f32 %v2364, %v2397
    %2399 = vdwg.mxu0
    %v2400 = vld [vmem:[%s14] sm:$0xff]
    %v2401 = vld [vmem:[%s14 + $0x8] sm:$0xff]
    %v2402 = vld [vmem:[%s14 + $0x10] sm:$0xff]
    %v2403 = vld [vmem:[%s14 + $0x18] sm:$0xff]
    %v2404 = vld [vmem:[%s2] sm:$0xff]
    %v2406 = vperm.slane %v2335, 0
    %2408 = vmatpush.msra.mxu0 0.0
    %2409 = vmatpush.msra.mxu0 0.0
    %2410 = vmatpush.msra.mxu0 0.0
    %2411 = vmatpush.msra.mxu0 0.0
    %2412 = vmatpush.msra.mxu0 0.0
    %2413 = vmatpush.msra.mxu0 0.0
    %2414 = vmatpush.msra.mxu0 0.0
    %2415 = vmatpush.msra.mxu0 0.0
    %2416 = vmatpush.msra.mxu0 0.0
    %2417 = vmatpush.msra.mxu0 0.0
    %2418 = vmatpush.msra.mxu0 0.0
    %2419 = vmatpush.msra.mxu0 0.0
    %2420 = vmatpush.msra.mxu0 %v2403
    %2421 = vmatpush.msra.mxu0 %v2402
    %2422 = vmatpush.msra.mxu0 %v2401
    %2423 = vmatpush.msra.mxu0 %v2400
    %2424 = vmatmul.f32.gmra.mxu0 %v220
    %v2425 = vpop.f32.mrf.mxu0
    %v2426 = vadd.f32 0.0, %v2425
    %2427 = vdwg.mxu0
    %v2428 = vadd.f32 %v2391, %v2426
    %v2429 = vxor.u32 %v2428, 2147483648
    %v2430 = vmul.f32 %v2429, 1.442695
    %v2431 = vpow.pop %v2430
    %v2432 = vadd.f32 %v2431, 1.0
    %v2433 = vrcp.pop %v2432
    %v2434 = vmul.f32 %v2432, %v2433
    %v2435 = vsub.f32 1.0, %v2434
    %v2436 = vmul.f32 %v2433, %v2435
    %v2437 = vadd.f32 %v2433, %v2436
    %vm2438 = vweird.f32 %v2432
    %vm2439 = vweird.f32 %v2433
    %vm2440 = vmor %vm2438, %vm2439
    %v2441 = vsel %vm2440, %v2433, %v2437
    %v2442 = vand.u32 2147483647, %v2432
    %vm2443 = vcmp.eq.f32.partialorder %v2442, 8.507059e+37
    %v2444 = vand.u32 %v2432, 2147483648
    %v2445 = vor.u32 1.1754944e-38, %v2444
    %v2446 = vsel %vm2443, %v2445, %v2441
    %v2447 = vmul.f32 1.0, %v2446
    %v2448 = vadd.f32 %v2426, %v2406
    %2450 = vrot.lane.b32.xlu0 %v2448, 64
    %v2451 = vpop.permute.xlu0 %2450
    %v2453 = vmul.f32 %v2447, %v2451
    %2455 = vrot.lane.b32.xlu0 %v2453, 64
    %v2456 = vpop.permute.xlu0 %2455
    %v2458 = vadd.f32 %v2391, %v2456
    %v2459 = vtanh.pop %v2458
    %v2460 = vsub.f32 0.0, %v2459
    %2462 = vrot.lane.b32.xlu0 %v2460, 96
    %v2463 = vpop.permute.xlu0 %2462
    %v2465 = vmul.f32 %v2447, %v2463
    %2467 = vrot.lane.b32.xlu0 %v2465, 32
    %v2468 = vpop.permute.xlu0 %2467
    %v2470 = vadd.f32 %v2459, %v2468
    %vm2471 = vcmp.gt.s32.totalorder %v2404, 0
    %v2472 = vsel %vm2471, 1, 0
    %2473 = vset.pattern.permute.xlu0 0
    %2474 = vperm.xlu0 %2473, %v2472
    %v2475 = vpop.permute.xlu0 %2474
    %vm2476 = vcmp.eq.s32.totalorder %v2475, 1
    %v2477 = vsel %vm2476, %v2470, 0.0
    %2479 = vrot.lane.b32.xlu0 %v2477, 64
    %v2480 = vpop.permute.xlu0 %2479
    %v2481 = vsel %vm121, %v2480, 0
    %2483 = vmatpush.msra.mxu0 0.0
    %2484 = vmatpush.msra.mxu0 0.0
    %2485 = vmatpush.msra.mxu0 0.0
    %2486 = vmatpush.msra.mxu0 0.0
    %2487 = vmatpush.msra.mxu0 0.0
    %2488 = vmatpush.msra.mxu0 0.0
    %2489 = vmatpush.msra.mxu0 0.0
    %2490 = vmatpush.msra.mxu0 0.0
    %2491 = vmatpush.msra.mxu0 0.0
    %2492 = vmatpush.msra.mxu0 0.0
    %2493 = vmatpush.msra.mxu0 0.0
    %2494 = vmatpush.msra.mxu0 0.0
    %2495 = vmatpush.msra.mxu0 %v2403
    %2496 = vmatpush.msra.mxu0 %v2402
    %2497 = vmatpush.msra.mxu0 %v2401
    %2498 = vmatpush.msra.mxu0 %v2400
    %2499 = vmatmul.f32.gmra.mxu0 %v2481
    %v2500 = vpop.f32.mrf.mxu0
    %v2501 = vadd.f32 0.0, %v2500
    %2502 = vdwg.mxu0
    %v2503 = vadd.f32 %v2393, %v2501
    %v2504 = vxor.u32 %v2503, 2147483648
    %v2505 = vmul.f32 %v2504, 1.442695
    %v2506 = vpow.pop %v2505
    %v2507 = vadd.f32 %v2506, 1.0
    %v2508 = vrcp.pop %v2507
    %v2509 = vmul.f32 %v2507, %v2508
    %v2510 = vsub.f32 1.0, %v2509
    %v2511 = vmul.f32 %v2508, %v2510
    %v2512 = vadd.f32 %v2508, %v2511
    %vm2513 = vweird.f32 %v2507
    %vm2514 = vweird.f32 %v2508
    %vm2515 = vmor %vm2513, %vm2514
    %v2516 = vsel %vm2515, %v2508, %v2512
    %v2517 = vand.u32 2147483647, %v2507
    %vm2518 = vcmp.eq.f32.partialorder %v2517, 8.507059e+37
    %v2519 = vand.u32 %v2507, 2147483648
    %v2520 = vor.u32 1.1754944e-38, %v2519
    %v2521 = vsel %vm2518, %v2520, %v2516
    %v2522 = vmul.f32 1.0, %v2521
    %v2523 = vadd.f32 %v2501, %v2406
    %2525 = vrot.lane.b32.xlu0 %v2523, 64
    %v2526 = vpop.permute.xlu0 %2525
    %v2528 = vmul.f32 %v2522, %v2526
    %2530 = vrot.lane.b32.xlu0 %v2528, 64
    %v2531 = vpop.permute.xlu0 %2530
    %v2533 = vadd.f32 %v2393, %v2531
    %v2534 = vtanh.pop %v2533
    %v2535 = vsub.f32 %v2477, %v2534
    %2537 = vrot.lane.b32.xlu0 %v2535, 96
    %v2538 = vpop.permute.xlu0 %2537
    %v2540 = vmul.f32 %v2522, %v2538
    %2542 = vrot.lane.b32.xlu0 %v2540, 32
    %v2543 = vpop.permute.xlu0 %2542
    %v2545 = vadd.f32 %v2534, %v2543
    %vm2546 = vcmp.gt.s32.totalorder %v2404, 1
    %v2547 = vsel %vm2546, 1, 0
    %2548 = vset.pattern.permute.xlu0 0
    %2549 = vperm.xlu0 %2548, %v2547
    %v2550 = vpop.permute.xlu0 %2549
    %vm2551 = vcmp.eq.s32.totalorder %v2550, 1
    %v2552 = vsel %vm2551, %v2545, %v2477
    %2554 = vrot.lane.b32.xlu0 %v2552, 64
    %v2555 = vpop.permute.xlu0 %2554
    %v2556 = vsel %vm121, %v2555, 0
    %2558 = vmatpush.msra.mxu0 0.0
    %2559 = vmatpush.msra.mxu0 0.0
    %2560 = vmatpush.msra.mxu0 0.0
    %2561 = vmatpush.msra.mxu0 0.0
    %2562 = vmatpush.msra.mxu0 0.0
    %2563 = vmatpush.msra.mxu0 0.0
    %2564 = vmatpush.msra.mxu0 0.0
    %2565 = vmatpush.msra.mxu0 0.0
    %2566 = vmatpush.msra.mxu0 0.0
    %2567 = vmatpush.msra.mxu0 0.0
    %2568 = vmatpush.msra.mxu0 0.0
    %2569 = vmatpush.msra.mxu0 0.0
    %2570 = vmatpush.msra.mxu0 %v2403
    %2571 = vmatpush.msra.mxu0 %v2402
    %2572 = vmatpush.msra.mxu0 %v2401
    %2573 = vmatpush.msra.mxu0 %v2400
    %2574 = vmatmul.f32.gmra.mxu0 %v2556
    %v2575 = vpop.f32.mrf.mxu0
    %v2576 = vadd.f32 0.0, %v2575
    %2577 = vdwg.mxu0
    %v2578 = vadd.f32 %v2396, %v2576
    %v2579 = vxor.u32 %v2578, 2147483648
    %v2580 = vmul.f32 %v2579, 1.442695
    %v2581 = vpow.pop %v2580
    %v2582 = vadd.f32 %v2581, 1.0
    %v2583 = vrcp.pop %v2582
    %v2584 = vmul.f32 %v2582, %v2583
    %v2585 = vsub.f32 1.0, %v2584
    %v2586 = vmul.f32 %v2583, %v2585
    %v2587 = vadd.f32 %v2583, %v2586
    %vm2588 = vweird.f32 %v2582
    %vm2589 = vweird.f32 %v2583
    %vm2590 = vmor %vm2588, %vm2589
    %v2591 = vsel %vm2590, %v2583, %v2587
    %v2592 = vand.u32 2147483647, %v2582
    %vm2593 = vcmp.eq.f32.partialorder %v2592, 8.507059e+37
    %v2594 = vand.u32 %v2582, 2147483648
    %v2595 = vor.u32 1.1754944e-38, %v2594
    %v2596 = vsel %vm2593, %v2595, %v2591
    %v2597 = vmul.f32 1.0, %v2596
    %v2598 = vadd.f32 %v2576, %v2406
    %2600 = vrot.lane.b32.xlu0 %v2598, 64
    %v2601 = vpop.permute.xlu0 %2600
    %v2603 = vmul.f32 %v2597, %v2601
    %2605 = vrot.lane.b32.xlu0 %v2603, 64
    %v2606 = vpop.permute.xlu0 %2605
    %v2608 = vadd.f32 %v2396, %v2606
    %v2609 = vtanh.pop %v2608
    %v2610 = vsub.f32 %v2552, %v2609
    %2612 = vrot.lane.b32.xlu0 %v2610, 96
    %v2613 = vpop.permute.xlu0 %2612
    %v2615 = vmul.f32 %v2597, %v2613
    %2617 = vrot.lane.b32.xlu0 %v2615, 32
    %v2618 = vpop.permute.xlu0 %2617
    %v2620 = vadd.f32 %v2609, %v2618
    %vm2621 = vcmp.gt.s32.totalorder %v2404, 2
    %v2622 = vsel %vm2621, 1, 0
    %2623 = vset.pattern.permute.xlu0 0
    %2624 = vperm.xlu0 %2623, %v2622
    %v2625 = vpop.permute.xlu0 %2624
    %vm2626 = vcmp.eq.s32.totalorder %v2625, 1
    %v2627 = vsel %vm2626, %v2620, %v2552
    %2629 = vrot.lane.b32.xlu0 %v2627, 64
    %v2630 = vpop.permute.xlu0 %2629
    %v2631 = vsel %vm121, %v2630, 0
    %2633 = vmatpush.msra.mxu0 0.0
    %2634 = vmatpush.msra.mxu0 0.0
    %2635 = vmatpush.msra.mxu0 0.0
    %2636 = vmatpush.msra.mxu0 0.0
    %2637 = vmatpush.msra.mxu0 0.0
    %2638 = vmatpush.msra.mxu0 0.0
    %2639 = vmatpush.msra.mxu0 0.0
    %2640 = vmatpush.msra.mxu0 0.0
    %2641 = vmatpush.msra.mxu0 0.0
    %2642 = vmatpush.msra.mxu0 0.0
    %2643 = vmatpush.msra.mxu0 0.0
    %2644 = vmatpush.msra.mxu0 0.0
    %2645 = vmatpush.msra.mxu0 %v2403
    %2646 = vmatpush.msra.mxu0 %v2402
    %2647 = vmatpush.msra.mxu0 %v2401
    %2648 = vmatpush.msra.mxu0 %v2400
    %2649 = vmatmul.f32.gmra.mxu0 %v2631
    %v2650 = vpop.f32.mrf.mxu0
    %v2651 = vadd.f32 0.0, %v2650
    %2652 = vdwg.mxu0
    %v2653 = vadd.f32 %v2398, %v2651
    %v2654 = vxor.u32 %v2653, 2147483648
    %v2655 = vmul.f32 %v2654, 1.442695
    %v2656 = vpow.pop %v2655
    %v2657 = vadd.f32 %v2656, 1.0
    %v2658 = vrcp.pop %v2657
    %v2659 = vmul.f32 %v2657, %v2658
    %v2660 = vsub.f32 1.0, %v2659
    %v2661 = vmul.f32 %v2658, %v2660
    %v2662 = vadd.f32 %v2658, %v2661
    %vm2663 = vweird.f32 %v2657
    %vm2664 = vweird.f32 %v2658
    %vm2665 = vmor %vm2663, %vm2664
    %v2666 = vsel %vm2665, %v2658, %v2662
    %v2667 = vand.u32 2147483647, %v2657
    %vm2668 = vcmp.eq.f32.partialorder %v2667, 8.507059e+37
    %v2669 = vand.u32 %v2657, 2147483648
    %v2670 = vor.u32 1.1754944e-38, %v2669
    %v2671 = vsel %vm2668, %v2670, %v2666
    %v2672 = vmul.f32 1.0, %v2671
    %v2673 = vadd.f32 %v2651, %v2406
    %2675 = vrot.lane.b32.xlu0 %v2673, 64
    %v2676 = vpop.permute.xlu0 %2675
    %v2678 = vmul.f32 %v2672, %v2676
    %2680 = vrot.lane.b32.xlu0 %v2678, 64
    %v2681 = vpop.permute.xlu0 %2680
    %v2683 = vadd.f32 %v2398, %v2681
    %v2684 = vtanh.pop %v2683
    %v2685 = vsub.f32 %v2627, %v2684
    %2687 = vrot.lane.b32.xlu0 %v2685, 96
    %v2688 = vpop.permute.xlu0 %2687
    %v2690 = vmul.f32 %v2672, %v2688
    %2692 = vrot.lane.b32.xlu0 %v2690, 32
    %v2693 = vpop.permute.xlu0 %2692
    %v2695 = vadd.f32 %v2684, %v2693
    %vm2696 = vcmp.gt.s32.totalorder %v2404, 3
    %v2697 = vsel %vm2696, 1, 0
    %2698 = vset.pattern.permute.xlu0 0
    %2699 = vperm.xlu0 %2698, %v2697
    %v2700 = vpop.permute.xlu0 %2699
    %vm2701 = vcmp.eq.s32.totalorder %v2700, 1
    %v2702 = vsel %vm2701, %v2695, %v2627
    %v2703 = vld [vmem:[%s17] sm:$0xff]
    %v2704 = vld [vmem:[%s17 + $0x8] sm:$0xff]
    %v2705 = vld [vmem:[%s17 + $0x10] sm:$0xff]
    %v2706 = vld [vmem:[%s17 + $0x18] sm:$0xff]
    %v2707 = vld [vmem:[%s18] sm:$0x1]
    %v2709 = vperm.slane %v2707, 0
    %2712 = vrot.lane.b32.xlu0 %v2702, 64
    %v2713 = vpop.permute.xlu0 %2712
    %v2714 = vsel %vm121, %v2713, 0
    %2716 = vmatpush.msra.mxu0 0.0
    %2717 = vmatpush.msra.mxu0 0.0
    %2718 = vmatpush.msra.mxu0 0.0
    %2719 = vmatpush.msra.mxu0 0.0
    %2720 = vmatpush.msra.mxu0 0.0
    %2721 = vmatpush.msra.mxu0 0.0
    %2722 = vmatpush.msra.mxu0 0.0
    %2723 = vmatpush.msra.mxu0 0.0
    %2724 = vmatpush.msra.mxu0 0.0
    %2725 = vmatpush.msra.mxu0 0.0
    %2726 = vmatpush.msra.mxu0 0.0
    %2727 = vmatpush.msra.mxu0 0.0
    %2728 = vmatpush.msra.mxu0 %v2706
    %2729 = vmatpush.msra.mxu0 %v2705
    %2730 = vmatpush.msra.mxu0 %v2704
    %2731 = vmatpush.msra.mxu0 %v2703
    %2732 = vmatmul.f32.gmra.mxu0 %v2714
    %v2733 = vpop.f32.mrf.mxu0
    %v2734 = vadd.f32 %v2709, %v2733
    %2735 = vdwg.mxu0
    %vm2736 = vcmask 130048
    %v2737 = vsel %vm2736, %v2734, -inf
    %2738 = vmax.xlane.f32.xlu0 %v2737
    %v2739 = vpop.xlane.xlu0 %2738
    %v2740 = vsub.f32 %v2734, %v2739
    %v2741 = vmul.f32 %v2740, 1.442695
    %v2742 = vpow.pop %v2741
    %v2743 = vsel %vm2736, %v2742, 0.0
    %2744 = vadd.xlane.f32.xlu0 %v2743
    %v2745 = vpop.xlane.xlu0 %2744
    %v2746 = vlog2.pop %v2745
    %v2747 = vmul.f32 %v2746, 0.6931472
    %v2748 = vsub.f32 %v2740, %v2747
    %2749 = vst.msk [vmem:[#allocation2] sm:$0xff] %vm2736, %v2748
    // Predicated region
    $region78: #{sentence_model_forward.1} parent=1 // pred_check
      _
    $region79: #{sentence_model_forward.1} parent=1 // pred_check_branch
      %2751 = sbr.rel (0) target = $region81
    $region80: #{sentence_model_forward.1} parent=1 // pred_region
      %2753 = vsyncadd [#allocation3], 0
      %s2755 = sshll.u32 [#allocation2], 4
      %s2756 = int_to_ptr.vmem [resolvable:$true] %s2755
      %s2757 = sshll.u32 %s19, 4
      %s2758 = int_to_ptr.hbm [resolvable:$true] %s2757
      %2760 = dma.vmem_to_hbm [thread:$0]  %s2756, 128, %s2758, [#allocation3]
    $region81: #{sentence_model_forward.1} parent=1 // pred_fallthru
      _
    // Predicated region
    $region82: #{sentence_model_forward.1} parent=1 // pred_check
      _
    $region83: #{sentence_model_forward.1} parent=1 // pred_check_branch
      %2762 = sbr.rel (0) target = $region85
    $region84: #{sentence_model_forward.1} parent=1 // pred_region
      %2764 = dma.done [#allocation3], 128
    $region85: #{sentence_model_forward.1} parent=1 // pred_fallthru
      _
    %2765 = vsyncpa [#allocation3], 1

</llo_original>
